<compile_context>
chip_gen: v5e
topology: v5e:2x2
jax: 0.10.0
libtpu: 0.0.40
codegen_flags: <defaults>
</compile_context>

<pallas_src>
import functools

import jax
import jax.numpy as jnp
from jax.experimental import pallas as pl
from jax.experimental.pallas import tpu as pltpu

EPS = 1e-5
LANE = 128                 # vreg lane width on v5e / v6e / v7x
NEG_BIG = -3.0e38


def _round_up(v, m):
    return ((v + m - 1) // m) * m


# ----------------------------------------------------------------------------
# Fused forward kernel
# ----------------------------------------------------------------------------
def _wln_kernel(
    # scalar-prefetch (SMEM) index arrays
    src_ref, dst_ref, batch_ref,
    # VMEM inputs
    x_ref, ea_ref, invc_ref,
    inW_ref, inb_ref, ins_ref, int_ref,
    cWx_ref, cWe_ref, cb_ref, cs_ref, ct_ref,
    spW_ref, spb_ref, sps_ref, spt_ref,
    poW_ref, pob_ref,
    d1W_ref, d1b_ref, dbs_ref, dbt_ref,
    d2W_ref, d2b_ref,
    # outputs
    ohid_ref, opool_ref, orec_ref,
    # VMEM scratch
    h_s, xsum_s, hw_s, emsg_s, acc_s, add_s, max_s,
):
    f32 = jnp.float32
    bf16 = jnp.bfloat16
    N = x_ref.shape[0]
    E = ea_ref.shape[0]
    L = cWx_ref.shape[0]

    # ---- input_mlp: Linear -> ReLU -> BN(eval affine) -> Dropout(id) -------
    h = jnp.dot(x_ref[...], inW_ref[...], preferred_element_type=f32)
    h = jnp.maximum(h + inb_ref[...], 0.0) * ins_ref[...] + int_ref[...]
    h_s[...] = h
    xsum_s[...] = h                     # torch.stack(all_layer_outputs).sum(0)

    # ---- WLNConv layers -----------------------------------------------------
    for l in range(L):
        # dense node half of the edge Linear (also serves the self-loop term)
        hw = jnp.dot(h_s[...].astype(bf16), cWx_ref[l],
                     preferred_element_type=f32)
        hw_s[...] = hw
        # per-edge half: edge_attr @ W_e + bias
        emsg_s[...] = (jnp.dot(ea_ref[...], cWe_ref[l],
                               preferred_element_type=f32) + cb_ref[l])
        # self-loop messages (edge_attr == 0): dense add, no scatter needed
        acc_s[...] = jnp.maximum(hw + cb_ref[l], 0.0)

        # fused gather(src) + ReLU message + scatter-add(dst)
        def edge_body(e, carry):
            s = src_ref[e]
            d = dst_ref[e]
            m = jnp.maximum(hw_s[pl.ds(s, 1), :] + emsg_s[pl.ds(e, 1), :], 0.0)
            acc_s[pl.ds(d, 1), :] = acc_s[pl.ds(d, 1), :] + m
            return carry

        jax.lax.fori_loop(0, E, edge_body, 0, unroll=True)

        # eval-mode BatchNorm folded affine; Dropout = identity
        hnew = acc_s[...] * cs_ref[l] + ct_ref[l]
        h_s[...] = hnew
        xsum_s[...] = xsum_s[...] + hnew

    # ---- global add / mean / max pooling in one pass over nodes ------------
    add_s[...] = jnp.zeros(add_s.shape, f32)
    max_s[...] = jnp.full(max_s.shape, NEG_BIG, f32)

    def pool_body(i, carry):
        g = batch_ref[i]
        row = xsum_s[pl.ds(i, 1), :]
        add_s[pl.ds(g, 1), :] = add_s[pl.ds(g, 1), :] + row
        max_s[pl.ds(g, 1), :] = jnp.maximum(max_s[pl.ds(g, 1), :], row)
        return carry

    jax.lax.fori_loop(0, N, pool_body, 0, unroll=True)

    x_add = add_s[...]
    x_mean = x_add * invc_ref[...]                  # 1 / max(count, 1) folded in
    # guard: graphs with zero nodes keep 0 instead of -3e38
    x_max = jnp.where(max_s[...] <= 0.5 * NEG_BIG, 0.0, max_s[...])

    # ---- sequence_proj: Linear(3H->H) -> ReLU -> BN(eval) ------------------
    hid = jnp.dot(x_mean.astype(bf16), spW_ref[0], preferred_element_type=f32)
    hid = hid + jnp.dot(x_add.astype(bf16), spW_ref[1], preferred_element_type=f32)
    hid = hid + jnp.dot(x_max.astype(bf16), spW_ref[2], preferred_element_type=f32)
    hid = jnp.maximum(hid + spb_ref[...], 0.0) * sps_ref[...] + spt_ref[...]
    ohid_ref[...] = hid

    # ---- pooler: Linear -> Tanh ---------------------------------------------
    pooled = jnp.tanh(jnp.dot(hid.astype(bf16), poW_ref[...],
                              preferred_element_type=f32) + pob_ref[...])
    opool_ref[...] = pooled
    max_s[...] = pooled                 # reuse scratch for the per-node gather

    # ---- node_decoder: expand pooler per node, Linear+ReLU+BN, Linear ------
    def expand_body(i, carry):
        g = batch_ref[i]
        acc_s[pl.ds(i, 1), :] = max_s[pl.ds(g, 1), :]
        return carry

    jax.lax.fori_loop(0, N, expand_body, 0, unroll=True)

    d1 = jnp.dot(acc_s[...].astype(bf16), d1W_ref[...], preferred_element_type=f32)
    d1 = jnp.maximum(d1 + d1b_ref[...], 0.0) * dbs_ref[...] + dbt_ref[...]
    orec_ref[...] = (jnp.dot(d1.astype(bf16), d2W_ref[...],
                             preferred_element_type=f32) + d2b_ref[...])


def _block(shape):
    nd = len(shape)
    return pl.BlockSpec(shape, lambda *_: (0,) * nd)


@functools.partial(jax.jit, static_argnames=("num_graphs", "seq_length", "hidden"))
def wln_forward(prepped, x, edge_index, edge_attr, batch_idx, *,
                num_graphs, seq_length, hidden):
    N, C = x.shape
    E = edge_attr.shape[0]
    B = num_graphs
    H = hidden
    CP = prepped["in_W"].shape[0]
    HP = prepped["in_W"].shape[1]
    L = prepped["conv_Wx"].shape[0]
    EP = prepped["conv_We"].shape[1]

    # lane-dense padded inputs; bf16 matmul operands
    x_p = jnp.zeros((N, CP), jnp.bfloat16).at[:, :C].set(x.astype(jnp.bfloat16))
    ea_p = jnp.zeros((E, EP), jnp.bfloat16).at[:, :edge_attr.shape[1]].set(
        edge_attr.astype(jnp.bfloat16))

    src = edge_index[0].astype(jnp.int32)
    dst = edge_index[1].astype(jnp.int32)
    bidx = batch_idx.astype(jnp.int32)

    counts = jnp.zeros((B,), jnp.float32).at[bidx].add(1.0)
    invc = jnp.broadcast_to((1.0 / jnp.maximum(counts, 1.0))[:, None],
                            (B, HP)).astype(jnp.float32)

    grid_spec = pltpu.PrefetchScalarGridSpec(
        num_scalar_prefetch=3,
        grid=(1,),
        in_specs=[
            _block((N, CP)), _block((E, EP)), _block((B, HP)),
            _block((CP, HP)), _block((1, HP)), _block((1, HP)), _block((1, HP)),
            _block((L, HP, HP)), _block((L, EP, HP)),
            _block((L, 1, HP)), _block((L, 1, HP)), _block((L, 1, HP)),
            _block((3, HP, HP)), _block((1, HP)), _block((1, HP)), _block((1, HP)),
            _block((HP, HP)), _block((1, HP)),
            _block((HP, HP)), _block((1, HP)), _block((1, HP)), _block((1, HP)),
            _block((HP, CP)), _block((1, CP)),
        ],
        out_specs=[_block((B, HP)), _block((B, HP)), _block((N, CP))],
        scratch_shapes=[
            pltpu.VMEM((N, HP), jnp.float32),   # h
            pltpu.VMEM((N, HP), jnp.float32),   # running layer sum
            pltpu.VMEM((N, HP), jnp.float32),   # h @ W_x
            pltpu.VMEM((E, HP), jnp.float32),   # edge_attr @ W_e + b
            pltpu.VMEM((N, HP), jnp.float32),   # scatter accumulator / z_expanded
            pltpu.VMEM((B, HP), jnp.float32),   # add-pool accumulator
            pltpu.VMEM((B, HP), jnp.float32),   # max-pool accumulator / pooled
        ],
    )

    o_hid, o_pool, o_rec = pl.pallas_call(
        _wln_kernel,
        grid_spec=grid_spec,
        out_shape=(
            jax.ShapeDtypeStruct((B, HP), jnp.float32),
            jax.ShapeDtypeStruct((B, HP), jnp.float32),
            jax.ShapeDtypeStruct((N, CP), jnp.float32),
        ),
        compiler_params=pltpu.CompilerParams(
            dimension_semantics=("arbitrary",)),
    )(
        src, dst, bidx,
        x_p, ea_p, invc,
        prepped["in_W"], prepped["in_b"], prepped["in_s"], prepped["in_t"],
        prepped["conv_Wx"], prepped["conv_We"], prepped["conv_b"],
        prepped["conv_s"], prepped["conv_t"],
        prepped["sp_W"], prepped["sp_b"], prepped["sp_s"], prepped["sp_t"],
        prepped["pool_W"], prepped["pool_b"],
        prepped["d1_W"], prepped["d1_b"], prepped["d_s"], prepped["d_t"],
        prepped["d2_W"], prepped["d2_b"],
    )

    hidden_states = o_hid[:, :H]
    return {
        "last_hidden_state": jnp.broadcast_to(hidden_states[:, None, :],
                                              (B, seq_length, H)),
        "pooler_output": o_pool[:, :H],
        "reconstructed": o_rec[:, :C],
    }


# ----------------------------------------------------------------------------
# Parameter init (deterministic, PyTorch-like uniform fan-in init)
# ----------------------------------------------------------------------------
def _linear_init(key, fan_in, fan_out):
    k1, k2 = jax.random.split(key)
    lim = 1.0 / jnp.sqrt(jnp.float32(fan_in))
    W = jax.random.uniform(k1, (fan_in, fan_out), jnp.float32, -lim, lim)
    b = jax.random.uniform(k2, (fan_out,), jnp.float32, -lim, lim)
    return W, b


def _bn_init(key, dim):
    # eval-mode BN (running_mean=0, running_var=1) folded to (scale, shift);
    # gamma/beta get a little noise so the affine is exercised.
    k1, k2 = jax.random.split(key)
    gamma = 1.0 + 0.1 * jax.random.normal(k1, (dim,), jnp.float32)
    beta = 0.1 * jax.random.normal(k2, (dim,), jnp.float32)
    return gamma / jnp.sqrt(1.0 + EPS), beta


def init_params(key, in_channels, hidden, num_layers, edge_dim):
    keys = jax.random.split(key, 8 + 2 * num_layers)
    p = {}
    p["in_W"], p["in_b"] = _linear_init(keys[0], in_channels, hidden)
    p["in_bn_s"], p["in_bn_t"] = _bn_init(keys[1], hidden)

    p["conv_W"], p["conv_b"], p["conv_bn_s"], p["conv_bn_t"] = [], [], [], []
    for l in range(num_layers):
        W, b = _linear_init(keys[2 + 2 * l], hidden + edge_dim, hidden)
        s, t = _bn_init(keys[3 + 2 * l], hidden)
        p["conv_W"].append(W); p["conv_b"].append(b)
        p["conv_bn_s"].append(s); p["conv_bn_t"].append(t)

    base = 2 + 2 * num_layers
    p["sp_W"], p["sp_b"] = _linear_init(keys[base + 0], hidden * 3, hidden)
    p["sp_bn_s"], p["sp_bn_t"] = _bn_init(keys[base + 1], hidden)
    p["pool_W"], p["pool_b"] = _linear_init(keys[base + 2], hidden, hidden)
    p["d1_W"], p["d1_b"] = _linear_init(keys[base + 3], hidden, hidden)
    p["d_bn_s"], p["d_bn_t"] = _bn_init(keys[base + 4], hidden)
    p["d2_W"], p["d2_b"] = _linear_init(keys[base + 5], hidden, in_channels)
    return p


# ----------------------------------------------------------------------------
# Pack params into the lane-dense padded / bf16 kernel layout (done once)
# ----------------------------------------------------------------------------
def _pad2(a, rows, cols, fill=0.0, dtype=jnp.float32):
    out = jnp.full((rows, cols), fill, dtype)
    return out.at[: a.shape[0], : a.shape[1]].set(a.astype(dtype))


def _pad_row(v, cols, fill=0.0):
    out = jnp.full((1, cols), fill, jnp.float32)
    return out.at[0, : v.shape[0]].set(v.astype(jnp.float32))


def prepare_params(p, in_channels, hidden, num_layers, edge_dim):
    """Zero-pad channels to 128-lane multiples (BN scale pads with 1 so padded
    channels stay exactly 0), split conv / sequence_proj weights so no runtime
    concat is needed, and cast matmul operands to bf16 (f32 accumulation)."""
    HP = max(LANE, _round_up(hidden, LANE))
    CP = max(LANE, _round_up(in_channels, LANE))
    EP = max(LANE, _round_up(edge_dim, LANE))
    bf16 = jnp.bfloat16

    q = {}
    q["in_W"] = _pad2(p["in_W"], CP, HP, dtype=bf16)
    q["in_b"] = _pad_row(p["in_b"], HP)
    q["in_s"] = _pad_row(p["in_bn_s"], HP, fill=1.0)
    q["in_t"] = _pad_row(p["in_bn_t"], HP)

    cwx, cwe, cb, cs, ct = [], [], [], [], []
    for l in range(num_layers):
        W = p["conv_W"][l]                          # (hidden + edge_dim, hidden)
        cwx.append(_pad2(W[:hidden], HP, HP, dtype=bf16))
        cwe.append(_pad2(W[hidden:], EP, HP, dtype=bf16))
        cb.append(_pad_row(p["conv_b"][l], HP))
        cs.append(_pad_row(p["conv_bn_s"][l], HP, fill=1.0))
        ct.append(_pad_row(p["conv_bn_t"][l], HP))
    q["conv_Wx"] = jnp.stack(cwx)                   # (L, HP, HP)
    q["conv_We"] = jnp.stack(cwe)                   # (L, EP, HP)
    q["conv_b"] = jnp.stack(cb)                     # (L, 1, HP)
    q["conv_s"] = jnp.stack(cs)
    q["conv_t"] = jnp.stack(ct)

    # sequence_proj weight split by pooling slot (mean / add / max)
    spW = p["sp_W"]
    q["sp_W"] = jnp.stack([
        _pad2(spW[0 * hidden:1 * hidden], HP, HP, dtype=bf16),
        _pad2(spW[1 * hidden:2 * hidden], HP, HP, dtype=bf16),
        _pad2(spW[2 * hidden:3 * hidden], HP, HP, dtype=bf16),
    ])
    q["sp_b"] = _pad_row(p["sp_b"], HP)
    q["sp_s"] = _pad_row(p["sp_bn_s"], HP, fill=1.0)
    q["sp_t"] = _pad_row(p["sp_bn_t"], HP)

    q["pool_W"] = _pad2(p["pool_W"], HP, HP, dtype=bf16)
    q["pool_b"] = _pad_row(p["pool_b"], HP)

    q["d1_W"] = _pad2(p["d1_W"], HP, HP, dtype=bf16)
    q["d1_b"] = _pad_row(p["d1_b"], HP)
    q["d_s"] = _pad_row(p["d_bn_s"], HP, fill=1.0)
    q["d_t"] = _pad_row(p["d_bn_t"], HP)

    q["d2_W"] = _pad2(p["d2_W"], HP, CP, dtype=bf16)
    q["d2_b"] = _pad_row(p["d2_b"], CP)
    return q


# ----------------------------------------------------------------------------
# Pure-JAX f32 reference (eval-mode semantics) for validation
# ----------------------------------------------------------------------------
def reference_forward(p, x, edge_index, edge_attr, batch_idx,
                      num_graphs, seq_length, num_layers):
    lin = lambda v, W, b: v @ W + b
    bn = lambda v, s, t: v * s + t
    N = x.shape[0]
    h = bn(jax.nn.relu(lin(x, p["in_W"], p["in_b"])), p["in_bn_s"], p["in_bn_t"])
    outs = [h]
    self_idx = jnp.arange(N, dtype=edge_index.dtype)
    src = jnp.concatenate([edge_index[0], self_idx])
    dst = jnp.concatenate([edge_index[1], self_idx])
    ea = jnp.concatenate(
        [edge_attr, jnp.zeros((N, edge_attr.shape[1]), jnp.float32)], axis=0)
    for l in range(num_layers):
        msg = jax.nn.relu(lin(jnp.concatenate([h[src], ea], axis=1),
                              p["conv_W"][l], p["conv_b"][l]))
        agg = jnp.zeros_like(h).at[dst].add(msg)
        h = bn(agg, p["conv_bn_s"][l], p["conv_bn_t"][l])
        outs.append(h)
    xs = sum(outs)
    seg = jax.nn.one_hot(batch_idx, num_graphs, dtype=jnp.float32)     # (N, B)
    x_add = seg.T @ xs
    cnt = jnp.maximum(seg.sum(0)[:, None], 1.0)
    x_mean = x_add / cnt
    x_max = jax.ops.segment_max(xs, batch_idx, num_segments=num_graphs)
    xc = jnp.concatenate([x_mean, x_add, x_max], axis=1)
    hid = bn(jax.nn.relu(lin(xc, p["sp_W"], p["sp_b"])), p["sp_bn_s"], p["sp_bn_t"])
    pooled = jnp.tanh(lin(hid, p["pool_W"], p["pool_b"]))
    z = pooled[batch_idx]
    d1 = bn(jax.nn.relu(lin(z, p["d1_W"], p["d1_b"])), p["d_bn_s"], p["d_bn_t"])
    rec = lin(d1, p["d2_W"], p["d2_b"])
    return {"last_hidden_state": jnp.broadcast_to(
                hid[:, None, :], (num_graphs, seq_length, hid.shape[1])),
            "pooler_output": pooled,
            "reconstructed": rec}


# ----------------------------------------------------------------------------
if __name__ == "__main__":
    key = jax.random.PRNGKey(0)
    in_channels, hidden, seq_length, num_layers = 8, 32, 8, 3
    edge_dim = 6                       # WLNConv uses Linear(in_channels + 6, ...)
    N, E = 12, 16                      # 12 nodes, 16 directed edges
    num_graphs = 2                     # nodes 0..6 -> graph 0, 7..11 -> graph 1

    kx, ke, kp = jax.random.split(key, 3)
    x = jax.random.normal(kx, (N, in_channels), jnp.float32)
    batch_idx = jnp.array([0] * 7 + [1] * 5, dtype=jnp.int32)
    src = jnp.array([0, 1, 1, 2, 2, 3, 3, 4, 5, 6, 7, 8, 8, 9, 10, 11], dtype=jnp.int32)
    dst = jnp.array([1, 0, 2, 1, 3, 2, 4, 3, 6, 5, 8, 7, 9, 8, 11, 10], dtype=jnp.int32)
    edge_index = jnp.stack([src, dst])
    edge_attr = jax.random.normal(ke, (E, edge_dim), jnp.float32)

    params = init_params(kp, in_channels, hidden, num_layers, edge_dim)
    prepped = prepare_params(params, in_channels, hidden, num_layers, edge_dim)

    out = wln_forward(prepped, x, edge_index, edge_attr, batch_idx,
                      num_graphs=num_graphs, seq_length=seq_length, hidden=hidden)
    out = jax.block_until_ready(out)

    assert out["last_hidden_state"].shape == (num_graphs, seq_length, hidden)
    assert out["pooler_output"].shape == (num_graphs, hidden)
    assert out["reconstructed"].shape == (N, in_channels)
    assert all(bool(jnp.all(jnp.isfinite(v))) for v in out.values())

    # numerical check vs f32 reference (loose tolerance: bf16 matmul operands)
    ref = reference_forward(params, x, edge_index, edge_attr, batch_idx,
                            num_graphs, seq_length, num_layers)
    for k in ("last_hidden_state", "pooler_output", "reconstructed"):
        assert bool(jnp.allclose(out[k], ref[k], rtol=1e-1, atol=1e-1)), k

    print("KERNEL_OK")
</pallas_src>

<mosaic_0001>
module attributes {stable_mosaic.version = 11 : i64} {
  func.func @_wln_kernel(%arg0: i32, %arg1: memref<16xi32, #tpu.memory_space<smem>>, %arg2: memref<16xi32, #tpu.memory_space<smem>>, %arg3: memref<12xi32, #tpu.memory_space<smem>>, %arg4: memref<12x128xbf16, #tpu.memory_space<vmem>>, %arg5: memref<16x128xbf16, #tpu.memory_space<vmem>>, %arg6: memref<2x128xf32, #tpu.memory_space<vmem>>, %arg7: memref<128x128xbf16, #tpu.memory_space<vmem>>, %arg8: memref<1x128xf32, #tpu.memory_space<vmem>>, %arg9: memref<1x128xf32, #tpu.memory_space<vmem>>, %arg10: memref<1x128xf32, #tpu.memory_space<vmem>>, %arg11: memref<3x128x128xbf16, #tpu.memory_space<vmem>>, %arg12: memref<3x128x128xbf16, #tpu.memory_space<vmem>>, %arg13: memref<3x1x128xf32, #tpu.memory_space<vmem>>, %arg14: memref<3x1x128xf32, #tpu.memory_space<vmem>>, %arg15: memref<3x1x128xf32, #tpu.memory_space<vmem>>, %arg16: memref<3x128x128xbf16, #tpu.memory_space<vmem>>, %arg17: memref<1x128xf32, #tpu.memory_space<vmem>>, %arg18: memref<1x128xf32, #tpu.memory_space<vmem>>, %arg19: memref<1x128xf32, #tpu.memory_space<vmem>>, %arg20: memref<128x128xbf16, #tpu.memory_space<vmem>>, %arg21: memref<1x128xf32, #tpu.memory_space<vmem>>, %arg22: memref<128x128xbf16, #tpu.memory_space<vmem>>, %arg23: memref<1x128xf32, #tpu.memory_space<vmem>>, %arg24: memref<1x128xf32, #tpu.memory_space<vmem>>, %arg25: memref<1x128xf32, #tpu.memory_space<vmem>>, %arg26: memref<128x128xbf16, #tpu.memory_space<vmem>>, %arg27: memref<1x128xf32, #tpu.memory_space<vmem>>, %arg28: memref<2x128xf32, #tpu.memory_space<vmem>>, %arg29: memref<2x128xf32, #tpu.memory_space<vmem>>, %arg30: memref<12x128xf32, #tpu.memory_space<vmem>>, %arg31: memref<12x128xf32, #tpu.memory_space<vmem>>, %arg32: memref<12x128xf32, #tpu.memory_space<vmem>>, %arg33: memref<12x128xf32, #tpu.memory_space<vmem>>, %arg34: memref<16x128xf32, #tpu.memory_space<vmem>>, %arg35: memref<12x128xf32, #tpu.memory_space<vmem>>, %arg36: memref<2x128xf32, #tpu.memory_space<vmem>>, %arg37: memref<2x128xf32, #tpu.memory_space<vmem>>) attributes {dimension_semantics = [#tpu.dimension_semantics<arbitrary>], iteration_bounds = array<i64: 1>, scalar_prefetch = 3 : i64, scratch_operands = 7 : i64, tpu.core_type = #tpu.core_type<tc>, window_params = [{pipeline_mode = #tpu.pipeline_mode<synchronous>, transform_indices = @transform_0, window_bounds = array<i64: 12, 128>}, {pipeline_mode = #tpu.pipeline_mode<synchronous>, transform_indices = @transform_1, window_bounds = array<i64: 16, 128>}, {pipeline_mode = #tpu.pipeline_mode<synchronous>, transform_indices = @transform_2, window_bounds = array<i64: 2, 128>}, {pipeline_mode = #tpu.pipeline_mode<synchronous>, transform_indices = @transform_3, window_bounds = array<i64: 128, 128>}, {pipeline_mode = #tpu.pipeline_mode<synchronous>, transform_indices = @transform_4, window_bounds = array<i64: 1, 128>}, {pipeline_mode = #tpu.pipeline_mode<synchronous>, transform_indices = @transform_5, window_bounds = array<i64: 1, 128>}, {pipeline_mode = #tpu.pipeline_mode<synchronous>, transform_indices = @transform_6, window_bounds = array<i64: 1, 128>}, {pipeline_mode = #tpu.pipeline_mode<synchronous>, transform_indices = @transform_7, window_bounds = array<i64: 3, 128, 128>}, {pipeline_mode = #tpu.pipeline_mode<synchronous>, transform_indices = @transform_8, window_bounds = array<i64: 3, 128, 128>}, {pipeline_mode = #tpu.pipeline_mode<synchronous>, transform_indices = @transform_9, window_bounds = array<i64: 3, 1, 128>}, {pipeline_mode = #tpu.pipeline_mode<synchronous>, transform_indices = @transform_10, window_bounds = array<i64: 3, 1, 128>}, {pipeline_mode = #tpu.pipeline_mode<synchronous>, transform_indices = @transform_11, window_bounds = array<i64: 3, 1, 128>}, {pipeline_mode = #tpu.pipeline_mode<synchronous>, transform_indices = @transform_12, window_bounds = array<i64: 3, 128, 128>}, {pipeline_mode = #tpu.pipeline_mode<synchronous>, transform_indices = @transform_13, window_bounds = array<i64: 1, 128>}, {pipeline_mode = #tpu.pipeline_mode<synchronous>, transform_indices = @transform_14, window_bounds = array<i64: 1, 128>}, {pipeline_mode = #tpu.pipeline_mode<synchronous>, transform_indices = @transform_15, window_bounds = array<i64: 1, 128>}, {pipeline_mode = #tpu.pipeline_mode<synchronous>, transform_indices = @transform_16, window_bounds = array<i64: 128, 128>}, {pipeline_mode = #tpu.pipeline_mode<synchronous>, transform_indices = @transform_17, window_bounds = array<i64: 1, 128>}, {pipeline_mode = #tpu.pipeline_mode<synchronous>, transform_indices = @transform_18, window_bounds = array<i64: 128, 128>}, {pipeline_mode = #tpu.pipeline_mode<synchronous>, transform_indices = @transform_19, window_bounds = array<i64: 1, 128>}, {pipeline_mode = #tpu.pipeline_mode<synchronous>, transform_indices = @transform_20, window_bounds = array<i64: 1, 128>}, {pipeline_mode = #tpu.pipeline_mode<synchronous>, transform_indices = @transform_21, window_bounds = array<i64: 1, 128>}, {pipeline_mode = #tpu.pipeline_mode<synchronous>, transform_indices = @transform_22, window_bounds = array<i64: 128, 128>}, {pipeline_mode = #tpu.pipeline_mode<synchronous>, transform_indices = @transform_23, window_bounds = array<i64: 1, 128>}, {pipeline_mode = #tpu.pipeline_mode<synchronous>, transform_indices = @transform_24, window_bounds = array<i64: 2, 128>}, {pipeline_mode = #tpu.pipeline_mode<synchronous>, transform_indices = @transform_25, window_bounds = array<i64: 2, 128>}, {pipeline_mode = #tpu.pipeline_mode<synchronous>, transform_indices = @transform_26, window_bounds = array<i64: 12, 128>}]} {
    %c0 = arith.constant 0 : index
    %c0_0 = arith.constant 0 : index
    %0 = vector.load %arg4[%c0, %c0_0] : memref<12x128xbf16, #tpu.memory_space<vmem>>, vector<12x128xbf16>
    %c0_1 = arith.constant 0 : index
    %c0_2 = arith.constant 0 : index
    %1 = vector.load %arg7[%c0_1, %c0_2] : memref<128x128xbf16, #tpu.memory_space<vmem>>, vector<128x128xbf16>
    %cst = arith.constant dense<0.000000e+00> : vector<12x128xf32>
    %2 = tpu.matmul %0, %1, %cst {dimension_numbers = #tpu.dot_dimension_numbers<[1], [0], [0], [1], [0, 0, 1, 1], [], []>} : vector<12x128xbf16>, vector<128x128xbf16>, vector<12x128xf32> -> vector<12x128xf32>
    %c0_3 = arith.constant 0 : index
    %c0_4 = arith.constant 0 : index
    %3 = vector.load %arg8[%c0_3, %c0_4] : memref<1x128xf32, #tpu.memory_space<vmem>>, vector<1x128xf32>
    %4 = vector.broadcast %3 : vector<1x128xf32> to vector<12x128xf32>
    %5 = arith.addf %2, %4 : vector<12x128xf32>
    %cst_5 = arith.constant 0.000000e+00 : f32
    %6 = vector.broadcast %cst_5 : f32 to vector<12x128xf32>
    %7 = arith.maximumf %5, %6 : vector<12x128xf32>
    %c0_6 = arith.constant 0 : index
    %c0_7 = arith.constant 0 : index
    %8 = vector.load %arg9[%c0_6, %c0_7] : memref<1x128xf32, #tpu.memory_space<vmem>>, vector<1x128xf32>
    %9 = vector.broadcast %8 : vector<1x128xf32> to vector<12x128xf32>
    %10 = arith.mulf %7, %9 : vector<12x128xf32>
    %c0_8 = arith.constant 0 : index
    %c0_9 = arith.constant 0 : index
    %11 = vector.load %arg10[%c0_8, %c0_9] : memref<1x128xf32, #tpu.memory_space<vmem>>, vector<1x128xf32>
    %12 = vector.broadcast %11 : vector<1x128xf32> to vector<12x128xf32>
    %13 = arith.addf %10, %12 : vector<12x128xf32>
    %c0_10 = arith.constant 0 : index
    %c0_11 = arith.constant 0 : index
    %14 = vector.load %arg31[%c0_10, %c0_11] : memref<12x128xf32, #tpu.memory_space<vmem>>, vector<12x128xf32>
    tpu.vector_store %arg31[%c0_10, %c0_11], %13 {strides = array<i32>} : memref<12x128xf32, #tpu.memory_space<vmem>>, vector<12x128xf32>,
    %c0_12 = arith.constant 0 : index
    %c0_13 = arith.constant 0 : index
    %15 = vector.load %arg32[%c0_12, %c0_13] : memref<12x128xf32, #tpu.memory_space<vmem>>, vector<12x128xf32>
    tpu.vector_store %arg32[%c0_12, %c0_13], %13 {strides = array<i32>} : memref<12x128xf32, #tpu.memory_space<vmem>>, vector<12x128xf32>,
    %c0_14 = arith.constant 0 : index
    %c0_15 = arith.constant 0 : index
    %16 = vector.load %arg31[%c0_14, %c0_15] : memref<12x128xf32, #tpu.memory_space<vmem>>, vector<12x128xf32>
    %17 = arith.truncf %16 : vector<12x128xf32> to vector<12x128xbf16>
    %c0_16 = arith.constant 0 : index
    %c0_17 = arith.constant 0 : index
    %c0_18 = arith.constant 0 : index
    %18 = vector.load %arg11[%c0_16, %c0_17, %c0_18] : memref<3x128x128xbf16, #tpu.memory_space<vmem>>, vector<1x128x128xbf16>
    %19 = vector.shape_cast %18 : vector<1x128x128xbf16> to vector<128x128xbf16>
    %cst_19 = arith.constant dense<0.000000e+00> : vector<12x128xf32>
    %20 = tpu.matmul %17, %19, %cst_19 {dimension_numbers = #tpu.dot_dimension_numbers<[1], [0], [0], [1], [0, 0, 1, 1], [], []>} : vector<12x128xbf16>, vector<128x128xbf16>, vector<12x128xf32> -> vector<12x128xf32>
    %c0_20 = arith.constant 0 : index
    %c0_21 = arith.constant 0 : index
    %21 = vector.load %arg33[%c0_20, %c0_21] : memref<12x128xf32, #tpu.memory_space<vmem>>, vector<12x128xf32>
    tpu.vector_store %arg33[%c0_20, %c0_21], %20 {strides = array<i32>} : memref<12x128xf32, #tpu.memory_space<vmem>>, vector<12x128xf32>,
    %c0_22 = arith.constant 0 : index
    %c0_23 = arith.constant 0 : index
    %22 = vector.load %arg5[%c0_22, %c0_23] : memref<16x128xbf16, #tpu.memory_space<vmem>>, vector<16x128xbf16>
    %c0_24 = arith.constant 0 : index
    %c0_25 = arith.constant 0 : index
    %c0_26 = arith.constant 0 : index
    %23 = vector.load %arg12[%c0_24, %c0_25, %c0_26] : memref<3x128x128xbf16, #tpu.memory_space<vmem>>, vector<1x128x128xbf16>
    %24 = vector.shape_cast %23 : vector<1x128x128xbf16> to vector<128x128xbf16>
    %cst_27 = arith.constant dense<0.000000e+00> : vector<16x128xf32>
    %25 = tpu.matmul %22, %24, %cst_27 {dimension_numbers = #tpu.dot_dimension_numbers<[1], [0], [0], [1], [0, 0, 1, 1], [], []>} : vector<16x128xbf16>, vector<128x128xbf16>, vector<16x128xf32> -> vector<16x128xf32>
    %c0_28 = arith.constant 0 : index
    %c0_29 = arith.constant 0 : index
    %c0_30 = arith.constant 0 : index
    %26 = vector.load %arg13[%c0_28, %c0_29, %c0_30] : memref<3x1x128xf32, #tpu.memory_space<vmem>>, vector<1x1x128xf32>
    %27 = vector.shape_cast %26 : vector<1x1x128xf32> to vector<1x128xf32>
    %28 = vector.broadcast %27 : vector<1x128xf32> to vector<16x128xf32>
    %29 = arith.addf %25, %28 : vector<16x128xf32>
    %c0_31 = arith.constant 0 : index
    %c0_32 = arith.constant 0 : index
    %30 = vector.load %arg34[%c0_31, %c0_32] : memref<16x128xf32, #tpu.memory_space<vmem>>, vector<16x128xf32>
    tpu.vector_store %arg34[%c0_31, %c0_32], %29 {strides = array<i32>} : memref<16x128xf32, #tpu.memory_space<vmem>>, vector<16x128xf32>,
    %c0_33 = arith.constant 0 : index
    %c0_34 = arith.constant 0 : index
    %c0_35 = arith.constant 0 : index
    %31 = vector.load %arg13[%c0_33, %c0_34, %c0_35] : memref<3x1x128xf32, #tpu.memory_space<vmem>>, vector<1x1x128xf32>
    %32 = vector.shape_cast %31 : vector<1x1x128xf32> to vector<1x128xf32>
    %33 = vector.broadcast %32 : vector<1x128xf32> to vector<12x128xf32>
    %34 = arith.addf %20, %33 : vector<12x128xf32>
    %cst_36 = arith.constant 0.000000e+00 : f32
    %35 = vector.broadcast %cst_36 : f32 to vector<12x128xf32>
    %36 = arith.maximumf %34, %35 : vector<12x128xf32>
    %c0_37 = arith.constant 0 : index
    %c0_38 = arith.constant 0 : index
    %37 = vector.load %arg35[%c0_37, %c0_38] : memref<12x128xf32, #tpu.memory_space<vmem>>, vector<12x128xf32>
    tpu.vector_store %arg35[%c0_37, %c0_38], %36 {strides = array<i32>} : memref<12x128xf32, #tpu.memory_space<vmem>>, vector<12x128xf32>,
    %c0_i32 = arith.constant 0 : i32
    %38 = arith.index_cast %c0_i32 : i32 to index
    %39 = memref.load %arg1[%38] : memref<16xi32, #tpu.memory_space<smem>>
    %40 = arith.index_cast %c0_i32 : i32 to index
    %41 = memref.load %arg2[%40] : memref<16xi32, #tpu.memory_space<smem>>
    %42 = arith.index_cast %39 : i32 to index
    %c0_39 = arith.constant 0 : index
    %43 = vector.load %arg33[%42, %c0_39] : memref<12x128xf32, #tpu.memory_space<vmem>>, vector<1x128xf32>
    %44 = arith.index_cast %c0_i32 : i32 to index
    %c0_40 = arith.constant 0 : index
    %45 = vector.load %arg34[%44, %c0_40] : memref<16x128xf32, #tpu.memory_space<vmem>>, vector<1x128xf32>
    %46 = arith.addf %43, %45 : vector<1x128xf32>
    %cst_41 = arith.constant 0.000000e+00 : f32
    %47 = vector.broadcast %cst_41 : f32 to vector<1x128xf32>
    %48 = arith.maximumf %46, %47 : vector<1x128xf32>
    %49 = arith.index_cast %41 : i32 to index
    %c0_42 = arith.constant 0 : index
    %50 = vector.load %arg35[%49, %c0_42] : memref<12x128xf32, #tpu.memory_space<vmem>>, vector<1x128xf32>
    %51 = arith.addf %50, %48 : vector<1x128xf32>
    %52 = arith.index_cast %41 : i32 to index
    %c0_43 = arith.constant 0 : index
    %53 = vector.load %arg35[%52, %c0_43] : memref<12x128xf32, #tpu.memory_space<vmem>>, vector<1x128xf32>
    tpu.vector_store %arg35[%52, %c0_43], %51 {strides = array<i32>} : memref<12x128xf32, #tpu.memory_space<vmem>>, vector<1x128xf32>,
    %c1_i32 = arith.constant 1 : i32
    %54 = arith.index_cast %c1_i32 : i32 to index
    %55 = memref.load %arg1[%54] : memref<16xi32, #tpu.memory_space<smem>>
    %56 = arith.index_cast %c1_i32 : i32 to index
    %57 = memref.load %arg2[%56] : memref<16xi32, #tpu.memory_space<smem>>
    %58 = arith.index_cast %55 : i32 to index
    %c0_44 = arith.constant 0 : index
    %59 = vector.load %arg33[%58, %c0_44] : memref<12x128xf32, #tpu.memory_space<vmem>>, vector<1x128xf32>
    %60 = arith.index_cast %c1_i32 : i32 to index
    %c0_45 = arith.constant 0 : index
    %61 = vector.load %arg34[%60, %c0_45] : memref<16x128xf32, #tpu.memory_space<vmem>>, vector<1x128xf32>
    %62 = arith.addf %59, %61 : vector<1x128xf32>
    %cst_46 = arith.constant 0.000000e+00 : f32
    %63 = vector.broadcast %cst_46 : f32 to vector<1x128xf32>
    %64 = arith.maximumf %62, %63 : vector<1x128xf32>
    %65 = arith.index_cast %57 : i32 to index
    %c0_47 = arith.constant 0 : index
    %66 = vector.load %arg35[%65, %c0_47] : memref<12x128xf32, #tpu.memory_space<vmem>>, vector<1x128xf32>
    %67 = arith.addf %66, %64 : vector<1x128xf32>
    %68 = arith.index_cast %57 : i32 to index
    %c0_48 = arith.constant 0 : index
    %69 = vector.load %arg35[%68, %c0_48] : memref<12x128xf32, #tpu.memory_space<vmem>>, vector<1x128xf32>
    tpu.vector_store %arg35[%68, %c0_48], %67 {strides = array<i32>} : memref<12x128xf32, #tpu.memory_space<vmem>>, vector<1x128xf32>,
    %c2_i32 = arith.constant 2 : i32
    %70 = arith.index_cast %c2_i32 : i32 to index
    %71 = memref.load %arg1[%70] : memref<16xi32, #tpu.memory_space<smem>>
    %72 = arith.index_cast %c2_i32 : i32 to index
    %73 = memref.load %arg2[%72] : memref<16xi32, #tpu.memory_space<smem>>
    %74 = arith.index_cast %71 : i32 to index
    %c0_49 = arith.constant 0 : index
    %75 = vector.load %arg33[%74, %c0_49] : memref<12x128xf32, #tpu.memory_space<vmem>>, vector<1x128xf32>
    %76 = arith.index_cast %c2_i32 : i32 to index
    %c0_50 = arith.constant 0 : index
    %77 = vector.load %arg34[%76, %c0_50] : memref<16x128xf32, #tpu.memory_space<vmem>>, vector<1x128xf32>
    %78 = arith.addf %75, %77 : vector<1x128xf32>
    %cst_51 = arith.constant 0.000000e+00 : f32
    %79 = vector.broadcast %cst_51 : f32 to vector<1x128xf32>
    %80 = arith.maximumf %78, %79 : vector<1x128xf32>
    %81 = arith.index_cast %73 : i32 to index
    %c0_52 = arith.constant 0 : index
    %82 = vector.load %arg35[%81, %c0_52] : memref<12x128xf32, #tpu.memory_space<vmem>>, vector<1x128xf32>
    %83 = arith.addf %82, %80 : vector<1x128xf32>
    %84 = arith.index_cast %73 : i32 to index
    %c0_53 = arith.constant 0 : index
    %85 = vector.load %arg35[%84, %c0_53] : memref<12x128xf32, #tpu.memory_space<vmem>>, vector<1x128xf32>
    tpu.vector_store %arg35[%84, %c0_53], %83 {strides = array<i32>} : memref<12x128xf32, #tpu.memory_space<vmem>>, vector<1x128xf32>,
    %c3_i32 = arith.constant 3 : i32
    %86 = arith.index_cast %c3_i32 : i32 to index
    %87 = memref.load %arg1[%86] : memref<16xi32, #tpu.memory_space<smem>>
    %88 = arith.index_cast %c3_i32 : i32 to index
    %89 = memref.load %arg2[%88] : memref<16xi32, #tpu.memory_space<smem>>
    %90 = arith.index_cast %87 : i32 to index
    %c0_54 = arith.constant 0 : index
    %91 = vector.load %arg33[%90, %c0_54] : memref<12x128xf32, #tpu.memory_space<vmem>>, vector<1x128xf32>
    %92 = arith.index_cast %c3_i32 : i32 to index
    %c0_55 = arith.constant 0 : index
    %93 = vector.load %arg34[%92, %c0_55] : memref<16x128xf32, #tpu.memory_space<vmem>>, vector<1x128xf32>
    %94 = arith.addf %91, %93 : vector<1x128xf32>
    %cst_56 = arith.constant 0.000000e+00 : f32
    %95 = vector.broadcast %cst_56 : f32 to vector<1x128xf32>
    %96 = arith.maximumf %94, %95 : vector<1x128xf32>
    %97 = arith.index_cast %89 : i32 to index
    %c0_57 = arith.constant 0 : index
    %98 = vector.load %arg35[%97, %c0_57] : memref<12x128xf32, #tpu.memory_space<vmem>>, vector<1x128xf32>
    %99 = arith.addf %98, %96 : vector<1x128xf32>
    %100 = arith.index_cast %89 : i32 to index
    %c0_58 = arith.constant 0 : index
    %101 = vector.load %arg35[%100, %c0_58] : memref<12x128xf32, #tpu.memory_space<vmem>>, vector<1x128xf32>
    tpu.vector_store %arg35[%100, %c0_58], %99 {strides = array<i32>} : memref<12x128xf32, #tpu.memory_space<vmem>>, vector<1x128xf32>,
    %c4_i32 = arith.constant 4 : i32
    %102 = arith.index_cast %c4_i32 : i32 to index
    %103 = memref.load %arg1[%102] : memref<16xi32, #tpu.memory_space<smem>>
    %104 = arith.index_cast %c4_i32 : i32 to index
    %105 = memref.load %arg2[%104] : memref<16xi32, #tpu.memory_space<smem>>
    %106 = arith.index_cast %103 : i32 to index
    %c0_59 = arith.constant 0 : index
    %107 = vector.load %arg33[%106, %c0_59] : memref<12x128xf32, #tpu.memory_space<vmem>>, vector<1x128xf32>
    %108 = arith.index_cast %c4_i32 : i32 to index
    %c0_60 = arith.constant 0 : index
    %109 = vector.load %arg34[%108, %c0_60] : memref<16x128xf32, #tpu.memory_space<vmem>>, vector<1x128xf32>
    %110 = arith.addf %107, %109 : vector<1x128xf32>
    %cst_61 = arith.constant 0.000000e+00 : f32
    %111 = vector.broadcast %cst_61 : f32 to vector<1x128xf32>
    %112 = arith.maximumf %110, %111 : vector<1x128xf32>
    %113 = arith.index_cast %105 : i32 to index
    %c0_62 = arith.constant 0 : index
    %114 = vector.load %arg35[%113, %c0_62] : memref<12x128xf32, #tpu.memory_space<vmem>>, vector<1x128xf32>
    %115 = arith.addf %114, %112 : vector<1x128xf32>
    %116 = arith.index_cast %105 : i32 to index
    %c0_63 = arith.constant 0 : index
    %117 = vector.load %arg35[%116, %c0_63] : memref<12x128xf32, #tpu.memory_space<vmem>>, vector<1x128xf32>
    tpu.vector_store %arg35[%116, %c0_63], %115 {strides = array<i32>} : memref<12x128xf32, #tpu.memory_space<vmem>>, vector<1x128xf32>,
    %c5_i32 = arith.constant 5 : i32
    %118 = arith.index_cast %c5_i32 : i32 to index
    %119 = memref.load %arg1[%118] : memref<16xi32, #tpu.memory_space<smem>>
    %120 = arith.index_cast %c5_i32 : i32 to index
    %121 = memref.load %arg2[%120] : memref<16xi32, #tpu.memory_space<smem>>
    %122 = arith.index_cast %119 : i32 to index
    %c0_64 = arith.constant 0 : index
    %123 = vector.load %arg33[%122, %c0_64] : memref<12x128xf32, #tpu.memory_space<vmem>>, vector<1x128xf32>
    %124 = arith.index_cast %c5_i32 : i32 to index
    %c0_65 = arith.constant 0 : index
    %125 = vector.load %arg34[%124, %c0_65] : memref<16x128xf32, #tpu.memory_space<vmem>>, vector<1x128xf32>
    %126 = arith.addf %123, %125 : vector<1x128xf32>
    %cst_66 = arith.constant 0.000000e+00 : f32
    %127 = vector.broadcast %cst_66 : f32 to vector<1x128xf32>
    %128 = arith.maximumf %126, %127 : vector<1x128xf32>
    %129 = arith.index_cast %121 : i32 to index
    %c0_67 = arith.constant 0 : index
    %130 = vector.load %arg35[%129, %c0_67] : memref<12x128xf32, #tpu.memory_space<vmem>>, vector<1x128xf32>
    %131 = arith.addf %130, %128 : vector<1x128xf32>
    %132 = arith.index_cast %121 : i32 to index
    %c0_68 = arith.constant 0 : index
    %133 = vector.load %arg35[%132, %c0_68] : memref<12x128xf32, #tpu.memory_space<vmem>>, vector<1x128xf32>
    tpu.vector_store %arg35[%132, %c0_68], %131 {strides = array<i32>} : memref<12x128xf32, #tpu.memory_space<vmem>>, vector<1x128xf32>,
    %c6_i32 = arith.constant 6 : i32
    %134 = arith.index_cast %c6_i32 : i32 to index
    %135 = memref.load %arg1[%134] : memref<16xi32, #tpu.memory_space<smem>>
    %136 = arith.index_cast %c6_i32 : i32 to index
    %137 = memref.load %arg2[%136] : memref<16xi32, #tpu.memory_space<smem>>
    %138 = arith.index_cast %135 : i32 to index
    %c0_69 = arith.constant 0 : index
    %139 = vector.load %arg33[%138, %c0_69] : memref<12x128xf32, #tpu.memory_space<vmem>>, vector<1x128xf32>
    %140 = arith.index_cast %c6_i32 : i32 to index
    %c0_70 = arith.constant 0 : index
    %141 = vector.load %arg34[%140, %c0_70] : memref<16x128xf32, #tpu.memory_space<vmem>>, vector<1x128xf32>
    %142 = arith.addf %139, %141 : vector<1x128xf32>
    %cst_71 = arith.constant 0.000000e+00 : f32
    %143 = vector.broadcast %cst_71 : f32 to vector<1x128xf32>
    %144 = arith.maximumf %142, %143 : vector<1x128xf32>
    %145 = arith.index_cast %137 : i32 to index
    %c0_72 = arith.constant 0 : index
    %146 = vector.load %arg35[%145, %c0_72] : memref<12x128xf32, #tpu.memory_space<vmem>>, vector<1x128xf32>
    %147 = arith.addf %146, %144 : vector<1x128xf32>
    %148 = arith.index_cast %137 : i32 to index
    %c0_73 = arith.constant 0 : index
    %149 = vector.load %arg35[%148, %c0_73] : memref<12x128xf32, #tpu.memory_space<vmem>>, vector<1x128xf32>
    tpu.vector_store %arg35[%148, %c0_73], %147 {strides = array<i32>} : memref<12x128xf32, #tpu.memory_space<vmem>>, vector<1x128xf32>,
    %c7_i32 = arith.constant 7 : i32
    %150 = arith.index_cast %c7_i32 : i32 to index
    %151 = memref.load %arg1[%150] : memref<16xi32, #tpu.memory_space<smem>>
    %152 = arith.index_cast %c7_i32 : i32 to index
    %153 = memref.load %arg2[%152] : memref<16xi32, #tpu.memory_space<smem>>
    %154 = arith.index_cast %151 : i32 to index
    %c0_74 = arith.constant 0 : index
    %155 = vector.load %arg33[%154, %c0_74] : memref<12x128xf32, #tpu.memory_space<vmem>>, vector<1x128xf32>
    %156 = arith.index_cast %c7_i32 : i32 to index
    %c0_75 = arith.constant 0 : index
    %157 = vector.load %arg34[%156, %c0_75] : memref<16x128xf32, #tpu.memory_space<vmem>>, vector<1x128xf32>
    %158 = arith.addf %155, %157 : vector<1x128xf32>
    %cst_76 = arith.constant 0.000000e+00 : f32
    %159 = vector.broadcast %cst_76 : f32 to vector<1x128xf32>
    %160 = arith.maximumf %158, %159 : vector<1x128xf32>
    %161 = arith.index_cast %153 : i32 to index
    %c0_77 = arith.constant 0 : index
    %162 = vector.load %arg35[%161, %c0_77] : memref<12x128xf32, #tpu.memory_space<vmem>>, vector<1x128xf32>
    %163 = arith.addf %162, %160 : vector<1x128xf32>
    %164 = arith.index_cast %153 : i32 to index
    %c0_78 = arith.constant 0 : index
    %165 = vector.load %arg35[%164, %c0_78] : memref<12x128xf32, #tpu.memory_space<vmem>>, vector<1x128xf32>
    tpu.vector_store %arg35[%164, %c0_78], %163 {strides = array<i32>} : memref<12x128xf32, #tpu.memory_space<vmem>>, vector<1x128xf32>,
    %c8_i32 = arith.constant 8 : i32
    %166 = arith.index_cast %c8_i32 : i32 to index
    %167 = memref.load %arg1[%166] : memref<16xi32, #tpu.memory_space<smem>>
    %168 = arith.index_cast %c8_i32 : i32 to index
    %169 = memref.load %arg2[%168] : memref<16xi32, #tpu.memory_space<smem>>
    %170 = arith.index_cast %167 : i32 to index
    %c0_79 = arith.constant 0 : index
    %171 = vector.load %arg33[%170, %c0_79] : memref<12x128xf32, #tpu.memory_space<vmem>>, vector<1x128xf32>
    %172 = arith.index_cast %c8_i32 : i32 to index
    %c0_80 = arith.constant 0 : index
    %173 = vector.load %arg34[%172, %c0_80] : memref<16x128xf32, #tpu.memory_space<vmem>>, vector<1x128xf32>
    %174 = arith.addf %171, %173 : vector<1x128xf32>
    %cst_81 = arith.constant 0.000000e+00 : f32
    %175 = vector.broadcast %cst_81 : f32 to vector<1x128xf32>
    %176 = arith.maximumf %174, %175 : vector<1x128xf32>
    %177 = arith.index_cast %169 : i32 to index
    %c0_82 = arith.constant 0 : index
    %178 = vector.load %arg35[%177, %c0_82] : memref<12x128xf32, #tpu.memory_space<vmem>>, vector<1x128xf32>
    %179 = arith.addf %178, %176 : vector<1x128xf32>
    %180 = arith.index_cast %169 : i32 to index
    %c0_83 = arith.constant 0 : index
    %181 = vector.load %arg35[%180, %c0_83] : memref<12x128xf32, #tpu.memory_space<vmem>>, vector<1x128xf32>
    tpu.vector_store %arg35[%180, %c0_83], %179 {strides = array<i32>} : memref<12x128xf32, #tpu.memory_space<vmem>>, vector<1x128xf32>,
    %c9_i32 = arith.constant 9 : i32
    %182 = arith.index_cast %c9_i32 : i32 to index
    %183 = memref.load %arg1[%182] : memref<16xi32, #tpu.memory_space<smem>>
    %184 = arith.index_cast %c9_i32 : i32 to index
    %185 = memref.load %arg2[%184] : memref<16xi32, #tpu.memory_space<smem>>
    %186 = arith.index_cast %183 : i32 to index
    %c0_84 = arith.constant 0 : index
    %187 = vector.load %arg33[%186, %c0_84] : memref<12x128xf32, #tpu.memory_space<vmem>>, vector<1x128xf32>
    %188 = arith.index_cast %c9_i32 : i32 to index
    %c0_85 = arith.constant 0 : index
    %189 = vector.load %arg34[%188, %c0_85] : memref<16x128xf32, #tpu.memory_space<vmem>>, vector<1x128xf32>
    %190 = arith.addf %187, %189 : vector<1x128xf32>
    %cst_86 = arith.constant 0.000000e+00 : f32
    %191 = vector.broadcast %cst_86 : f32 to vector<1x128xf32>
    %192 = arith.maximumf %190, %191 : vector<1x128xf32>
    %193 = arith.index_cast %185 : i32 to index
    %c0_87 = arith.constant 0 : index
    %194 = vector.load %arg35[%193, %c0_87] : memref<12x128xf32, #tpu.memory_space<vmem>>, vector<1x128xf32>
    %195 = arith.addf %194, %192 : vector<1x128xf32>
    %196 = arith.index_cast %185 : i32 to index
    %c0_88 = arith.constant 0 : index
    %197 = vector.load %arg35[%196, %c0_88] : memref<12x128xf32, #tpu.memory_space<vmem>>, vector<1x128xf32>
    tpu.vector_store %arg35[%196, %c0_88], %195 {strides = array<i32>} : memref<12x128xf32, #tpu.memory_space<vmem>>, vector<1x128xf32>,
    %c10_i32 = arith.constant 10 : i32
    %198 = arith.index_cast %c10_i32 : i32 to index
    %199 = memref.load %arg1[%198] : memref<16xi32, #tpu.memory_space<smem>>
    %200 = arith.index_cast %c10_i32 : i32 to index
    %201 = memref.load %arg2[%200] : memref<16xi32, #tpu.memory_space<smem>>
    %202 = arith.index_cast %199 : i32 to index
    %c0_89 = arith.constant 0 : index
    %203 = vector.load %arg33[%202, %c0_89] : memref<12x128xf32, #tpu.memory_space<vmem>>, vector<1x128xf32>
    %204 = arith.index_cast %c10_i32 : i32 to index
    %c0_90 = arith.constant 0 : index
    %205 = vector.load %arg34[%204, %c0_90] : memref<16x128xf32, #tpu.memory_space<vmem>>, vector<1x128xf32>
    %206 = arith.addf %203, %205 : vector<1x128xf32>
    %cst_91 = arith.constant 0.000000e+00 : f32
    %207 = vector.broadcast %cst_91 : f32 to vector<1x128xf32>
    %208 = arith.maximumf %206, %207 : vector<1x128xf32>
    %209 = arith.index_cast %201 : i32 to index
    %c0_92 = arith.constant 0 : index
    %210 = vector.load %arg35[%209, %c0_92] : memref<12x128xf32, #tpu.memory_space<vmem>>, vector<1x128xf32>
    %211 = arith.addf %210, %208 : vector<1x128xf32>
    %212 = arith.index_cast %201 : i32 to index
    %c0_93 = arith.constant 0 : index
    %213 = vector.load %arg35[%212, %c0_93] : memref<12x128xf32, #tpu.memory_space<vmem>>, vector<1x128xf32>
    tpu.vector_store %arg35[%212, %c0_93], %211 {strides = array<i32>} : memref<12x128xf32, #tpu.memory_space<vmem>>, vector<1x128xf32>,
    %c11_i32 = arith.constant 11 : i32
    %214 = arith.index_cast %c11_i32 : i32 to index
    %215 = memref.load %arg1[%214] : memref<16xi32, #tpu.memory_space<smem>>
    %216 = arith.index_cast %c11_i32 : i32 to index
    %217 = memref.load %arg2[%216] : memref<16xi32, #tpu.memory_space<smem>>
    %218 = arith.index_cast %215 : i32 to index
    %c0_94 = arith.constant 0 : index
    %219 = vector.load %arg33[%218, %c0_94] : memref<12x128xf32, #tpu.memory_space<vmem>>, vector<1x128xf32>
    %220 = arith.index_cast %c11_i32 : i32 to index
    %c0_95 = arith.constant 0 : index
    %221 = vector.load %arg34[%220, %c0_95] : memref<16x128xf32, #tpu.memory_space<vmem>>, vector<1x128xf32>
    %222 = arith.addf %219, %221 : vector<1x128xf32>
    %cst_96 = arith.constant 0.000000e+00 : f32
    %223 = vector.broadcast %cst_96 : f32 to vector<1x128xf32>
    %224 = arith.maximumf %222, %223 : vector<1x128xf32>
    %225 = arith.index_cast %217 : i32 to index
    %c0_97 = arith.constant 0 : index
    %226 = vector.load %arg35[%225, %c0_97] : memref<12x128xf32, #tpu.memory_space<vmem>>, vector<1x128xf32>
    %227 = arith.addf %226, %224 : vector<1x128xf32>
    %228 = arith.index_cast %217 : i32 to index
    %c0_98 = arith.constant 0 : index
    %229 = vector.load %arg35[%228, %c0_98] : memref<12x128xf32, #tpu.memory_space<vmem>>, vector<1x128xf32>
    tpu.vector_store %arg35[%228, %c0_98], %227 {strides = array<i32>} : memref<12x128xf32, #tpu.memory_space<vmem>>, vector<1x128xf32>,
    %c12_i32 = arith.constant 12 : i32
    %230 = arith.index_cast %c12_i32 : i32 to index
    %231 = memref.load %arg1[%230] : memref<16xi32, #tpu.memory_space<smem>>
    %232 = arith.index_cast %c12_i32 : i32 to index
    %233 = memref.load %arg2[%232] : memref<16xi32, #tpu.memory_space<smem>>
    %234 = arith.index_cast %231 : i32 to index
    %c0_99 = arith.constant 0 : index
    %235 = vector.load %arg33[%234, %c0_99] : memref<12x128xf32, #tpu.memory_space<vmem>>, vector<1x128xf32>
    %236 = arith.index_cast %c12_i32 : i32 to index
    %c0_100 = arith.constant 0 : index
    %237 = vector.load %arg34[%236, %c0_100] : memref<16x128xf32, #tpu.memory_space<vmem>>, vector<1x128xf32>
    %238 = arith.addf %235, %237 : vector<1x128xf32>
    %cst_101 = arith.constant 0.000000e+00 : f32
    %239 = vector.broadcast %cst_101 : f32 to vector<1x128xf32>
    %240 = arith.maximumf %238, %239 : vector<1x128xf32>
    %241 = arith.index_cast %233 : i32 to index
    %c0_102 = arith.constant 0 : index
    %242 = vector.load %arg35[%241, %c0_102] : memref<12x128xf32, #tpu.memory_space<vmem>>, vector<1x128xf32>
    %243 = arith.addf %242, %240 : vector<1x128xf32>
    %244 = arith.index_cast %233 : i32 to index
    %c0_103 = arith.constant 0 : index
    %245 = vector.load %arg35[%244, %c0_103] : memref<12x128xf32, #tpu.memory_space<vmem>>, vector<1x128xf32>
    tpu.vector_store %arg35[%244, %c0_103], %243 {strides = array<i32>} : memref<12x128xf32, #tpu.memory_space<vmem>>, vector<1x128xf32>,
    %c13_i32 = arith.constant 13 : i32
    %246 = arith.index_cast %c13_i32 : i32 to index
    %247 = memref.load %arg1[%246] : memref<16xi32, #tpu.memory_space<smem>>
    %248 = arith.index_cast %c13_i32 : i32 to index
    %249 = memref.load %arg2[%248] : memref<16xi32, #tpu.memory_space<smem>>
    %250 = arith.index_cast %247 : i32 to index
    %c0_104 = arith.constant 0 : index
    %251 = vector.load %arg33[%250, %c0_104] : memref<12x128xf32, #tpu.memory_space<vmem>>, vector<1x128xf32>
    %252 = arith.index_cast %c13_i32 : i32 to index
    %c0_105 = arith.constant 0 : index
    %253 = vector.load %arg34[%252, %c0_105] : memref<16x128xf32, #tpu.memory_space<vmem>>, vector<1x128xf32>
    %254 = arith.addf %251, %253 : vector<1x128xf32>
    %cst_106 = arith.constant 0.000000e+00 : f32
    %255 = vector.broadcast %cst_106 : f32 to vector<1x128xf32>
    %256 = arith.maximumf %254, %255 : vector<1x128xf32>
    %257 = arith.index_cast %249 : i32 to index
    %c0_107 = arith.constant 0 : index
    %258 = vector.load %arg35[%257, %c0_107] : memref<12x128xf32, #tpu.memory_space<vmem>>, vector<1x128xf32>
    %259 = arith.addf %258, %256 : vector<1x128xf32>
    %260 = arith.index_cast %249 : i32 to index
    %c0_108 = arith.constant 0 : index
    %261 = vector.load %arg35[%260, %c0_108] : memref<12x128xf32, #tpu.memory_space<vmem>>, vector<1x128xf32>
    tpu.vector_store %arg35[%260, %c0_108], %259 {strides = array<i32>} : memref<12x128xf32, #tpu.memory_space<vmem>>, vector<1x128xf32>,
    %c14_i32 = arith.constant 14 : i32
    %262 = arith.index_cast %c14_i32 : i32 to index
    %263 = memref.load %arg1[%262] : memref<16xi32, #tpu.memory_space<smem>>
    %264 = arith.index_cast %c14_i32 : i32 to index
    %265 = memref.load %arg2[%264] : memref<16xi32, #tpu.memory_space<smem>>
    %266 = arith.index_cast %263 : i32 to index
    %c0_109 = arith.constant 0 : index
    %267 = vector.load %arg33[%266, %c0_109] : memref<12x128xf32, #tpu.memory_space<vmem>>, vector<1x128xf32>
    %268 = arith.index_cast %c14_i32 : i32 to index
    %c0_110 = arith.constant 0 : index
    %269 = vector.load %arg34[%268, %c0_110] : memref<16x128xf32, #tpu.memory_space<vmem>>, vector<1x128xf32>
    %270 = arith.addf %267, %269 : vector<1x128xf32>
    %cst_111 = arith.constant 0.000000e+00 : f32
    %271 = vector.broadcast %cst_111 : f32 to vector<1x128xf32>
    %272 = arith.maximumf %270, %271 : vector<1x128xf32>
    %273 = arith.index_cast %265 : i32 to index
    %c0_112 = arith.constant 0 : index
    %274 = vector.load %arg35[%273, %c0_112] : memref<12x128xf32, #tpu.memory_space<vmem>>, vector<1x128xf32>
    %275 = arith.addf %274, %272 : vector<1x128xf32>
    %276 = arith.index_cast %265 : i32 to index
    %c0_113 = arith.constant 0 : index
    %277 = vector.load %arg35[%276, %c0_113] : memref<12x128xf32, #tpu.memory_space<vmem>>, vector<1x128xf32>
    tpu.vector_store %arg35[%276, %c0_113], %275 {strides = array<i32>} : memref<12x128xf32, #tpu.memory_space<vmem>>, vector<1x128xf32>,
    %c15_i32 = arith.constant 15 : i32
    %278 = arith.index_cast %c15_i32 : i32 to index
    %279 = memref.load %arg1[%278] : memref<16xi32, #tpu.memory_space<smem>>
    %280 = arith.index_cast %c15_i32 : i32 to index
    %281 = memref.load %arg2[%280] : memref<16xi32, #tpu.memory_space<smem>>
    %282 = arith.index_cast %279 : i32 to index
    %c0_114 = arith.constant 0 : index
    %283 = vector.load %arg33[%282, %c0_114] : memref<12x128xf32, #tpu.memory_space<vmem>>, vector<1x128xf32>
    %284 = arith.index_cast %c15_i32 : i32 to index
    %c0_115 = arith.constant 0 : index
    %285 = vector.load %arg34[%284, %c0_115] : memref<16x128xf32, #tpu.memory_space<vmem>>, vector<1x128xf32>
    %286 = arith.addf %283, %285 : vector<1x128xf32>
    %cst_116 = arith.constant 0.000000e+00 : f32
    %287 = vector.broadcast %cst_116 : f32 to vector<1x128xf32>
    %288 = arith.maximumf %286, %287 : vector<1x128xf32>
    %289 = arith.index_cast %281 : i32 to index
    %c0_117 = arith.constant 0 : index
    %290 = vector.load %arg35[%289, %c0_117] : memref<12x128xf32, #tpu.memory_space<vmem>>, vector<1x128xf32>
    %291 = arith.addf %290, %288 : vector<1x128xf32>
    %292 = arith.index_cast %281 : i32 to index
    %c0_118 = arith.constant 0 : index
    %293 = vector.load %arg35[%292, %c0_118] : memref<12x128xf32, #tpu.memory_space<vmem>>, vector<1x128xf32>
    tpu.vector_store %arg35[%292, %c0_118], %291 {strides = array<i32>} : memref<12x128xf32, #tpu.memory_space<vmem>>, vector<1x128xf32>,
    %c16_i32 = arith.constant 16 : i32
    %c0_119 = arith.constant 0 : index
    %c0_120 = arith.constant 0 : index
    %294 = vector.load %arg35[%c0_119, %c0_120] : memref<12x128xf32, #tpu.memory_space<vmem>>, vector<12x128xf32>
    %c0_121 = arith.constant 0 : index
    %c0_122 = arith.constant 0 : index
    %c0_123 = arith.constant 0 : index
    %295 = vector.load %arg14[%c0_121, %c0_122, %c0_123] : memref<3x1x128xf32, #tpu.memory_space<vmem>>, vector<1x1x128xf32>
    %296 = vector.shape_cast %295 : vector<1x1x128xf32> to vector<1x128xf32>
    %297 = vector.broadcast %296 : vector<1x128xf32> to vector<12x128xf32>
    %298 = arith.mulf %294, %297 : vector<12x128xf32>
    %c0_124 = arith.constant 0 : index
    %c0_125 = arith.constant 0 : index
    %c0_126 = arith.constant 0 : index
    %299 = vector.load %arg15[%c0_124, %c0_125, %c0_126] : memref<3x1x128xf32, #tpu.memory_space<vmem>>, vector<1x1x128xf32>
    %300 = vector.shape_cast %299 : vector<1x1x128xf32> to vector<1x128xf32>
    %301 = vector.broadcast %300 : vector<1x128xf32> to vector<12x128xf32>
    %302 = arith.addf %298, %301 : vector<12x128xf32>
    %c0_127 = arith.constant 0 : index
    %c0_128 = arith.constant 0 : index
    %303 = vector.load %arg31[%c0_127, %c0_128] : memref<12x128xf32, #tpu.memory_space<vmem>>, vector<12x128xf32>
    tpu.vector_store %arg31[%c0_127, %c0_128], %302 {strides = array<i32>} : memref<12x128xf32, #tpu.memory_space<vmem>>, vector<12x128xf32>,
    %c0_129 = arith.constant 0 : index
    %c0_130 = arith.constant 0 : index
    %304 = vector.load %arg32[%c0_129, %c0_130] : memref<12x128xf32, #tpu.memory_space<vmem>>, vector<12x128xf32>
    %305 = arith.addf %304, %302 : vector<12x128xf32>
    %c0_131 = arith.constant 0 : index
    %c0_132 = arith.constant 0 : index
    %306 = vector.load %arg32[%c0_131, %c0_132] : memref<12x128xf32, #tpu.memory_space<vmem>>, vector<12x128xf32>
    tpu.vector_store %arg32[%c0_131, %c0_132], %305 {strides = array<i32>} : memref<12x128xf32, #tpu.memory_space<vmem>>, vector<12x128xf32>,
    %c0_133 = arith.constant 0 : index
    %c0_134 = arith.constant 0 : index
    %307 = vector.load %arg31[%c0_133, %c0_134] : memref<12x128xf32, #tpu.memory_space<vmem>>, vector<12x128xf32>
    %308 = arith.truncf %307 : vector<12x128xf32> to vector<12x128xbf16>
    %c1 = arith.constant 1 : index
    %c0_135 = arith.constant 0 : index
    %c0_136 = arith.constant 0 : index
    %309 = vector.load %arg11[%c1, %c0_135, %c0_136] : memref<3x128x128xbf16, #tpu.memory_space<vmem>>, vector<1x128x128xbf16>
    %310 = vector.shape_cast %309 : vector<1x128x128xbf16> to vector<128x128xbf16>
    %cst_137 = arith.constant dense<0.000000e+00> : vector<12x128xf32>
    %311 = tpu.matmul %308, %310, %cst_137 {dimension_numbers = #tpu.dot_dimension_numbers<[1], [0], [0], [1], [0, 0, 1, 1], [], []>} : vector<12x128xbf16>, vector<128x128xbf16>, vector<12x128xf32> -> vector<12x128xf32>
    %c0_138 = arith.constant 0 : index
    %c0_139 = arith.constant 0 : index
    %312 = vector.load %arg33[%c0_138, %c0_139] : memref<12x128xf32, #tpu.memory_space<vmem>>, vector<12x128xf32>
    tpu.vector_store %arg33[%c0_138, %c0_139], %311 {strides = array<i32>} : memref<12x128xf32, #tpu.memory_space<vmem>>, vector<12x128xf32>,
    %c0_140 = arith.constant 0 : index
    %c0_141 = arith.constant 0 : index
    %313 = vector.load %arg5[%c0_140, %c0_141] : memref<16x128xbf16, #tpu.memory_space<vmem>>, vector<16x128xbf16>
    %c1_142 = arith.constant 1 : index
    %c0_143 = arith.constant 0 : index
    %c0_144 = arith.constant 0 : index
    %314 = vector.load %arg12[%c1_142, %c0_143, %c0_144] : memref<3x128x128xbf16, #tpu.memory_space<vmem>>, vector<1x128x128xbf16>
    %315 = vector.shape_cast %314 : vector<1x128x128xbf16> to vector<128x128xbf16>
    %cst_145 = arith.constant dense<0.000000e+00> : vector<16x128xf32>
    %316 = tpu.matmul %313, %315, %cst_145 {dimension_numbers = #tpu.dot_dimension_numbers<[1], [0], [0], [1], [0, 0, 1, 1], [], []>} : vector<16x128xbf16>, vector<128x128xbf16>, vector<16x128xf32> -> vector<16x128xf32>
    %c1_146 = arith.constant 1 : index
    %c0_147 = arith.constant 0 : index
    %c0_148 = arith.constant 0 : index
    %317 = vector.load %arg13[%c1_146, %c0_147, %c0_148] : memref<3x1x128xf32, #tpu.memory_space<vmem>>, vector<1x1x128xf32>
    %318 = vector.shape_cast %317 : vector<1x1x128xf32> to vector<1x128xf32>
    %319 = vector.broadcast %318 : vector<1x128xf32> to vector<16x128xf32>
    %320 = arith.addf %316, %319 : vector<16x128xf32>
    %c0_149 = arith.constant 0 : index
    %c0_150 = arith.constant 0 : index
    %321 = vector.load %arg34[%c0_149, %c0_150] : memref<16x128xf32, #tpu.memory_space<vmem>>, vector<16x128xf32>
    tpu.vector_store %arg34[%c0_149, %c0_150], %320 {strides = array<i32>} : memref<16x128xf32, #tpu.memory_space<vmem>>, vector<16x128xf32>,
    %c1_151 = arith.constant 1 : index
    %c0_152 = arith.constant 0 : index
    %c0_153 = arith.constant 0 : index
    %322 = vector.load %arg13[%c1_151, %c0_152, %c0_153] : memref<3x1x128xf32, #tpu.memory_space<vmem>>, vector<1x1x128xf32>
    %323 = vector.shape_cast %322 : vector<1x1x128xf32> to vector<1x128xf32>
    %324 = vector.broadcast %323 : vector<1x128xf32> to vector<12x128xf32>
    %325 = arith.addf %311, %324 : vector<12x128xf32>
    %cst_154 = arith.constant 0.000000e+00 : f32
    %326 = vector.broadcast %cst_154 : f32 to vector<12x128xf32>
    %327 = arith.maximumf %325, %326 : vector<12x128xf32>
    %c0_155 = arith.constant 0 : index
    %c0_156 = arith.constant 0 : index
    %328 = vector.load %arg35[%c0_155, %c0_156] : memref<12x128xf32, #tpu.memory_space<vmem>>, vector<12x128xf32>
    tpu.vector_store %arg35[%c0_155, %c0_156], %327 {strides = array<i32>} : memref<12x128xf32, #tpu.memory_space<vmem>>, vector<12x128xf32>,
    %c0_i32_157 = arith.constant 0 : i32
    %329 = arith.index_cast %c0_i32_157 : i32 to index
    %330 = memref.load %arg1[%329] : memref<16xi32, #tpu.memory_space<smem>>
    %331 = arith.index_cast %c0_i32_157 : i32 to index
    %332 = memref.load %arg2[%331] : memref<16xi32, #tpu.memory_space<smem>>
    %333 = arith.index_cast %330 : i32 to index
    %c0_158 = arith.constant 0 : index
    %334 = vector.load %arg33[%333, %c0_158] : memref<12x128xf32, #tpu.memory_space<vmem>>, vector<1x128xf32>
    %335 = arith.index_cast %c0_i32_157 : i32 to index
    %c0_159 = arith.constant 0 : index
    %336 = vector.load %arg34[%335, %c0_159] : memref<16x128xf32, #tpu.memory_space<vmem>>, vector<1x128xf32>
    %337 = arith.addf %334, %336 : vector<1x128xf32>
    %cst_160 = arith.constant 0.000000e+00 : f32
    %338 = vector.broadcast %cst_160 : f32 to vector<1x128xf32>
    %339 = arith.maximumf %337, %338 : vector<1x128xf32>
    %340 = arith.index_cast %332 : i32 to index
    %c0_161 = arith.constant 0 : index
    %341 = vector.load %arg35[%340, %c0_161] : memref<12x128xf32, #tpu.memory_space<vmem>>, vector<1x128xf32>
    %342 = arith.addf %341, %339 : vector<1x128xf32>
    %343 = arith.index_cast %332 : i32 to index
    %c0_162 = arith.constant 0 : index
    %344 = vector.load %arg35[%343, %c0_162] : memref<12x128xf32, #tpu.memory_space<vmem>>, vector<1x128xf32>
    tpu.vector_store %arg35[%343, %c0_162], %342 {strides = array<i32>} : memref<12x128xf32, #tpu.memory_space<vmem>>, vector<1x128xf32>,
    %c1_i32_163 = arith.constant 1 : i32
    %345 = arith.index_cast %c1_i32_163 : i32 to index
    %346 = memref.load %arg1[%345] : memref<16xi32, #tpu.memory_space<smem>>
    %347 = arith.index_cast %c1_i32_163 : i32 to index
    %348 = memref.load %arg2[%347] : memref<16xi32, #tpu.memory_space<smem>>
    %349 = arith.index_cast %346 : i32 to index
    %c0_164 = arith.constant 0 : index
    %350 = vector.load %arg33[%349, %c0_164] : memref<12x128xf32, #tpu.memory_space<vmem>>, vector<1x128xf32>
    %351 = arith.index_cast %c1_i32_163 : i32 to index
    %c0_165 = arith.constant 0 : index
    %352 = vector.load %arg34[%351, %c0_165] : memref<16x128xf32, #tpu.memory_space<vmem>>, vector<1x128xf32>
    %353 = arith.addf %350, %352 : vector<1x128xf32>
    %cst_166 = arith.constant 0.000000e+00 : f32
    %354 = vector.broadcast %cst_166 : f32 to vector<1x128xf32>
    %355 = arith.maximumf %353, %354 : vector<1x128xf32>
    %356 = arith.index_cast %348 : i32 to index
    %c0_167 = arith.constant 0 : index
    %357 = vector.load %arg35[%356, %c0_167] : memref<12x128xf32, #tpu.memory_space<vmem>>, vector<1x128xf32>
    %358 = arith.addf %357, %355 : vector<1x128xf32>
    %359 = arith.index_cast %348 : i32 to index
    %c0_168 = arith.constant 0 : index
    %360 = vector.load %arg35[%359, %c0_168] : memref<12x128xf32, #tpu.memory_space<vmem>>, vector<1x128xf32>
    tpu.vector_store %arg35[%359, %c0_168], %358 {strides = array<i32>} : memref<12x128xf32, #tpu.memory_space<vmem>>, vector<1x128xf32>,
    %c2_i32_169 = arith.constant 2 : i32
    %361 = arith.index_cast %c2_i32_169 : i32 to index
    %362 = memref.load %arg1[%361] : memref<16xi32, #tpu.memory_space<smem>>
    %363 = arith.index_cast %c2_i32_169 : i32 to index
    %364 = memref.load %arg2[%363] : memref<16xi32, #tpu.memory_space<smem>>
    %365 = arith.index_cast %362 : i32 to index
    %c0_170 = arith.constant 0 : index
    %366 = vector.load %arg33[%365, %c0_170] : memref<12x128xf32, #tpu.memory_space<vmem>>, vector<1x128xf32>
    %367 = arith.index_cast %c2_i32_169 : i32 to index
    %c0_171 = arith.constant 0 : index
    %368 = vector.load %arg34[%367, %c0_171] : memref<16x128xf32, #tpu.memory_space<vmem>>, vector<1x128xf32>
    %369 = arith.addf %366, %368 : vector<1x128xf32>
    %cst_172 = arith.constant 0.000000e+00 : f32
    %370 = vector.broadcast %cst_172 : f32 to vector<1x128xf32>
    %371 = arith.maximumf %369, %370 : vector<1x128xf32>
    %372 = arith.index_cast %364 : i32 to index
    %c0_173 = arith.constant 0 : index
    %373 = vector.load %arg35[%372, %c0_173] : memref<12x128xf32, #tpu.memory_space<vmem>>, vector<1x128xf32>
    %374 = arith.addf %373, %371 : vector<1x128xf32>
    %375 = arith.index_cast %364 : i32 to index
    %c0_174 = arith.constant 0 : index
    %376 = vector.load %arg35[%375, %c0_174] : memref<12x128xf32, #tpu.memory_space<vmem>>, vector<1x128xf32>
    tpu.vector_store %arg35[%375, %c0_174], %374 {strides = array<i32>} : memref<12x128xf32, #tpu.memory_space<vmem>>, vector<1x128xf32>,
    %c3_i32_175 = arith.constant 3 : i32
    %377 = arith.index_cast %c3_i32_175 : i32 to index
    %378 = memref.load %arg1[%377] : memref<16xi32, #tpu.memory_space<smem>>
    %379 = arith.index_cast %c3_i32_175 : i32 to index
    %380 = memref.load %arg2[%379] : memref<16xi32, #tpu.memory_space<smem>>
    %381 = arith.index_cast %378 : i32 to index
    %c0_176 = arith.constant 0 : index
    %382 = vector.load %arg33[%381, %c0_176] : memref<12x128xf32, #tpu.memory_space<vmem>>, vector<1x128xf32>
    %383 = arith.index_cast %c3_i32_175 : i32 to index
    %c0_177 = arith.constant 0 : index
    %384 = vector.load %arg34[%383, %c0_177] : memref<16x128xf32, #tpu.memory_space<vmem>>, vector<1x128xf32>
    %385 = arith.addf %382, %384 : vector<1x128xf32>
    %cst_178 = arith.constant 0.000000e+00 : f32
    %386 = vector.broadcast %cst_178 : f32 to vector<1x128xf32>
    %387 = arith.maximumf %385, %386 : vector<1x128xf32>
    %388 = arith.index_cast %380 : i32 to index
    %c0_179 = arith.constant 0 : index
    %389 = vector.load %arg35[%388, %c0_179] : memref<12x128xf32, #tpu.memory_space<vmem>>, vector<1x128xf32>
    %390 = arith.addf %389, %387 : vector<1x128xf32>
    %391 = arith.index_cast %380 : i32 to index
    %c0_180 = arith.constant 0 : index
    %392 = vector.load %arg35[%391, %c0_180] : memref<12x128xf32, #tpu.memory_space<vmem>>, vector<1x128xf32>
    tpu.vector_store %arg35[%391, %c0_180], %390 {strides = array<i32>} : memref<12x128xf32, #tpu.memory_space<vmem>>, vector<1x128xf32>,
    %c4_i32_181 = arith.constant 4 : i32
    %393 = arith.index_cast %c4_i32_181 : i32 to index
    %394 = memref.load %arg1[%393] : memref<16xi32, #tpu.memory_space<smem>>
    %395 = arith.index_cast %c4_i32_181 : i32 to index
    %396 = memref.load %arg2[%395] : memref<16xi32, #tpu.memory_space<smem>>
    %397 = arith.index_cast %394 : i32 to index
    %c0_182 = arith.constant 0 : index
    %398 = vector.load %arg33[%397, %c0_182] : memref<12x128xf32, #tpu.memory_space<vmem>>, vector<1x128xf32>
    %399 = arith.index_cast %c4_i32_181 : i32 to index
    %c0_183 = arith.constant 0 : index
    %400 = vector.load %arg34[%399, %c0_183] : memref<16x128xf32, #tpu.memory_space<vmem>>, vector<1x128xf32>
    %401 = arith.addf %398, %400 : vector<1x128xf32>
    %cst_184 = arith.constant 0.000000e+00 : f32
    %402 = vector.broadcast %cst_184 : f32 to vector<1x128xf32>
    %403 = arith.maximumf %401, %402 : vector<1x128xf32>
    %404 = arith.index_cast %396 : i32 to index
    %c0_185 = arith.constant 0 : index
    %405 = vector.load %arg35[%404, %c0_185] : memref<12x128xf32, #tpu.memory_space<vmem>>, vector<1x128xf32>
    %406 = arith.addf %405, %403 : vector<1x128xf32>
    %407 = arith.index_cast %396 : i32 to index
    %c0_186 = arith.constant 0 : index
    %408 = vector.load %arg35[%407, %c0_186] : memref<12x128xf32, #tpu.memory_space<vmem>>, vector<1x128xf32>
    tpu.vector_store %arg35[%407, %c0_186], %406 {strides = array<i32>} : memref<12x128xf32, #tpu.memory_space<vmem>>, vector<1x128xf32>,
    %c5_i32_187 = arith.constant 5 : i32
    %409 = arith.index_cast %c5_i32_187 : i32 to index
    %410 = memref.load %arg1[%409] : memref<16xi32, #tpu.memory_space<smem>>
    %411 = arith.index_cast %c5_i32_187 : i32 to index
    %412 = memref.load %arg2[%411] : memref<16xi32, #tpu.memory_space<smem>>
    %413 = arith.index_cast %410 : i32 to index
    %c0_188 = arith.constant 0 : index
    %414 = vector.load %arg33[%413, %c0_188] : memref<12x128xf32, #tpu.memory_space<vmem>>, vector<1x128xf32>
    %415 = arith.index_cast %c5_i32_187 : i32 to index
    %c0_189 = arith.constant 0 : index
    %416 = vector.load %arg34[%415, %c0_189] : memref<16x128xf32, #tpu.memory_space<vmem>>, vector<1x128xf32>
    %417 = arith.addf %414, %416 : vector<1x128xf32>
    %cst_190 = arith.constant 0.000000e+00 : f32
    %418 = vector.broadcast %cst_190 : f32 to vector<1x128xf32>
    %419 = arith.maximumf %417, %418 : vector<1x128xf32>
    %420 = arith.index_cast %412 : i32 to index
    %c0_191 = arith.constant 0 : index
    %421 = vector.load %arg35[%420, %c0_191] : memref<12x128xf32, #tpu.memory_space<vmem>>, vector<1x128xf32>
    %422 = arith.addf %421, %419 : vector<1x128xf32>
    %423 = arith.index_cast %412 : i32 to index
    %c0_192 = arith.constant 0 : index
    %424 = vector.load %arg35[%423, %c0_192] : memref<12x128xf32, #tpu.memory_space<vmem>>, vector<1x128xf32>
    tpu.vector_store %arg35[%423, %c0_192], %422 {strides = array<i32>} : memref<12x128xf32, #tpu.memory_space<vmem>>, vector<1x128xf32>,
    %c6_i32_193 = arith.constant 6 : i32
    %425 = arith.index_cast %c6_i32_193 : i32 to index
    %426 = memref.load %arg1[%425] : memref<16xi32, #tpu.memory_space<smem>>
    %427 = arith.index_cast %c6_i32_193 : i32 to index
    %428 = memref.load %arg2[%427] : memref<16xi32, #tpu.memory_space<smem>>
    %429 = arith.index_cast %426 : i32 to index
    %c0_194 = arith.constant 0 : index
    %430 = vector.load %arg33[%429, %c0_194] : memref<12x128xf32, #tpu.memory_space<vmem>>, vector<1x128xf32>
    %431 = arith.index_cast %c6_i32_193 : i32 to index
    %c0_195 = arith.constant 0 : index
    %432 = vector.load %arg34[%431, %c0_195] : memref<16x128xf32, #tpu.memory_space<vmem>>, vector<1x128xf32>
    %433 = arith.addf %430, %432 : vector<1x128xf32>
    %cst_196 = arith.constant 0.000000e+00 : f32
    %434 = vector.broadcast %cst_196 : f32 to vector<1x128xf32>
    %435 = arith.maximumf %433, %434 : vector<1x128xf32>
    %436 = arith.index_cast %428 : i32 to index
    %c0_197 = arith.constant 0 : index
    %437 = vector.load %arg35[%436, %c0_197] : memref<12x128xf32, #tpu.memory_space<vmem>>, vector<1x128xf32>
    %438 = arith.addf %437, %435 : vector<1x128xf32>
    %439 = arith.index_cast %428 : i32 to index
    %c0_198 = arith.constant 0 : index
    %440 = vector.load %arg35[%439, %c0_198] : memref<12x128xf32, #tpu.memory_space<vmem>>, vector<1x128xf32>
    tpu.vector_store %arg35[%439, %c0_198], %438 {strides = array<i32>} : memref<12x128xf32, #tpu.memory_space<vmem>>, vector<1x128xf32>,
    %c7_i32_199 = arith.constant 7 : i32
    %441 = arith.index_cast %c7_i32_199 : i32 to index
    %442 = memref.load %arg1[%441] : memref<16xi32, #tpu.memory_space<smem>>
    %443 = arith.index_cast %c7_i32_199 : i32 to index
    %444 = memref.load %arg2[%443] : memref<16xi32, #tpu.memory_space<smem>>
    %445 = arith.index_cast %442 : i32 to index
    %c0_200 = arith.constant 0 : index
    %446 = vector.load %arg33[%445, %c0_200] : memref<12x128xf32, #tpu.memory_space<vmem>>, vector<1x128xf32>
    %447 = arith.index_cast %c7_i32_199 : i32 to index
    %c0_201 = arith.constant 0 : index
    %448 = vector.load %arg34[%447, %c0_201] : memref<16x128xf32, #tpu.memory_space<vmem>>, vector<1x128xf32>
    %449 = arith.addf %446, %448 : vector<1x128xf32>
    %cst_202 = arith.constant 0.000000e+00 : f32
    %450 = vector.broadcast %cst_202 : f32 to vector<1x128xf32>
    %451 = arith.maximumf %449, %450 : vector<1x128xf32>
    %452 = arith.index_cast %444 : i32 to index
    %c0_203 = arith.constant 0 : index
    %453 = vector.load %arg35[%452, %c0_203] : memref<12x128xf32, #tpu.memory_space<vmem>>, vector<1x128xf32>
    %454 = arith.addf %453, %451 : vector<1x128xf32>
    %455 = arith.index_cast %444 : i32 to index
    %c0_204 = arith.constant 0 : index
    %456 = vector.load %arg35[%455, %c0_204] : memref<12x128xf32, #tpu.memory_space<vmem>>, vector<1x128xf32>
    tpu.vector_store %arg35[%455, %c0_204], %454 {strides = array<i32>} : memref<12x128xf32, #tpu.memory_space<vmem>>, vector<1x128xf32>,
    %c8_i32_205 = arith.constant 8 : i32
    %457 = arith.index_cast %c8_i32_205 : i32 to index
    %458 = memref.load %arg1[%457] : memref<16xi32, #tpu.memory_space<smem>>
    %459 = arith.index_cast %c8_i32_205 : i32 to index
    %460 = memref.load %arg2[%459] : memref<16xi32, #tpu.memory_space<smem>>
    %461 = arith.index_cast %458 : i32 to index
    %c0_206 = arith.constant 0 : index
    %462 = vector.load %arg33[%461, %c0_206] : memref<12x128xf32, #tpu.memory_space<vmem>>, vector<1x128xf32>
    %463 = arith.index_cast %c8_i32_205 : i32 to index
    %c0_207 = arith.constant 0 : index
    %464 = vector.load %arg34[%463, %c0_207] : memref<16x128xf32, #tpu.memory_space<vmem>>, vector<1x128xf32>
    %465 = arith.addf %462, %464 : vector<1x128xf32>
    %cst_208 = arith.constant 0.000000e+00 : f32
    %466 = vector.broadcast %cst_208 : f32 to vector<1x128xf32>
    %467 = arith.maximumf %465, %466 : vector<1x128xf32>
    %468 = arith.index_cast %460 : i32 to index
    %c0_209 = arith.constant 0 : index
    %469 = vector.load %arg35[%468, %c0_209] : memref<12x128xf32, #tpu.memory_space<vmem>>, vector<1x128xf32>
    %470 = arith.addf %469, %467 : vector<1x128xf32>
    %471 = arith.index_cast %460 : i32 to index
    %c0_210 = arith.constant 0 : index
    %472 = vector.load %arg35[%471, %c0_210] : memref<12x128xf32, #tpu.memory_space<vmem>>, vector<1x128xf32>
    tpu.vector_store %arg35[%471, %c0_210], %470 {strides = array<i32>} : memref<12x128xf32, #tpu.memory_space<vmem>>, vector<1x128xf32>,
    %c9_i32_211 = arith.constant 9 : i32
    %473 = arith.index_cast %c9_i32_211 : i32 to index
    %474 = memref.load %arg1[%473] : memref<16xi32, #tpu.memory_space<smem>>
    %475 = arith.index_cast %c9_i32_211 : i32 to index
    %476 = memref.load %arg2[%475] : memref<16xi32, #tpu.memory_space<smem>>
    %477 = arith.index_cast %474 : i32 to index
    %c0_212 = arith.constant 0 : index
    %478 = vector.load %arg33[%477, %c0_212] : memref<12x128xf32, #tpu.memory_space<vmem>>, vector<1x128xf32>
    %479 = arith.index_cast %c9_i32_211 : i32 to index
    %c0_213 = arith.constant 0 : index
    %480 = vector.load %arg34[%479, %c0_213] : memref<16x128xf32, #tpu.memory_space<vmem>>, vector<1x128xf32>
    %481 = arith.addf %478, %480 : vector<1x128xf32>
    %cst_214 = arith.constant 0.000000e+00 : f32
    %482 = vector.broadcast %cst_214 : f32 to vector<1x128xf32>
    %483 = arith.maximumf %481, %482 : vector<1x128xf32>
    %484 = arith.index_cast %476 : i32 to index
    %c0_215 = arith.constant 0 : index
    %485 = vector.load %arg35[%484, %c0_215] : memref<12x128xf32, #tpu.memory_space<vmem>>, vector<1x128xf32>
    %486 = arith.addf %485, %483 : vector<1x128xf32>
    %487 = arith.index_cast %476 : i32 to index
    %c0_216 = arith.constant 0 : index
    %488 = vector.load %arg35[%487, %c0_216] : memref<12x128xf32, #tpu.memory_space<vmem>>, vector<1x128xf32>
    tpu.vector_store %arg35[%487, %c0_216], %486 {strides = array<i32>} : memref<12x128xf32, #tpu.memory_space<vmem>>, vector<1x128xf32>,
    %c10_i32_217 = arith.constant 10 : i32
    %489 = arith.index_cast %c10_i32_217 : i32 to index
    %490 = memref.load %arg1[%489] : memref<16xi32, #tpu.memory_space<smem>>
    %491 = arith.index_cast %c10_i32_217 : i32 to index
    %492 = memref.load %arg2[%491] : memref<16xi32, #tpu.memory_space<smem>>
    %493 = arith.index_cast %490 : i32 to index
    %c0_218 = arith.constant 0 : index
    %494 = vector.load %arg33[%493, %c0_218] : memref<12x128xf32, #tpu.memory_space<vmem>>, vector<1x128xf32>
    %495 = arith.index_cast %c10_i32_217 : i32 to index
    %c0_219 = arith.constant 0 : index
    %496 = vector.load %arg34[%495, %c0_219] : memref<16x128xf32, #tpu.memory_space<vmem>>, vector<1x128xf32>
    %497 = arith.addf %494, %496 : vector<1x128xf32>
    %cst_220 = arith.constant 0.000000e+00 : f32
    %498 = vector.broadcast %cst_220 : f32 to vector<1x128xf32>
    %499 = arith.maximumf %497, %498 : vector<1x128xf32>
    %500 = arith.index_cast %492 : i32 to index
    %c0_221 = arith.constant 0 : index
    %501 = vector.load %arg35[%500, %c0_221] : memref<12x128xf32, #tpu.memory_space<vmem>>, vector<1x128xf32>
    %502 = arith.addf %501, %499 : vector<1x128xf32>
    %503 = arith.index_cast %492 : i32 to index
    %c0_222 = arith.constant 0 : index
    %504 = vector.load %arg35[%503, %c0_222] : memref<12x128xf32, #tpu.memory_space<vmem>>, vector<1x128xf32>
    tpu.vector_store %arg35[%503, %c0_222], %502 {strides = array<i32>} : memref<12x128xf32, #tpu.memory_space<vmem>>, vector<1x128xf32>,
    %c11_i32_223 = arith.constant 11 : i32
    %505 = arith.index_cast %c11_i32_223 : i32 to index
    %506 = memref.load %arg1[%505] : memref<16xi32, #tpu.memory_space<smem>>
    %507 = arith.index_cast %c11_i32_223 : i32 to index
    %508 = memref.load %arg2[%507] : memref<16xi32, #tpu.memory_space<smem>>
    %509 = arith.index_cast %506 : i32 to index
    %c0_224 = arith.constant 0 : index
    %510 = vector.load %arg33[%509, %c0_224] : memref<12x128xf32, #tpu.memory_space<vmem>>, vector<1x128xf32>
    %511 = arith.index_cast %c11_i32_223 : i32 to index
    %c0_225 = arith.constant 0 : index
    %512 = vector.load %arg34[%511, %c0_225] : memref<16x128xf32, #tpu.memory_space<vmem>>, vector<1x128xf32>
    %513 = arith.addf %510, %512 : vector<1x128xf32>
    %cst_226 = arith.constant 0.000000e+00 : f32
    %514 = vector.broadcast %cst_226 : f32 to vector<1x128xf32>
    %515 = arith.maximumf %513, %514 : vector<1x128xf32>
    %516 = arith.index_cast %508 : i32 to index
    %c0_227 = arith.constant 0 : index
    %517 = vector.load %arg35[%516, %c0_227] : memref<12x128xf32, #tpu.memory_space<vmem>>, vector<1x128xf32>
    %518 = arith.addf %517, %515 : vector<1x128xf32>
    %519 = arith.index_cast %508 : i32 to index
    %c0_228 = arith.constant 0 : index
    %520 = vector.load %arg35[%519, %c0_228] : memref<12x128xf32, #tpu.memory_space<vmem>>, vector<1x128xf32>
    tpu.vector_store %arg35[%519, %c0_228], %518 {strides = array<i32>} : memref<12x128xf32, #tpu.memory_space<vmem>>, vector<1x128xf32>,
    %c12_i32_229 = arith.constant 12 : i32
    %521 = arith.index_cast %c12_i32_229 : i32 to index
    %522 = memref.load %arg1[%521] : memref<16xi32, #tpu.memory_space<smem>>
    %523 = arith.index_cast %c12_i32_229 : i32 to index
    %524 = memref.load %arg2[%523] : memref<16xi32, #tpu.memory_space<smem>>
    %525 = arith.index_cast %522 : i32 to index
    %c0_230 = arith.constant 0 : index
    %526 = vector.load %arg33[%525, %c0_230] : memref<12x128xf32, #tpu.memory_space<vmem>>, vector<1x128xf32>
    %527 = arith.index_cast %c12_i32_229 : i32 to index
    %c0_231 = arith.constant 0 : index
    %528 = vector.load %arg34[%527, %c0_231] : memref<16x128xf32, #tpu.memory_space<vmem>>, vector<1x128xf32>
    %529 = arith.addf %526, %528 : vector<1x128xf32>
    %cst_232 = arith.constant 0.000000e+00 : f32
    %530 = vector.broadcast %cst_232 : f32 to vector<1x128xf32>
    %531 = arith.maximumf %529, %530 : vector<1x128xf32>
    %532 = arith.index_cast %524 : i32 to index
    %c0_233 = arith.constant 0 : index
    %533 = vector.load %arg35[%532, %c0_233] : memref<12x128xf32, #tpu.memory_space<vmem>>, vector<1x128xf32>
    %534 = arith.addf %533, %531 : vector<1x128xf32>
    %535 = arith.index_cast %524 : i32 to index
    %c0_234 = arith.constant 0 : index
    %536 = vector.load %arg35[%535, %c0_234] : memref<12x128xf32, #tpu.memory_space<vmem>>, vector<1x128xf32>
    tpu.vector_store %arg35[%535, %c0_234], %534 {strides = array<i32>} : memref<12x128xf32, #tpu.memory_space<vmem>>, vector<1x128xf32>,
    %c13_i32_235 = arith.constant 13 : i32
    %537 = arith.index_cast %c13_i32_235 : i32 to index
    %538 = memref.load %arg1[%537] : memref<16xi32, #tpu.memory_space<smem>>
    %539 = arith.index_cast %c13_i32_235 : i32 to index
    %540 = memref.load %arg2[%539] : memref<16xi32, #tpu.memory_space<smem>>
    %541 = arith.index_cast %538 : i32 to index
    %c0_236 = arith.constant 0 : index
    %542 = vector.load %arg33[%541, %c0_236] : memref<12x128xf32, #tpu.memory_space<vmem>>, vector<1x128xf32>
    %543 = arith.index_cast %c13_i32_235 : i32 to index
    %c0_237 = arith.constant 0 : index
    %544 = vector.load %arg34[%543, %c0_237] : memref<16x128xf32, #tpu.memory_space<vmem>>, vector<1x128xf32>
    %545 = arith.addf %542, %544 : vector<1x128xf32>
    %cst_238 = arith.constant 0.000000e+00 : f32
    %546 = vector.broadcast %cst_238 : f32 to vector<1x128xf32>
    %547 = arith.maximumf %545, %546 : vector<1x128xf32>
    %548 = arith.index_cast %540 : i32 to index
    %c0_239 = arith.constant 0 : index
    %549 = vector.load %arg35[%548, %c0_239] : memref<12x128xf32, #tpu.memory_space<vmem>>, vector<1x128xf32>
    %550 = arith.addf %549, %547 : vector<1x128xf32>
    %551 = arith.index_cast %540 : i32 to index
    %c0_240 = arith.constant 0 : index
    %552 = vector.load %arg35[%551, %c0_240] : memref<12x128xf32, #tpu.memory_space<vmem>>, vector<1x128xf32>
    tpu.vector_store %arg35[%551, %c0_240], %550 {strides = array<i32>} : memref<12x128xf32, #tpu.memory_space<vmem>>, vector<1x128xf32>,
    %c14_i32_241 = arith.constant 14 : i32
    %553 = arith.index_cast %c14_i32_241 : i32 to index
    %554 = memref.load %arg1[%553] : memref<16xi32, #tpu.memory_space<smem>>
    %555 = arith.index_cast %c14_i32_241 : i32 to index
    %556 = memref.load %arg2[%555] : memref<16xi32, #tpu.memory_space<smem>>
    %557 = arith.index_cast %554 : i32 to index
    %c0_242 = arith.constant 0 : index
    %558 = vector.load %arg33[%557, %c0_242] : memref<12x128xf32, #tpu.memory_space<vmem>>, vector<1x128xf32>
    %559 = arith.index_cast %c14_i32_241 : i32 to index
    %c0_243 = arith.constant 0 : index
    %560 = vector.load %arg34[%559, %c0_243] : memref<16x128xf32, #tpu.memory_space<vmem>>, vector<1x128xf32>
    %561 = arith.addf %558, %560 : vector<1x128xf32>
    %cst_244 = arith.constant 0.000000e+00 : f32
    %562 = vector.broadcast %cst_244 : f32 to vector<1x128xf32>
    %563 = arith.maximumf %561, %562 : vector<1x128xf32>
    %564 = arith.index_cast %556 : i32 to index
    %c0_245 = arith.constant 0 : index
    %565 = vector.load %arg35[%564, %c0_245] : memref<12x128xf32, #tpu.memory_space<vmem>>, vector<1x128xf32>
    %566 = arith.addf %565, %563 : vector<1x128xf32>
    %567 = arith.index_cast %556 : i32 to index
    %c0_246 = arith.constant 0 : index
    %568 = vector.load %arg35[%567, %c0_246] : memref<12x128xf32, #tpu.memory_space<vmem>>, vector<1x128xf32>
    tpu.vector_store %arg35[%567, %c0_246], %566 {strides = array<i32>} : memref<12x128xf32, #tpu.memory_space<vmem>>, vector<1x128xf32>,
    %c15_i32_247 = arith.constant 15 : i32
    %569 = arith.index_cast %c15_i32_247 : i32 to index
    %570 = memref.load %arg1[%569] : memref<16xi32, #tpu.memory_space<smem>>
    %571 = arith.index_cast %c15_i32_247 : i32 to index
    %572 = memref.load %arg2[%571] : memref<16xi32, #tpu.memory_space<smem>>
    %573 = arith.index_cast %570 : i32 to index
    %c0_248 = arith.constant 0 : index
    %574 = vector.load %arg33[%573, %c0_248] : memref<12x128xf32, #tpu.memory_space<vmem>>, vector<1x128xf32>
    %575 = arith.index_cast %c15_i32_247 : i32 to index
    %c0_249 = arith.constant 0 : index
    %576 = vector.load %arg34[%575, %c0_249] : memref<16x128xf32, #tpu.memory_space<vmem>>, vector<1x128xf32>
    %577 = arith.addf %574, %576 : vector<1x128xf32>
    %cst_250 = arith.constant 0.000000e+00 : f32
    %578 = vector.broadcast %cst_250 : f32 to vector<1x128xf32>
    %579 = arith.maximumf %577, %578 : vector<1x128xf32>
    %580 = arith.index_cast %572 : i32 to index
    %c0_251 = arith.constant 0 : index
    %581 = vector.load %arg35[%580, %c0_251] : memref<12x128xf32, #tpu.memory_space<vmem>>, vector<1x128xf32>
    %582 = arith.addf %581, %579 : vector<1x128xf32>
    %583 = arith.index_cast %572 : i32 to index
    %c0_252 = arith.constant 0 : index
    %584 = vector.load %arg35[%583, %c0_252] : memref<12x128xf32, #tpu.memory_space<vmem>>, vector<1x128xf32>
    tpu.vector_store %arg35[%583, %c0_252], %582 {strides = array<i32>} : memref<12x128xf32, #tpu.memory_space<vmem>>, vector<1x128xf32>,
    %c16_i32_253 = arith.constant 16 : i32
    %c0_254 = arith.constant 0 : index
    %c0_255 = arith.constant 0 : index
    %585 = vector.load %arg35[%c0_254, %c0_255] : memref<12x128xf32, #tpu.memory_space<vmem>>, vector<12x128xf32>
    %c1_256 = arith.constant 1 : index
    %c0_257 = arith.constant 0 : index
    %c0_258 = arith.constant 0 : index
    %586 = vector.load %arg14[%c1_256, %c0_257, %c0_258] : memref<3x1x128xf32, #tpu.memory_space<vmem>>, vector<1x1x128xf32>
    %587 = vector.shape_cast %586 : vector<1x1x128xf32> to vector<1x128xf32>
    %588 = vector.broadcast %587 : vector<1x128xf32> to vector<12x128xf32>
    %589 = arith.mulf %585, %588 : vector<12x128xf32>
    %c1_259 = arith.constant 1 : index
    %c0_260 = arith.constant 0 : index
    %c0_261 = arith.constant 0 : index
    %590 = vector.load %arg15[%c1_259, %c0_260, %c0_261] : memref<3x1x128xf32, #tpu.memory_space<vmem>>, vector<1x1x128xf32>
    %591 = vector.shape_cast %590 : vector<1x1x128xf32> to vector<1x128xf32>
    %592 = vector.broadcast %591 : vector<1x128xf32> to vector<12x128xf32>
    %593 = arith.addf %589, %592 : vector<12x128xf32>
    %c0_262 = arith.constant 0 : index
    %c0_263 = arith.constant 0 : index
    %594 = vector.load %arg31[%c0_262, %c0_263] : memref<12x128xf32, #tpu.memory_space<vmem>>, vector<12x128xf32>
    tpu.vector_store %arg31[%c0_262, %c0_263], %593 {strides = array<i32>} : memref<12x128xf32, #tpu.memory_space<vmem>>, vector<12x128xf32>,
    %c0_264 = arith.constant 0 : index
    %c0_265 = arith.constant 0 : index
    %595 = vector.load %arg32[%c0_264, %c0_265] : memref<12x128xf32, #tpu.memory_space<vmem>>, vector<12x128xf32>
    %596 = arith.addf %595, %593 : vector<12x128xf32>
    %c0_266 = arith.constant 0 : index
    %c0_267 = arith.constant 0 : index
    %597 = vector.load %arg32[%c0_266, %c0_267] : memref<12x128xf32, #tpu.memory_space<vmem>>, vector<12x128xf32>
    tpu.vector_store %arg32[%c0_266, %c0_267], %596 {strides = array<i32>} : memref<12x128xf32, #tpu.memory_space<vmem>>, vector<12x128xf32>,
    %c0_268 = arith.constant 0 : index
    %c0_269 = arith.constant 0 : index
    %598 = vector.load %arg31[%c0_268, %c0_269] : memref<12x128xf32, #tpu.memory_space<vmem>>, vector<12x128xf32>
    %599 = arith.truncf %598 : vector<12x128xf32> to vector<12x128xbf16>
    %c2 = arith.constant 2 : index
    %c0_270 = arith.constant 0 : index
    %c0_271 = arith.constant 0 : index
    %600 = vector.load %arg11[%c2, %c0_270, %c0_271] : memref<3x128x128xbf16, #tpu.memory_space<vmem>>, vector<1x128x128xbf16>
    %601 = vector.shape_cast %600 : vector<1x128x128xbf16> to vector<128x128xbf16>
    %cst_272 = arith.constant dense<0.000000e+00> : vector<12x128xf32>
    %602 = tpu.matmul %599, %601, %cst_272 {dimension_numbers = #tpu.dot_dimension_numbers<[1], [0], [0], [1], [0, 0, 1, 1], [], []>} : vector<12x128xbf16>, vector<128x128xbf16>, vector<12x128xf32> -> vector<12x128xf32>
    %c0_273 = arith.constant 0 : index
    %c0_274 = arith.constant 0 : index
    %603 = vector.load %arg33[%c0_273, %c0_274] : memref<12x128xf32, #tpu.memory_space<vmem>>, vector<12x128xf32>
    tpu.vector_store %arg33[%c0_273, %c0_274], %602 {strides = array<i32>} : memref<12x128xf32, #tpu.memory_space<vmem>>, vector<12x128xf32>,
    %c0_275 = arith.constant 0 : index
    %c0_276 = arith.constant 0 : index
    %604 = vector.load %arg5[%c0_275, %c0_276] : memref<16x128xbf16, #tpu.memory_space<vmem>>, vector<16x128xbf16>
    %c2_277 = arith.constant 2 : index
    %c0_278 = arith.constant 0 : index
    %c0_279 = arith.constant 0 : index
    %605 = vector.load %arg12[%c2_277, %c0_278, %c0_279] : memref<3x128x128xbf16, #tpu.memory_space<vmem>>, vector<1x128x128xbf16>
    %606 = vector.shape_cast %605 : vector<1x128x128xbf16> to vector<128x128xbf16>
    %cst_280 = arith.constant dense<0.000000e+00> : vector<16x128xf32>
    %607 = tpu.matmul %604, %606, %cst_280 {dimension_numbers = #tpu.dot_dimension_numbers<[1], [0], [0], [1], [0, 0, 1, 1], [], []>} : vector<16x128xbf16>, vector<128x128xbf16>, vector<16x128xf32> -> vector<16x128xf32>
    %c2_281 = arith.constant 2 : index
    %c0_282 = arith.constant 0 : index
    %c0_283 = arith.constant 0 : index
    %608 = vector.load %arg13[%c2_281, %c0_282, %c0_283] : memref<3x1x128xf32, #tpu.memory_space<vmem>>, vector<1x1x128xf32>
    %609 = vector.shape_cast %608 : vector<1x1x128xf32> to vector<1x128xf32>
    %610 = vector.broadcast %609 : vector<1x128xf32> to vector<16x128xf32>
    %611 = arith.addf %607, %610 : vector<16x128xf32>
    %c0_284 = arith.constant 0 : index
    %c0_285 = arith.constant 0 : index
    %612 = vector.load %arg34[%c0_284, %c0_285] : memref<16x128xf32, #tpu.memory_space<vmem>>, vector<16x128xf32>
    tpu.vector_store %arg34[%c0_284, %c0_285], %611 {strides = array<i32>} : memref<16x128xf32, #tpu.memory_space<vmem>>, vector<16x128xf32>,
    %c2_286 = arith.constant 2 : index
    %c0_287 = arith.constant 0 : index
    %c0_288 = arith.constant 0 : index
    %613 = vector.load %arg13[%c2_286, %c0_287, %c0_288] : memref<3x1x128xf32, #tpu.memory_space<vmem>>, vector<1x1x128xf32>
    %614 = vector.shape_cast %613 : vector<1x1x128xf32> to vector<1x128xf32>
    %615 = vector.broadcast %614 : vector<1x128xf32> to vector<12x128xf32>
    %616 = arith.addf %602, %615 : vector<12x128xf32>
    %cst_289 = arith.constant 0.000000e+00 : f32
    %617 = vector.broadcast %cst_289 : f32 to vector<12x128xf32>
    %618 = arith.maximumf %616, %617 : vector<12x128xf32>
    %c0_290 = arith.constant 0 : index
    %c0_291 = arith.constant 0 : index
    %619 = vector.load %arg35[%c0_290, %c0_291] : memref<12x128xf32, #tpu.memory_space<vmem>>, vector<12x128xf32>
    tpu.vector_store %arg35[%c0_290, %c0_291], %618 {strides = array<i32>} : memref<12x128xf32, #tpu.memory_space<vmem>>, vector<12x128xf32>,
    %c0_i32_292 = arith.constant 0 : i32
    %620 = arith.index_cast %c0_i32_292 : i32 to index
    %621 = memref.load %arg1[%620] : memref<16xi32, #tpu.memory_space<smem>>
    %622 = arith.index_cast %c0_i32_292 : i32 to index
    %623 = memref.load %arg2[%622] : memref<16xi32, #tpu.memory_space<smem>>
    %624 = arith.index_cast %621 : i32 to index
    %c0_293 = arith.constant 0 : index
    %625 = vector.load %arg33[%624, %c0_293] : memref<12x128xf32, #tpu.memory_space<vmem>>, vector<1x128xf32>
    %626 = arith.index_cast %c0_i32_292 : i32 to index
    %c0_294 = arith.constant 0 : index
    %627 = vector.load %arg34[%626, %c0_294] : memref<16x128xf32, #tpu.memory_space<vmem>>, vector<1x128xf32>
    %628 = arith.addf %625, %627 : vector<1x128xf32>
    %cst_295 = arith.constant 0.000000e+00 : f32
    %629 = vector.broadcast %cst_295 : f32 to vector<1x128xf32>
    %630 = arith.maximumf %628, %629 : vector<1x128xf32>
    %631 = arith.index_cast %623 : i32 to index
    %c0_296 = arith.constant 0 : index
    %632 = vector.load %arg35[%631, %c0_296] : memref<12x128xf32, #tpu.memory_space<vmem>>, vector<1x128xf32>
    %633 = arith.addf %632, %630 : vector<1x128xf32>
    %634 = arith.index_cast %623 : i32 to index
    %c0_297 = arith.constant 0 : index
    %635 = vector.load %arg35[%634, %c0_297] : memref<12x128xf32, #tpu.memory_space<vmem>>, vector<1x128xf32>
    tpu.vector_store %arg35[%634, %c0_297], %633 {strides = array<i32>} : memref<12x128xf32, #tpu.memory_space<vmem>>, vector<1x128xf32>,
    %c1_i32_298 = arith.constant 1 : i32
    %636 = arith.index_cast %c1_i32_298 : i32 to index
    %637 = memref.load %arg1[%636] : memref<16xi32, #tpu.memory_space<smem>>
    %638 = arith.index_cast %c1_i32_298 : i32 to index
    %639 = memref.load %arg2[%638] : memref<16xi32, #tpu.memory_space<smem>>
    %640 = arith.index_cast %637 : i32 to index
    %c0_299 = arith.constant 0 : index
    %641 = vector.load %arg33[%640, %c0_299] : memref<12x128xf32, #tpu.memory_space<vmem>>, vector<1x128xf32>
    %642 = arith.index_cast %c1_i32_298 : i32 to index
    %c0_300 = arith.constant 0 : index
    %643 = vector.load %arg34[%642, %c0_300] : memref<16x128xf32, #tpu.memory_space<vmem>>, vector<1x128xf32>
    %644 = arith.addf %641, %643 : vector<1x128xf32>
    %cst_301 = arith.constant 0.000000e+00 : f32
    %645 = vector.broadcast %cst_301 : f32 to vector<1x128xf32>
    %646 = arith.maximumf %644, %645 : vector<1x128xf32>
    %647 = arith.index_cast %639 : i32 to index
    %c0_302 = arith.constant 0 : index
    %648 = vector.load %arg35[%647, %c0_302] : memref<12x128xf32, #tpu.memory_space<vmem>>, vector<1x128xf32>
    %649 = arith.addf %648, %646 : vector<1x128xf32>
    %650 = arith.index_cast %639 : i32 to index
    %c0_303 = arith.constant 0 : index
    %651 = vector.load %arg35[%650, %c0_303] : memref<12x128xf32, #tpu.memory_space<vmem>>, vector<1x128xf32>
    tpu.vector_store %arg35[%650, %c0_303], %649 {strides = array<i32>} : memref<12x128xf32, #tpu.memory_space<vmem>>, vector<1x128xf32>,
    %c2_i32_304 = arith.constant 2 : i32
    %652 = arith.index_cast %c2_i32_304 : i32 to index
    %653 = memref.load %arg1[%652] : memref<16xi32, #tpu.memory_space<smem>>
    %654 = arith.index_cast %c2_i32_304 : i32 to index
    %655 = memref.load %arg2[%654] : memref<16xi32, #tpu.memory_space<smem>>
    %656 = arith.index_cast %653 : i32 to index
    %c0_305 = arith.constant 0 : index
    %657 = vector.load %arg33[%656, %c0_305] : memref<12x128xf32, #tpu.memory_space<vmem>>, vector<1x128xf32>
    %658 = arith.index_cast %c2_i32_304 : i32 to index
    %c0_306 = arith.constant 0 : index
    %659 = vector.load %arg34[%658, %c0_306] : memref<16x128xf32, #tpu.memory_space<vmem>>, vector<1x128xf32>
    %660 = arith.addf %657, %659 : vector<1x128xf32>
    %cst_307 = arith.constant 0.000000e+00 : f32
    %661 = vector.broadcast %cst_307 : f32 to vector<1x128xf32>
    %662 = arith.maximumf %660, %661 : vector<1x128xf32>
    %663 = arith.index_cast %655 : i32 to index
    %c0_308 = arith.constant 0 : index
    %664 = vector.load %arg35[%663, %c0_308] : memref<12x128xf32, #tpu.memory_space<vmem>>, vector<1x128xf32>
    %665 = arith.addf %664, %662 : vector<1x128xf32>
    %666 = arith.index_cast %655 : i32 to index
    %c0_309 = arith.constant 0 : index
    %667 = vector.load %arg35[%666, %c0_309] : memref<12x128xf32, #tpu.memory_space<vmem>>, vector<1x128xf32>
    tpu.vector_store %arg35[%666, %c0_309], %665 {strides = array<i32>} : memref<12x128xf32, #tpu.memory_space<vmem>>, vector<1x128xf32>,
    %c3_i32_310 = arith.constant 3 : i32
    %668 = arith.index_cast %c3_i32_310 : i32 to index
    %669 = memref.load %arg1[%668] : memref<16xi32, #tpu.memory_space<smem>>
    %670 = arith.index_cast %c3_i32_310 : i32 to index
    %671 = memref.load %arg2[%670] : memref<16xi32, #tpu.memory_space<smem>>
    %672 = arith.index_cast %669 : i32 to index
    %c0_311 = arith.constant 0 : index
    %673 = vector.load %arg33[%672, %c0_311] : memref<12x128xf32, #tpu.memory_space<vmem>>, vector<1x128xf32>
    %674 = arith.index_cast %c3_i32_310 : i32 to index
    %c0_312 = arith.constant 0 : index
    %675 = vector.load %arg34[%674, %c0_312] : memref<16x128xf32, #tpu.memory_space<vmem>>, vector<1x128xf32>
    %676 = arith.addf %673, %675 : vector<1x128xf32>
    %cst_313 = arith.constant 0.000000e+00 : f32
    %677 = vector.broadcast %cst_313 : f32 to vector<1x128xf32>
    %678 = arith.maximumf %676, %677 : vector<1x128xf32>
    %679 = arith.index_cast %671 : i32 to index
    %c0_314 = arith.constant 0 : index
    %680 = vector.load %arg35[%679, %c0_314] : memref<12x128xf32, #tpu.memory_space<vmem>>, vector<1x128xf32>
    %681 = arith.addf %680, %678 : vector<1x128xf32>
    %682 = arith.index_cast %671 : i32 to index
    %c0_315 = arith.constant 0 : index
    %683 = vector.load %arg35[%682, %c0_315] : memref<12x128xf32, #tpu.memory_space<vmem>>, vector<1x128xf32>
    tpu.vector_store %arg35[%682, %c0_315], %681 {strides = array<i32>} : memref<12x128xf32, #tpu.memory_space<vmem>>, vector<1x128xf32>,
    %c4_i32_316 = arith.constant 4 : i32
    %684 = arith.index_cast %c4_i32_316 : i32 to index
    %685 = memref.load %arg1[%684] : memref<16xi32, #tpu.memory_space<smem>>
    %686 = arith.index_cast %c4_i32_316 : i32 to index
    %687 = memref.load %arg2[%686] : memref<16xi32, #tpu.memory_space<smem>>
    %688 = arith.index_cast %685 : i32 to index
    %c0_317 = arith.constant 0 : index
    %689 = vector.load %arg33[%688, %c0_317] : memref<12x128xf32, #tpu.memory_space<vmem>>, vector<1x128xf32>
    %690 = arith.index_cast %c4_i32_316 : i32 to index
    %c0_318 = arith.constant 0 : index
    %691 = vector.load %arg34[%690, %c0_318] : memref<16x128xf32, #tpu.memory_space<vmem>>, vector<1x128xf32>
    %692 = arith.addf %689, %691 : vector<1x128xf32>
    %cst_319 = arith.constant 0.000000e+00 : f32
    %693 = vector.broadcast %cst_319 : f32 to vector<1x128xf32>
    %694 = arith.maximumf %692, %693 : vector<1x128xf32>
    %695 = arith.index_cast %687 : i32 to index
    %c0_320 = arith.constant 0 : index
    %696 = vector.load %arg35[%695, %c0_320] : memref<12x128xf32, #tpu.memory_space<vmem>>, vector<1x128xf32>
    %697 = arith.addf %696, %694 : vector<1x128xf32>
    %698 = arith.index_cast %687 : i32 to index
    %c0_321 = arith.constant 0 : index
    %699 = vector.load %arg35[%698, %c0_321] : memref<12x128xf32, #tpu.memory_space<vmem>>, vector<1x128xf32>
    tpu.vector_store %arg35[%698, %c0_321], %697 {strides = array<i32>} : memref<12x128xf32, #tpu.memory_space<vmem>>, vector<1x128xf32>,
    %c5_i32_322 = arith.constant 5 : i32
    %700 = arith.index_cast %c5_i32_322 : i32 to index
    %701 = memref.load %arg1[%700] : memref<16xi32, #tpu.memory_space<smem>>
    %702 = arith.index_cast %c5_i32_322 : i32 to index
    %703 = memref.load %arg2[%702] : memref<16xi32, #tpu.memory_space<smem>>
    %704 = arith.index_cast %701 : i32 to index
    %c0_323 = arith.constant 0 : index
    %705 = vector.load %arg33[%704, %c0_323] : memref<12x128xf32, #tpu.memory_space<vmem>>, vector<1x128xf32>
    %706 = arith.index_cast %c5_i32_322 : i32 to index
    %c0_324 = arith.constant 0 : index
    %707 = vector.load %arg34[%706, %c0_324] : memref<16x128xf32, #tpu.memory_space<vmem>>, vector<1x128xf32>
    %708 = arith.addf %705, %707 : vector<1x128xf32>
    %cst_325 = arith.constant 0.000000e+00 : f32
    %709 = vector.broadcast %cst_325 : f32 to vector<1x128xf32>
    %710 = arith.maximumf %708, %709 : vector<1x128xf32>
    %711 = arith.index_cast %703 : i32 to index
    %c0_326 = arith.constant 0 : index
    %712 = vector.load %arg35[%711, %c0_326] : memref<12x128xf32, #tpu.memory_space<vmem>>, vector<1x128xf32>
    %713 = arith.addf %712, %710 : vector<1x128xf32>
    %714 = arith.index_cast %703 : i32 to index
    %c0_327 = arith.constant 0 : index
    %715 = vector.load %arg35[%714, %c0_327] : memref<12x128xf32, #tpu.memory_space<vmem>>, vector<1x128xf32>
    tpu.vector_store %arg35[%714, %c0_327], %713 {strides = array<i32>} : memref<12x128xf32, #tpu.memory_space<vmem>>, vector<1x128xf32>,
    %c6_i32_328 = arith.constant 6 : i32
    %716 = arith.index_cast %c6_i32_328 : i32 to index
    %717 = memref.load %arg1[%716] : memref<16xi32, #tpu.memory_space<smem>>
    %718 = arith.index_cast %c6_i32_328 : i32 to index
    %719 = memref.load %arg2[%718] : memref<16xi32, #tpu.memory_space<smem>>
    %720 = arith.index_cast %717 : i32 to index
    %c0_329 = arith.constant 0 : index
    %721 = vector.load %arg33[%720, %c0_329] : memref<12x128xf32, #tpu.memory_space<vmem>>, vector<1x128xf32>
    %722 = arith.index_cast %c6_i32_328 : i32 to index
    %c0_330 = arith.constant 0 : index
    %723 = vector.load %arg34[%722, %c0_330] : memref<16x128xf32, #tpu.memory_space<vmem>>, vector<1x128xf32>
    %724 = arith.addf %721, %723 : vector<1x128xf32>
    %cst_331 = arith.constant 0.000000e+00 : f32
    %725 = vector.broadcast %cst_331 : f32 to vector<1x128xf32>
    %726 = arith.maximumf %724, %725 : vector<1x128xf32>
    %727 = arith.index_cast %719 : i32 to index
    %c0_332 = arith.constant 0 : index
    %728 = vector.load %arg35[%727, %c0_332] : memref<12x128xf32, #tpu.memory_space<vmem>>, vector<1x128xf32>
    %729 = arith.addf %728, %726 : vector<1x128xf32>
    %730 = arith.index_cast %719 : i32 to index
    %c0_333 = arith.constant 0 : index
    %731 = vector.load %arg35[%730, %c0_333] : memref<12x128xf32, #tpu.memory_space<vmem>>, vector<1x128xf32>
    tpu.vector_store %arg35[%730, %c0_333], %729 {strides = array<i32>} : memref<12x128xf32, #tpu.memory_space<vmem>>, vector<1x128xf32>,
    %c7_i32_334 = arith.constant 7 : i32
    %732 = arith.index_cast %c7_i32_334 : i32 to index
    %733 = memref.load %arg1[%732] : memref<16xi32, #tpu.memory_space<smem>>
    %734 = arith.index_cast %c7_i32_334 : i32 to index
    %735 = memref.load %arg2[%734] : memref<16xi32, #tpu.memory_space<smem>>
    %736 = arith.index_cast %733 : i32 to index
    %c0_335 = arith.constant 0 : index
    %737 = vector.load %arg33[%736, %c0_335] : memref<12x128xf32, #tpu.memory_space<vmem>>, vector<1x128xf32>
    %738 = arith.index_cast %c7_i32_334 : i32 to index
    %c0_336 = arith.constant 0 : index
    %739 = vector.load %arg34[%738, %c0_336] : memref<16x128xf32, #tpu.memory_space<vmem>>, vector<1x128xf32>
    %740 = arith.addf %737, %739 : vector<1x128xf32>
    %cst_337 = arith.constant 0.000000e+00 : f32
    %741 = vector.broadcast %cst_337 : f32 to vector<1x128xf32>
    %742 = arith.maximumf %740, %741 : vector<1x128xf32>
    %743 = arith.index_cast %735 : i32 to index
    %c0_338 = arith.constant 0 : index
    %744 = vector.load %arg35[%743, %c0_338] : memref<12x128xf32, #tpu.memory_space<vmem>>, vector<1x128xf32>
    %745 = arith.addf %744, %742 : vector<1x128xf32>
    %746 = arith.index_cast %735 : i32 to index
    %c0_339 = arith.constant 0 : index
    %747 = vector.load %arg35[%746, %c0_339] : memref<12x128xf32, #tpu.memory_space<vmem>>, vector<1x128xf32>
    tpu.vector_store %arg35[%746, %c0_339], %745 {strides = array<i32>} : memref<12x128xf32, #tpu.memory_space<vmem>>, vector<1x128xf32>,
    %c8_i32_340 = arith.constant 8 : i32
    %748 = arith.index_cast %c8_i32_340 : i32 to index
    %749 = memref.load %arg1[%748] : memref<16xi32, #tpu.memory_space<smem>>
    %750 = arith.index_cast %c8_i32_340 : i32 to index
    %751 = memref.load %arg2[%750] : memref<16xi32, #tpu.memory_space<smem>>
    %752 = arith.index_cast %749 : i32 to index
    %c0_341 = arith.constant 0 : index
    %753 = vector.load %arg33[%752, %c0_341] : memref<12x128xf32, #tpu.memory_space<vmem>>, vector<1x128xf32>
    %754 = arith.index_cast %c8_i32_340 : i32 to index
    %c0_342 = arith.constant 0 : index
    %755 = vector.load %arg34[%754, %c0_342] : memref<16x128xf32, #tpu.memory_space<vmem>>, vector<1x128xf32>
    %756 = arith.addf %753, %755 : vector<1x128xf32>
    %cst_343 = arith.constant 0.000000e+00 : f32
    %757 = vector.broadcast %cst_343 : f32 to vector<1x128xf32>
    %758 = arith.maximumf %756, %757 : vector<1x128xf32>
    %759 = arith.index_cast %751 : i32 to index
    %c0_344 = arith.constant 0 : index
    %760 = vector.load %arg35[%759, %c0_344] : memref<12x128xf32, #tpu.memory_space<vmem>>, vector<1x128xf32>
    %761 = arith.addf %760, %758 : vector<1x128xf32>
    %762 = arith.index_cast %751 : i32 to index
    %c0_345 = arith.constant 0 : index
    %763 = vector.load %arg35[%762, %c0_345] : memref<12x128xf32, #tpu.memory_space<vmem>>, vector<1x128xf32>
    tpu.vector_store %arg35[%762, %c0_345], %761 {strides = array<i32>} : memref<12x128xf32, #tpu.memory_space<vmem>>, vector<1x128xf32>,
    %c9_i32_346 = arith.constant 9 : i32
    %764 = arith.index_cast %c9_i32_346 : i32 to index
    %765 = memref.load %arg1[%764] : memref<16xi32, #tpu.memory_space<smem>>
    %766 = arith.index_cast %c9_i32_346 : i32 to index
    %767 = memref.load %arg2[%766] : memref<16xi32, #tpu.memory_space<smem>>
    %768 = arith.index_cast %765 : i32 to index
    %c0_347 = arith.constant 0 : index
    %769 = vector.load %arg33[%768, %c0_347] : memref<12x128xf32, #tpu.memory_space<vmem>>, vector<1x128xf32>
    %770 = arith.index_cast %c9_i32_346 : i32 to index
    %c0_348 = arith.constant 0 : index
    %771 = vector.load %arg34[%770, %c0_348] : memref<16x128xf32, #tpu.memory_space<vmem>>, vector<1x128xf32>
    %772 = arith.addf %769, %771 : vector<1x128xf32>
    %cst_349 = arith.constant 0.000000e+00 : f32
    %773 = vector.broadcast %cst_349 : f32 to vector<1x128xf32>
    %774 = arith.maximumf %772, %773 : vector<1x128xf32>
    %775 = arith.index_cast %767 : i32 to index
    %c0_350 = arith.constant 0 : index
    %776 = vector.load %arg35[%775, %c0_350] : memref<12x128xf32, #tpu.memory_space<vmem>>, vector<1x128xf32>
    %777 = arith.addf %776, %774 : vector<1x128xf32>
    %778 = arith.index_cast %767 : i32 to index
    %c0_351 = arith.constant 0 : index
    %779 = vector.load %arg35[%778, %c0_351] : memref<12x128xf32, #tpu.memory_space<vmem>>, vector<1x128xf32>
    tpu.vector_store %arg35[%778, %c0_351], %777 {strides = array<i32>} : memref<12x128xf32, #tpu.memory_space<vmem>>, vector<1x128xf32>,
    %c10_i32_352 = arith.constant 10 : i32
    %780 = arith.index_cast %c10_i32_352 : i32 to index
    %781 = memref.load %arg1[%780] : memref<16xi32, #tpu.memory_space<smem>>
    %782 = arith.index_cast %c10_i32_352 : i32 to index
    %783 = memref.load %arg2[%782] : memref<16xi32, #tpu.memory_space<smem>>
    %784 = arith.index_cast %781 : i32 to index
    %c0_353 = arith.constant 0 : index
    %785 = vector.load %arg33[%784, %c0_353] : memref<12x128xf32, #tpu.memory_space<vmem>>, vector<1x128xf32>
    %786 = arith.index_cast %c10_i32_352 : i32 to index
    %c0_354 = arith.constant 0 : index
    %787 = vector.load %arg34[%786, %c0_354] : memref<16x128xf32, #tpu.memory_space<vmem>>, vector<1x128xf32>
    %788 = arith.addf %785, %787 : vector<1x128xf32>
    %cst_355 = arith.constant 0.000000e+00 : f32
    %789 = vector.broadcast %cst_355 : f32 to vector<1x128xf32>
    %790 = arith.maximumf %788, %789 : vector<1x128xf32>
    %791 = arith.index_cast %783 : i32 to index
    %c0_356 = arith.constant 0 : index
    %792 = vector.load %arg35[%791, %c0_356] : memref<12x128xf32, #tpu.memory_space<vmem>>, vector<1x128xf32>
    %793 = arith.addf %792, %790 : vector<1x128xf32>
    %794 = arith.index_cast %783 : i32 to index
    %c0_357 = arith.constant 0 : index
    %795 = vector.load %arg35[%794, %c0_357] : memref<12x128xf32, #tpu.memory_space<vmem>>, vector<1x128xf32>
    tpu.vector_store %arg35[%794, %c0_357], %793 {strides = array<i32>} : memref<12x128xf32, #tpu.memory_space<vmem>>, vector<1x128xf32>,
    %c11_i32_358 = arith.constant 11 : i32
    %796 = arith.index_cast %c11_i32_358 : i32 to index
    %797 = memref.load %arg1[%796] : memref<16xi32, #tpu.memory_space<smem>>
    %798 = arith.index_cast %c11_i32_358 : i32 to index
    %799 = memref.load %arg2[%798] : memref<16xi32, #tpu.memory_space<smem>>
    %800 = arith.index_cast %797 : i32 to index
    %c0_359 = arith.constant 0 : index
    %801 = vector.load %arg33[%800, %c0_359] : memref<12x128xf32, #tpu.memory_space<vmem>>, vector<1x128xf32>
    %802 = arith.index_cast %c11_i32_358 : i32 to index
    %c0_360 = arith.constant 0 : index
    %803 = vector.load %arg34[%802, %c0_360] : memref<16x128xf32, #tpu.memory_space<vmem>>, vector<1x128xf32>
    %804 = arith.addf %801, %803 : vector<1x128xf32>
    %cst_361 = arith.constant 0.000000e+00 : f32
    %805 = vector.broadcast %cst_361 : f32 to vector<1x128xf32>
    %806 = arith.maximumf %804, %805 : vector<1x128xf32>
    %807 = arith.index_cast %799 : i32 to index
    %c0_362 = arith.constant 0 : index
    %808 = vector.load %arg35[%807, %c0_362] : memref<12x128xf32, #tpu.memory_space<vmem>>, vector<1x128xf32>
    %809 = arith.addf %808, %806 : vector<1x128xf32>
    %810 = arith.index_cast %799 : i32 to index
    %c0_363 = arith.constant 0 : index
    %811 = vector.load %arg35[%810, %c0_363] : memref<12x128xf32, #tpu.memory_space<vmem>>, vector<1x128xf32>
    tpu.vector_store %arg35[%810, %c0_363], %809 {strides = array<i32>} : memref<12x128xf32, #tpu.memory_space<vmem>>, vector<1x128xf32>,
    %c12_i32_364 = arith.constant 12 : i32
    %812 = arith.index_cast %c12_i32_364 : i32 to index
    %813 = memref.load %arg1[%812] : memref<16xi32, #tpu.memory_space<smem>>
    %814 = arith.index_cast %c12_i32_364 : i32 to index
    %815 = memref.load %arg2[%814] : memref<16xi32, #tpu.memory_space<smem>>
    %816 = arith.index_cast %813 : i32 to index
    %c0_365 = arith.constant 0 : index
    %817 = vector.load %arg33[%816, %c0_365] : memref<12x128xf32, #tpu.memory_space<vmem>>, vector<1x128xf32>
    %818 = arith.index_cast %c12_i32_364 : i32 to index
    %c0_366 = arith.constant 0 : index
    %819 = vector.load %arg34[%818, %c0_366] : memref<16x128xf32, #tpu.memory_space<vmem>>, vector<1x128xf32>
    %820 = arith.addf %817, %819 : vector<1x128xf32>
    %cst_367 = arith.constant 0.000000e+00 : f32
    %821 = vector.broadcast %cst_367 : f32 to vector<1x128xf32>
    %822 = arith.maximumf %820, %821 : vector<1x128xf32>
    %823 = arith.index_cast %815 : i32 to index
    %c0_368 = arith.constant 0 : index
    %824 = vector.load %arg35[%823, %c0_368] : memref<12x128xf32, #tpu.memory_space<vmem>>, vector<1x128xf32>
    %825 = arith.addf %824, %822 : vector<1x128xf32>
    %826 = arith.index_cast %815 : i32 to index
    %c0_369 = arith.constant 0 : index
    %827 = vector.load %arg35[%826, %c0_369] : memref<12x128xf32, #tpu.memory_space<vmem>>, vector<1x128xf32>
    tpu.vector_store %arg35[%826, %c0_369], %825 {strides = array<i32>} : memref<12x128xf32, #tpu.memory_space<vmem>>, vector<1x128xf32>,
    %c13_i32_370 = arith.constant 13 : i32
    %828 = arith.index_cast %c13_i32_370 : i32 to index
    %829 = memref.load %arg1[%828] : memref<16xi32, #tpu.memory_space<smem>>
    %830 = arith.index_cast %c13_i32_370 : i32 to index
    %831 = memref.load %arg2[%830] : memref<16xi32, #tpu.memory_space<smem>>
    %832 = arith.index_cast %829 : i32 to index
    %c0_371 = arith.constant 0 : index
    %833 = vector.load %arg33[%832, %c0_371] : memref<12x128xf32, #tpu.memory_space<vmem>>, vector<1x128xf32>
    %834 = arith.index_cast %c13_i32_370 : i32 to index
    %c0_372 = arith.constant 0 : index
    %835 = vector.load %arg34[%834, %c0_372] : memref<16x128xf32, #tpu.memory_space<vmem>>, vector<1x128xf32>
    %836 = arith.addf %833, %835 : vector<1x128xf32>
    %cst_373 = arith.constant 0.000000e+00 : f32
    %837 = vector.broadcast %cst_373 : f32 to vector<1x128xf32>
    %838 = arith.maximumf %836, %837 : vector<1x128xf32>
    %839 = arith.index_cast %831 : i32 to index
    %c0_374 = arith.constant 0 : index
    %840 = vector.load %arg35[%839, %c0_374] : memref<12x128xf32, #tpu.memory_space<vmem>>, vector<1x128xf32>
    %841 = arith.addf %840, %838 : vector<1x128xf32>
    %842 = arith.index_cast %831 : i32 to index
    %c0_375 = arith.constant 0 : index
    %843 = vector.load %arg35[%842, %c0_375] : memref<12x128xf32, #tpu.memory_space<vmem>>, vector<1x128xf32>
    tpu.vector_store %arg35[%842, %c0_375], %841 {strides = array<i32>} : memref<12x128xf32, #tpu.memory_space<vmem>>, vector<1x128xf32>,
    %c14_i32_376 = arith.constant 14 : i32
    %844 = arith.index_cast %c14_i32_376 : i32 to index
    %845 = memref.load %arg1[%844] : memref<16xi32, #tpu.memory_space<smem>>
    %846 = arith.index_cast %c14_i32_376 : i32 to index
    %847 = memref.load %arg2[%846] : memref<16xi32, #tpu.memory_space<smem>>
    %848 = arith.index_cast %845 : i32 to index
    %c0_377 = arith.constant 0 : index
    %849 = vector.load %arg33[%848, %c0_377] : memref<12x128xf32, #tpu.memory_space<vmem>>, vector<1x128xf32>
    %850 = arith.index_cast %c14_i32_376 : i32 to index
    %c0_378 = arith.constant 0 : index
    %851 = vector.load %arg34[%850, %c0_378] : memref<16x128xf32, #tpu.memory_space<vmem>>, vector<1x128xf32>
    %852 = arith.addf %849, %851 : vector<1x128xf32>
    %cst_379 = arith.constant 0.000000e+00 : f32
    %853 = vector.broadcast %cst_379 : f32 to vector<1x128xf32>
    %854 = arith.maximumf %852, %853 : vector<1x128xf32>
    %855 = arith.index_cast %847 : i32 to index
    %c0_380 = arith.constant 0 : index
    %856 = vector.load %arg35[%855, %c0_380] : memref<12x128xf32, #tpu.memory_space<vmem>>, vector<1x128xf32>
    %857 = arith.addf %856, %854 : vector<1x128xf32>
    %858 = arith.index_cast %847 : i32 to index
    %c0_381 = arith.constant 0 : index
    %859 = vector.load %arg35[%858, %c0_381] : memref<12x128xf32, #tpu.memory_space<vmem>>, vector<1x128xf32>
    tpu.vector_store %arg35[%858, %c0_381], %857 {strides = array<i32>} : memref<12x128xf32, #tpu.memory_space<vmem>>, vector<1x128xf32>,
    %c15_i32_382 = arith.constant 15 : i32
    %860 = arith.index_cast %c15_i32_382 : i32 to index
    %861 = memref.load %arg1[%860] : memref<16xi32, #tpu.memory_space<smem>>
    %862 = arith.index_cast %c15_i32_382 : i32 to index
    %863 = memref.load %arg2[%862] : memref<16xi32, #tpu.memory_space<smem>>
    %864 = arith.index_cast %861 : i32 to index
    %c0_383 = arith.constant 0 : index
    %865 = vector.load %arg33[%864, %c0_383] : memref<12x128xf32, #tpu.memory_space<vmem>>, vector<1x128xf32>
    %866 = arith.index_cast %c15_i32_382 : i32 to index
    %c0_384 = arith.constant 0 : index
    %867 = vector.load %arg34[%866, %c0_384] : memref<16x128xf32, #tpu.memory_space<vmem>>, vector<1x128xf32>
    %868 = arith.addf %865, %867 : vector<1x128xf32>
    %cst_385 = arith.constant 0.000000e+00 : f32
    %869 = vector.broadcast %cst_385 : f32 to vector<1x128xf32>
    %870 = arith.maximumf %868, %869 : vector<1x128xf32>
    %871 = arith.index_cast %863 : i32 to index
    %c0_386 = arith.constant 0 : index
    %872 = vector.load %arg35[%871, %c0_386] : memref<12x128xf32, #tpu.memory_space<vmem>>, vector<1x128xf32>
    %873 = arith.addf %872, %870 : vector<1x128xf32>
    %874 = arith.index_cast %863 : i32 to index
    %c0_387 = arith.constant 0 : index
    %875 = vector.load %arg35[%874, %c0_387] : memref<12x128xf32, #tpu.memory_space<vmem>>, vector<1x128xf32>
    tpu.vector_store %arg35[%874, %c0_387], %873 {strides = array<i32>} : memref<12x128xf32, #tpu.memory_space<vmem>>, vector<1x128xf32>,
    %c16_i32_388 = arith.constant 16 : i32
    %c0_389 = arith.constant 0 : index
    %c0_390 = arith.constant 0 : index
    %876 = vector.load %arg35[%c0_389, %c0_390] : memref<12x128xf32, #tpu.memory_space<vmem>>, vector<12x128xf32>
    %c2_391 = arith.constant 2 : index
    %c0_392 = arith.constant 0 : index
    %c0_393 = arith.constant 0 : index
    %877 = vector.load %arg14[%c2_391, %c0_392, %c0_393] : memref<3x1x128xf32, #tpu.memory_space<vmem>>, vector<1x1x128xf32>
    %878 = vector.shape_cast %877 : vector<1x1x128xf32> to vector<1x128xf32>
    %879 = vector.broadcast %878 : vector<1x128xf32> to vector<12x128xf32>
    %880 = arith.mulf %876, %879 : vector<12x128xf32>
    %c2_394 = arith.constant 2 : index
    %c0_395 = arith.constant 0 : index
    %c0_396 = arith.constant 0 : index
    %881 = vector.load %arg15[%c2_394, %c0_395, %c0_396] : memref<3x1x128xf32, #tpu.memory_space<vmem>>, vector<1x1x128xf32>
    %882 = vector.shape_cast %881 : vector<1x1x128xf32> to vector<1x128xf32>
    %883 = vector.broadcast %882 : vector<1x128xf32> to vector<12x128xf32>
    %884 = arith.addf %880, %883 : vector<12x128xf32>
    %c0_397 = arith.constant 0 : index
    %c0_398 = arith.constant 0 : index
    %885 = vector.load %arg31[%c0_397, %c0_398] : memref<12x128xf32, #tpu.memory_space<vmem>>, vector<12x128xf32>
    tpu.vector_store %arg31[%c0_397, %c0_398], %884 {strides = array<i32>} : memref<12x128xf32, #tpu.memory_space<vmem>>, vector<12x128xf32>,
    %c0_399 = arith.constant 0 : index
    %c0_400 = arith.constant 0 : index
    %886 = vector.load %arg32[%c0_399, %c0_400] : memref<12x128xf32, #tpu.memory_space<vmem>>, vector<12x128xf32>
    %887 = arith.addf %886, %884 : vector<12x128xf32>
    %c0_401 = arith.constant 0 : index
    %c0_402 = arith.constant 0 : index
    %888 = vector.load %arg32[%c0_401, %c0_402] : memref<12x128xf32, #tpu.memory_space<vmem>>, vector<12x128xf32>
    tpu.vector_store %arg32[%c0_401, %c0_402], %887 {strides = array<i32>} : memref<12x128xf32, #tpu.memory_space<vmem>>, vector<12x128xf32>,
    %cst_403 = arith.constant 0.000000e+00 : f32
    %889 = vector.broadcast %cst_403 : f32 to vector<2x128xf32>
    %c0_404 = arith.constant 0 : index
    %c0_405 = arith.constant 0 : index
    %890 = vector.load %arg36[%c0_404, %c0_405] : memref<2x128xf32, #tpu.memory_space<vmem>>, vector<2x128xf32>
    tpu.vector_store %arg36[%c0_404, %c0_405], %889 {strides = array<i32>} : memref<2x128xf32, #tpu.memory_space<vmem>>, vector<2x128xf32>,
    %cst_406 = arith.constant -3.000000e+38 : f32
    %891 = vector.broadcast %cst_406 : f32 to vector<2x128xf32>
    %c0_407 = arith.constant 0 : index
    %c0_408 = arith.constant 0 : index
    %892 = vector.load %arg37[%c0_407, %c0_408] : memref<2x128xf32, #tpu.memory_space<vmem>>, vector<2x128xf32>
    tpu.vector_store %arg37[%c0_407, %c0_408], %891 {strides = array<i32>} : memref<2x128xf32, #tpu.memory_space<vmem>>, vector<2x128xf32>,
    %c0_i32_409 = arith.constant 0 : i32
    %893 = arith.index_cast %c0_i32_409 : i32 to index
    %894 = memref.load %arg3[%893] : memref<12xi32, #tpu.memory_space<smem>>
    %895 = arith.index_cast %c0_i32_409 : i32 to index
    %c0_410 = arith.constant 0 : index
    %896 = vector.load %arg32[%895, %c0_410] : memref<12x128xf32, #tpu.memory_space<vmem>>, vector<1x128xf32>
    %897 = arith.index_cast %894 : i32 to index
    %c0_411 = arith.constant 0 : index
    %898 = vector.load %arg36[%897, %c0_411] : memref<2x128xf32, #tpu.memory_space<vmem>>, vector<1x128xf32>
    %899 = arith.addf %898, %896 : vector<1x128xf32>
    %900 = arith.index_cast %894 : i32 to index
    %c0_412 = arith.constant 0 : index
    %901 = vector.load %arg36[%900, %c0_412] : memref<2x128xf32, #tpu.memory_space<vmem>>, vector<1x128xf32>
    tpu.vector_store %arg36[%900, %c0_412], %899 {strides = array<i32>} : memref<2x128xf32, #tpu.memory_space<vmem>>, vector<1x128xf32>,
    %902 = arith.index_cast %894 : i32 to index
    %c0_413 = arith.constant 0 : index
    %903 = vector.load %arg37[%902, %c0_413] : memref<2x128xf32, #tpu.memory_space<vmem>>, vector<1x128xf32>
    %904 = arith.maximumf %903, %896 : vector<1x128xf32>
    %905 = arith.index_cast %894 : i32 to index
    %c0_414 = arith.constant 0 : index
    %906 = vector.load %arg37[%905, %c0_414] : memref<2x128xf32, #tpu.memory_space<vmem>>, vector<1x128xf32>
    tpu.vector_store %arg37[%905, %c0_414], %904 {strides = array<i32>} : memref<2x128xf32, #tpu.memory_space<vmem>>, vector<1x128xf32>,
    %c1_i32_415 = arith.constant 1 : i32
    %907 = arith.index_cast %c1_i32_415 : i32 to index
    %908 = memref.load %arg3[%907] : memref<12xi32, #tpu.memory_space<smem>>
    %909 = arith.index_cast %c1_i32_415 : i32 to index
    %c0_416 = arith.constant 0 : index
    %910 = vector.load %arg32[%909, %c0_416] : memref<12x128xf32, #tpu.memory_space<vmem>>, vector<1x128xf32>
    %911 = arith.index_cast %908 : i32 to index
    %c0_417 = arith.constant 0 : index
    %912 = vector.load %arg36[%911, %c0_417] : memref<2x128xf32, #tpu.memory_space<vmem>>, vector<1x128xf32>
    %913 = arith.addf %912, %910 : vector<1x128xf32>
    %914 = arith.index_cast %908 : i32 to index
    %c0_418 = arith.constant 0 : index
    %915 = vector.load %arg36[%914, %c0_418] : memref<2x128xf32, #tpu.memory_space<vmem>>, vector<1x128xf32>
    tpu.vector_store %arg36[%914, %c0_418], %913 {strides = array<i32>} : memref<2x128xf32, #tpu.memory_space<vmem>>, vector<1x128xf32>,
    %916 = arith.index_cast %908 : i32 to index
    %c0_419 = arith.constant 0 : index
    %917 = vector.load %arg37[%916, %c0_419] : memref<2x128xf32, #tpu.memory_space<vmem>>, vector<1x128xf32>
    %918 = arith.maximumf %917, %910 : vector<1x128xf32>
    %919 = arith.index_cast %908 : i32 to index
    %c0_420 = arith.constant 0 : index
    %920 = vector.load %arg37[%919, %c0_420] : memref<2x128xf32, #tpu.memory_space<vmem>>, vector<1x128xf32>
    tpu.vector_store %arg37[%919, %c0_420], %918 {strides = array<i32>} : memref<2x128xf32, #tpu.memory_space<vmem>>, vector<1x128xf32>,
    %c2_i32_421 = arith.constant 2 : i32
    %921 = arith.index_cast %c2_i32_421 : i32 to index
    %922 = memref.load %arg3[%921] : memref<12xi32, #tpu.memory_space<smem>>
    %923 = arith.index_cast %c2_i32_421 : i32 to index
    %c0_422 = arith.constant 0 : index
    %924 = vector.load %arg32[%923, %c0_422] : memref<12x128xf32, #tpu.memory_space<vmem>>, vector<1x128xf32>
    %925 = arith.index_cast %922 : i32 to index
    %c0_423 = arith.constant 0 : index
    %926 = vector.load %arg36[%925, %c0_423] : memref<2x128xf32, #tpu.memory_space<vmem>>, vector<1x128xf32>
    %927 = arith.addf %926, %924 : vector<1x128xf32>
    %928 = arith.index_cast %922 : i32 to index
    %c0_424 = arith.constant 0 : index
    %929 = vector.load %arg36[%928, %c0_424] : memref<2x128xf32, #tpu.memory_space<vmem>>, vector<1x128xf32>
    tpu.vector_store %arg36[%928, %c0_424], %927 {strides = array<i32>} : memref<2x128xf32, #tpu.memory_space<vmem>>, vector<1x128xf32>,
    %930 = arith.index_cast %922 : i32 to index
    %c0_425 = arith.constant 0 : index
    %931 = vector.load %arg37[%930, %c0_425] : memref<2x128xf32, #tpu.memory_space<vmem>>, vector<1x128xf32>
    %932 = arith.maximumf %931, %924 : vector<1x128xf32>
    %933 = arith.index_cast %922 : i32 to index
    %c0_426 = arith.constant 0 : index
    %934 = vector.load %arg37[%933, %c0_426] : memref<2x128xf32, #tpu.memory_space<vmem>>, vector<1x128xf32>
    tpu.vector_store %arg37[%933, %c0_426], %932 {strides = array<i32>} : memref<2x128xf32, #tpu.memory_space<vmem>>, vector<1x128xf32>,
    %c3_i32_427 = arith.constant 3 : i32
    %935 = arith.index_cast %c3_i32_427 : i32 to index
    %936 = memref.load %arg3[%935] : memref<12xi32, #tpu.memory_space<smem>>
    %937 = arith.index_cast %c3_i32_427 : i32 to index
    %c0_428 = arith.constant 0 : index
    %938 = vector.load %arg32[%937, %c0_428] : memref<12x128xf32, #tpu.memory_space<vmem>>, vector<1x128xf32>
    %939 = arith.index_cast %936 : i32 to index
    %c0_429 = arith.constant 0 : index
    %940 = vector.load %arg36[%939, %c0_429] : memref<2x128xf32, #tpu.memory_space<vmem>>, vector<1x128xf32>
    %941 = arith.addf %940, %938 : vector<1x128xf32>
    %942 = arith.index_cast %936 : i32 to index
    %c0_430 = arith.constant 0 : index
    %943 = vector.load %arg36[%942, %c0_430] : memref<2x128xf32, #tpu.memory_space<vmem>>, vector<1x128xf32>
    tpu.vector_store %arg36[%942, %c0_430], %941 {strides = array<i32>} : memref<2x128xf32, #tpu.memory_space<vmem>>, vector<1x128xf32>,
    %944 = arith.index_cast %936 : i32 to index
    %c0_431 = arith.constant 0 : index
    %945 = vector.load %arg37[%944, %c0_431] : memref<2x128xf32, #tpu.memory_space<vmem>>, vector<1x128xf32>
    %946 = arith.maximumf %945, %938 : vector<1x128xf32>
    %947 = arith.index_cast %936 : i32 to index
    %c0_432 = arith.constant 0 : index
    %948 = vector.load %arg37[%947, %c0_432] : memref<2x128xf32, #tpu.memory_space<vmem>>, vector<1x128xf32>
    tpu.vector_store %arg37[%947, %c0_432], %946 {strides = array<i32>} : memref<2x128xf32, #tpu.memory_space<vmem>>, vector<1x128xf32>,
    %c4_i32_433 = arith.constant 4 : i32
    %949 = arith.index_cast %c4_i32_433 : i32 to index
    %950 = memref.load %arg3[%949] : memref<12xi32, #tpu.memory_space<smem>>
    %951 = arith.index_cast %c4_i32_433 : i32 to index
    %c0_434 = arith.constant 0 : index
    %952 = vector.load %arg32[%951, %c0_434] : memref<12x128xf32, #tpu.memory_space<vmem>>, vector<1x128xf32>
    %953 = arith.index_cast %950 : i32 to index
    %c0_435 = arith.constant 0 : index
    %954 = vector.load %arg36[%953, %c0_435] : memref<2x128xf32, #tpu.memory_space<vmem>>, vector<1x128xf32>
    %955 = arith.addf %954, %952 : vector<1x128xf32>
    %956 = arith.index_cast %950 : i32 to index
    %c0_436 = arith.constant 0 : index
    %957 = vector.load %arg36[%956, %c0_436] : memref<2x128xf32, #tpu.memory_space<vmem>>, vector<1x128xf32>
    tpu.vector_store %arg36[%956, %c0_436], %955 {strides = array<i32>} : memref<2x128xf32, #tpu.memory_space<vmem>>, vector<1x128xf32>,
    %958 = arith.index_cast %950 : i32 to index
    %c0_437 = arith.constant 0 : index
    %959 = vector.load %arg37[%958, %c0_437] : memref<2x128xf32, #tpu.memory_space<vmem>>, vector<1x128xf32>
    %960 = arith.maximumf %959, %952 : vector<1x128xf32>
    %961 = arith.index_cast %950 : i32 to index
    %c0_438 = arith.constant 0 : index
    %962 = vector.load %arg37[%961, %c0_438] : memref<2x128xf32, #tpu.memory_space<vmem>>, vector<1x128xf32>
    tpu.vector_store %arg37[%961, %c0_438], %960 {strides = array<i32>} : memref<2x128xf32, #tpu.memory_space<vmem>>, vector<1x128xf32>,
    %c5_i32_439 = arith.constant 5 : i32
    %963 = arith.index_cast %c5_i32_439 : i32 to index
    %964 = memref.load %arg3[%963] : memref<12xi32, #tpu.memory_space<smem>>
    %965 = arith.index_cast %c5_i32_439 : i32 to index
    %c0_440 = arith.constant 0 : index
    %966 = vector.load %arg32[%965, %c0_440] : memref<12x128xf32, #tpu.memory_space<vmem>>, vector<1x128xf32>
    %967 = arith.index_cast %964 : i32 to index
    %c0_441 = arith.constant 0 : index
    %968 = vector.load %arg36[%967, %c0_441] : memref<2x128xf32, #tpu.memory_space<vmem>>, vector<1x128xf32>
    %969 = arith.addf %968, %966 : vector<1x128xf32>
    %970 = arith.index_cast %964 : i32 to index
    %c0_442 = arith.constant 0 : index
    %971 = vector.load %arg36[%970, %c0_442] : memref<2x128xf32, #tpu.memory_space<vmem>>, vector<1x128xf32>
    tpu.vector_store %arg36[%970, %c0_442], %969 {strides = array<i32>} : memref<2x128xf32, #tpu.memory_space<vmem>>, vector<1x128xf32>,
    %972 = arith.index_cast %964 : i32 to index
    %c0_443 = arith.constant 0 : index
    %973 = vector.load %arg37[%972, %c0_443] : memref<2x128xf32, #tpu.memory_space<vmem>>, vector<1x128xf32>
    %974 = arith.maximumf %973, %966 : vector<1x128xf32>
    %975 = arith.index_cast %964 : i32 to index
    %c0_444 = arith.constant 0 : index
    %976 = vector.load %arg37[%975, %c0_444] : memref<2x128xf32, #tpu.memory_space<vmem>>, vector<1x128xf32>
    tpu.vector_store %arg37[%975, %c0_444], %974 {strides = array<i32>} : memref<2x128xf32, #tpu.memory_space<vmem>>, vector<1x128xf32>,
    %c6_i32_445 = arith.constant 6 : i32
    %977 = arith.index_cast %c6_i32_445 : i32 to index
    %978 = memref.load %arg3[%977] : memref<12xi32, #tpu.memory_space<smem>>
    %979 = arith.index_cast %c6_i32_445 : i32 to index
    %c0_446 = arith.constant 0 : index
    %980 = vector.load %arg32[%979, %c0_446] : memref<12x128xf32, #tpu.memory_space<vmem>>, vector<1x128xf32>
    %981 = arith.index_cast %978 : i32 to index
    %c0_447 = arith.constant 0 : index
    %982 = vector.load %arg36[%981, %c0_447] : memref<2x128xf32, #tpu.memory_space<vmem>>, vector<1x128xf32>
    %983 = arith.addf %982, %980 : vector<1x128xf32>
    %984 = arith.index_cast %978 : i32 to index
    %c0_448 = arith.constant 0 : index
    %985 = vector.load %arg36[%984, %c0_448] : memref<2x128xf32, #tpu.memory_space<vmem>>, vector<1x128xf32>
    tpu.vector_store %arg36[%984, %c0_448], %983 {strides = array<i32>} : memref<2x128xf32, #tpu.memory_space<vmem>>, vector<1x128xf32>,
    %986 = arith.index_cast %978 : i32 to index
    %c0_449 = arith.constant 0 : index
    %987 = vector.load %arg37[%986, %c0_449] : memref<2x128xf32, #tpu.memory_space<vmem>>, vector<1x128xf32>
    %988 = arith.maximumf %987, %980 : vector<1x128xf32>
    %989 = arith.index_cast %978 : i32 to index
    %c0_450 = arith.constant 0 : index
    %990 = vector.load %arg37[%989, %c0_450] : memref<2x128xf32, #tpu.memory_space<vmem>>, vector<1x128xf32>
    tpu.vector_store %arg37[%989, %c0_450], %988 {strides = array<i32>} : memref<2x128xf32, #tpu.memory_space<vmem>>, vector<1x128xf32>,
    %c7_i32_451 = arith.constant 7 : i32
    %991 = arith.index_cast %c7_i32_451 : i32 to index
    %992 = memref.load %arg3[%991] : memref<12xi32, #tpu.memory_space<smem>>
    %993 = arith.index_cast %c7_i32_451 : i32 to index
    %c0_452 = arith.constant 0 : index
    %994 = vector.load %arg32[%993, %c0_452] : memref<12x128xf32, #tpu.memory_space<vmem>>, vector<1x128xf32>
    %995 = arith.index_cast %992 : i32 to index
    %c0_453 = arith.constant 0 : index
    %996 = vector.load %arg36[%995, %c0_453] : memref<2x128xf32, #tpu.memory_space<vmem>>, vector<1x128xf32>
    %997 = arith.addf %996, %994 : vector<1x128xf32>
    %998 = arith.index_cast %992 : i32 to index
    %c0_454 = arith.constant 0 : index
    %999 = vector.load %arg36[%998, %c0_454] : memref<2x128xf32, #tpu.memory_space<vmem>>, vector<1x128xf32>
    tpu.vector_store %arg36[%998, %c0_454], %997 {strides = array<i32>} : memref<2x128xf32, #tpu.memory_space<vmem>>, vector<1x128xf32>,
    %1000 = arith.index_cast %992 : i32 to index
    %c0_455 = arith.constant 0 : index
    %1001 = vector.load %arg37[%1000, %c0_455] : memref<2x128xf32, #tpu.memory_space<vmem>>, vector<1x128xf32>
    %1002 = arith.maximumf %1001, %994 : vector<1x128xf32>
    %1003 = arith.index_cast %992 : i32 to index
    %c0_456 = arith.constant 0 : index
    %1004 = vector.load %arg37[%1003, %c0_456] : memref<2x128xf32, #tpu.memory_space<vmem>>, vector<1x128xf32>
    tpu.vector_store %arg37[%1003, %c0_456], %1002 {strides = array<i32>} : memref<2x128xf32, #tpu.memory_space<vmem>>, vector<1x128xf32>,
    %c8_i32_457 = arith.constant 8 : i32
    %1005 = arith.index_cast %c8_i32_457 : i32 to index
    %1006 = memref.load %arg3[%1005] : memref<12xi32, #tpu.memory_space<smem>>
    %1007 = arith.index_cast %c8_i32_457 : i32 to index
    %c0_458 = arith.constant 0 : index
    %1008 = vector.load %arg32[%1007, %c0_458] : memref<12x128xf32, #tpu.memory_space<vmem>>, vector<1x128xf32>
    %1009 = arith.index_cast %1006 : i32 to index
    %c0_459 = arith.constant 0 : index
    %1010 = vector.load %arg36[%1009, %c0_459] : memref<2x128xf32, #tpu.memory_space<vmem>>, vector<1x128xf32>
    %1011 = arith.addf %1010, %1008 : vector<1x128xf32>
    %1012 = arith.index_cast %1006 : i32 to index
    %c0_460 = arith.constant 0 : index
    %1013 = vector.load %arg36[%1012, %c0_460] : memref<2x128xf32, #tpu.memory_space<vmem>>, vector<1x128xf32>
    tpu.vector_store %arg36[%1012, %c0_460], %1011 {strides = array<i32>} : memref<2x128xf32, #tpu.memory_space<vmem>>, vector<1x128xf32>,
    %1014 = arith.index_cast %1006 : i32 to index
    %c0_461 = arith.constant 0 : index
    %1015 = vector.load %arg37[%1014, %c0_461] : memref<2x128xf32, #tpu.memory_space<vmem>>, vector<1x128xf32>
    %1016 = arith.maximumf %1015, %1008 : vector<1x128xf32>
    %1017 = arith.index_cast %1006 : i32 to index
    %c0_462 = arith.constant 0 : index
    %1018 = vector.load %arg37[%1017, %c0_462] : memref<2x128xf32, #tpu.memory_space<vmem>>, vector<1x128xf32>
    tpu.vector_store %arg37[%1017, %c0_462], %1016 {strides = array<i32>} : memref<2x128xf32, #tpu.memory_space<vmem>>, vector<1x128xf32>,
    %c9_i32_463 = arith.constant 9 : i32
    %1019 = arith.index_cast %c9_i32_463 : i32 to index
    %1020 = memref.load %arg3[%1019] : memref<12xi32, #tpu.memory_space<smem>>
    %1021 = arith.index_cast %c9_i32_463 : i32 to index
    %c0_464 = arith.constant 0 : index
    %1022 = vector.load %arg32[%1021, %c0_464] : memref<12x128xf32, #tpu.memory_space<vmem>>, vector<1x128xf32>
    %1023 = arith.index_cast %1020 : i32 to index
    %c0_465 = arith.constant 0 : index
    %1024 = vector.load %arg36[%1023, %c0_465] : memref<2x128xf32, #tpu.memory_space<vmem>>, vector<1x128xf32>
    %1025 = arith.addf %1024, %1022 : vector<1x128xf32>
    %1026 = arith.index_cast %1020 : i32 to index
    %c0_466 = arith.constant 0 : index
    %1027 = vector.load %arg36[%1026, %c0_466] : memref<2x128xf32, #tpu.memory_space<vmem>>, vector<1x128xf32>
    tpu.vector_store %arg36[%1026, %c0_466], %1025 {strides = array<i32>} : memref<2x128xf32, #tpu.memory_space<vmem>>, vector<1x128xf32>,
    %1028 = arith.index_cast %1020 : i32 to index
    %c0_467 = arith.constant 0 : index
    %1029 = vector.load %arg37[%1028, %c0_467] : memref<2x128xf32, #tpu.memory_space<vmem>>, vector<1x128xf32>
    %1030 = arith.maximumf %1029, %1022 : vector<1x128xf32>
    %1031 = arith.index_cast %1020 : i32 to index
    %c0_468 = arith.constant 0 : index
    %1032 = vector.load %arg37[%1031, %c0_468] : memref<2x128xf32, #tpu.memory_space<vmem>>, vector<1x128xf32>
    tpu.vector_store %arg37[%1031, %c0_468], %1030 {strides = array<i32>} : memref<2x128xf32, #tpu.memory_space<vmem>>, vector<1x128xf32>,
    %c10_i32_469 = arith.constant 10 : i32
    %1033 = arith.index_cast %c10_i32_469 : i32 to index
    %1034 = memref.load %arg3[%1033] : memref<12xi32, #tpu.memory_space<smem>>
    %1035 = arith.index_cast %c10_i32_469 : i32 to index
    %c0_470 = arith.constant 0 : index
    %1036 = vector.load %arg32[%1035, %c0_470] : memref<12x128xf32, #tpu.memory_space<vmem>>, vector<1x128xf32>
    %1037 = arith.index_cast %1034 : i32 to index
    %c0_471 = arith.constant 0 : index
    %1038 = vector.load %arg36[%1037, %c0_471] : memref<2x128xf32, #tpu.memory_space<vmem>>, vector<1x128xf32>
    %1039 = arith.addf %1038, %1036 : vector<1x128xf32>
    %1040 = arith.index_cast %1034 : i32 to index
    %c0_472 = arith.constant 0 : index
    %1041 = vector.load %arg36[%1040, %c0_472] : memref<2x128xf32, #tpu.memory_space<vmem>>, vector<1x128xf32>
    tpu.vector_store %arg36[%1040, %c0_472], %1039 {strides = array<i32>} : memref<2x128xf32, #tpu.memory_space<vmem>>, vector<1x128xf32>,
    %1042 = arith.index_cast %1034 : i32 to index
    %c0_473 = arith.constant 0 : index
    %1043 = vector.load %arg37[%1042, %c0_473] : memref<2x128xf32, #tpu.memory_space<vmem>>, vector<1x128xf32>
    %1044 = arith.maximumf %1043, %1036 : vector<1x128xf32>
    %1045 = arith.index_cast %1034 : i32 to index
    %c0_474 = arith.constant 0 : index
    %1046 = vector.load %arg37[%1045, %c0_474] : memref<2x128xf32, #tpu.memory_space<vmem>>, vector<1x128xf32>
    tpu.vector_store %arg37[%1045, %c0_474], %1044 {strides = array<i32>} : memref<2x128xf32, #tpu.memory_space<vmem>>, vector<1x128xf32>,
    %c11_i32_475 = arith.constant 11 : i32
    %1047 = arith.index_cast %c11_i32_475 : i32 to index
    %1048 = memref.load %arg3[%1047] : memref<12xi32, #tpu.memory_space<smem>>
    %1049 = arith.index_cast %c11_i32_475 : i32 to index
    %c0_476 = arith.constant 0 : index
    %1050 = vector.load %arg32[%1049, %c0_476] : memref<12x128xf32, #tpu.memory_space<vmem>>, vector<1x128xf32>
    %1051 = arith.index_cast %1048 : i32 to index
    %c0_477 = arith.constant 0 : index
    %1052 = vector.load %arg36[%1051, %c0_477] : memref<2x128xf32, #tpu.memory_space<vmem>>, vector<1x128xf32>
    %1053 = arith.addf %1052, %1050 : vector<1x128xf32>
    %1054 = arith.index_cast %1048 : i32 to index
    %c0_478 = arith.constant 0 : index
    %1055 = vector.load %arg36[%1054, %c0_478] : memref<2x128xf32, #tpu.memory_space<vmem>>, vector<1x128xf32>
    tpu.vector_store %arg36[%1054, %c0_478], %1053 {strides = array<i32>} : memref<2x128xf32, #tpu.memory_space<vmem>>, vector<1x128xf32>,
    %1056 = arith.index_cast %1048 : i32 to index
    %c0_479 = arith.constant 0 : index
    %1057 = vector.load %arg37[%1056, %c0_479] : memref<2x128xf32, #tpu.memory_space<vmem>>, vector<1x128xf32>
    %1058 = arith.maximumf %1057, %1050 : vector<1x128xf32>
    %1059 = arith.index_cast %1048 : i32 to index
    %c0_480 = arith.constant 0 : index
    %1060 = vector.load %arg37[%1059, %c0_480] : memref<2x128xf32, #tpu.memory_space<vmem>>, vector<1x128xf32>
    tpu.vector_store %arg37[%1059, %c0_480], %1058 {strides = array<i32>} : memref<2x128xf32, #tpu.memory_space<vmem>>, vector<1x128xf32>,
    %c12_i32_481 = arith.constant 12 : i32
    %c0_482 = arith.constant 0 : index
    %c0_483 = arith.constant 0 : index
    %1061 = vector.load %arg36[%c0_482, %c0_483] : memref<2x128xf32, #tpu.memory_space<vmem>>, vector<2x128xf32>
    %c0_484 = arith.constant 0 : index
    %c0_485 = arith.constant 0 : index
    %1062 = vector.load %arg6[%c0_484, %c0_485] : memref<2x128xf32, #tpu.memory_space<vmem>>, vector<2x128xf32>
    %1063 = arith.mulf %1061, %1062 : vector<2x128xf32>
    %c0_486 = arith.constant 0 : index
    %c0_487 = arith.constant 0 : index
    %1064 = vector.load %arg37[%c0_486, %c0_487] : memref<2x128xf32, #tpu.memory_space<vmem>>, vector<2x128xf32>
    %cst_488 = arith.constant -1.500000e+38 : f32
    %1065 = vector.broadcast %cst_488 : f32 to vector<2x128xf32>
    %1066 = arith.cmpf ole, %1064, %1065 : vector<2x128xf32>
    %c0_489 = arith.constant 0 : index
    %c0_490 = arith.constant 0 : index
    %1067 = vector.load %arg37[%c0_489, %c0_490] : memref<2x128xf32, #tpu.memory_space<vmem>>, vector<2x128xf32>
    %cst_491 = arith.constant 0.000000e+00 : f32
    %1068 = vector.broadcast %cst_491 : f32 to vector<2x128xf32>
    %1069 = arith.select %1066, %1068, %1067 : vector<2x128xi1>, vector<2x128xf32>
    %1070 = arith.truncf %1063 : vector<2x128xf32> to vector<2x128xbf16>
    %c0_492 = arith.constant 0 : index
    %c0_493 = arith.constant 0 : index
    %c0_494 = arith.constant 0 : index
    %1071 = vector.load %arg16[%c0_492, %c0_493, %c0_494] : memref<3x128x128xbf16, #tpu.memory_space<vmem>>, vector<1x128x128xbf16>
    %1072 = vector.shape_cast %1071 : vector<1x128x128xbf16> to vector<128x128xbf16>
    %cst_495 = arith.constant dense<0.000000e+00> : vector<2x128xf32>
    %1073 = tpu.matmul %1070, %1072, %cst_495 {dimension_numbers = #tpu.dot_dimension_numbers<[1], [0], [0], [1], [0, 0, 1, 1], [], []>} : vector<2x128xbf16>, vector<128x128xbf16>, vector<2x128xf32> -> vector<2x128xf32>
    %1074 = arith.truncf %1061 : vector<2x128xf32> to vector<2x128xbf16>
    %c1_496 = arith.constant 1 : index
    %c0_497 = arith.constant 0 : index
    %c0_498 = arith.constant 0 : index
    %1075 = vector.load %arg16[%c1_496, %c0_497, %c0_498] : memref<3x128x128xbf16, #tpu.memory_space<vmem>>, vector<1x128x128xbf16>
    %1076 = vector.shape_cast %1075 : vector<1x128x128xbf16> to vector<128x128xbf16>
    %cst_499 = arith.constant dense<0.000000e+00> : vector<2x128xf32>
    %1077 = tpu.matmul %1074, %1076, %cst_499 {dimension_numbers = #tpu.dot_dimension_numbers<[1], [0], [0], [1], [0, 0, 1, 1], [], []>} : vector<2x128xbf16>, vector<128x128xbf16>, vector<2x128xf32> -> vector<2x128xf32>
    %1078 = arith.addf %1073, %1077 : vector<2x128xf32>
    %1079 = arith.truncf %1069 : vector<2x128xf32> to vector<2x128xbf16>
    %c2_500 = arith.constant 2 : index
    %c0_501 = arith.constant 0 : index
    %c0_502 = arith.constant 0 : index
    %1080 = vector.load %arg16[%c2_500, %c0_501, %c0_502] : memref<3x128x128xbf16, #tpu.memory_space<vmem>>, vector<1x128x128xbf16>
    %1081 = vector.shape_cast %1080 : vector<1x128x128xbf16> to vector<128x128xbf16>
    %cst_503 = arith.constant dense<0.000000e+00> : vector<2x128xf32>
    %1082 = tpu.matmul %1079, %1081, %cst_503 {dimension_numbers = #tpu.dot_dimension_numbers<[1], [0], [0], [1], [0, 0, 1, 1], [], []>} : vector<2x128xbf16>, vector<128x128xbf16>, vector<2x128xf32> -> vector<2x128xf32>
    %1083 = arith.addf %1078, %1082 : vector<2x128xf32>
    %c0_504 = arith.constant 0 : index
    %c0_505 = arith.constant 0 : index
    %1084 = vector.load %arg17[%c0_504, %c0_505] : memref<1x128xf32, #tpu.memory_space<vmem>>, vector<1x128xf32>
    %1085 = vector.broadcast %1084 : vector<1x128xf32> to vector<2x128xf32>
    %1086 = arith.addf %1083, %1085 : vector<2x128xf32>
    %cst_506 = arith.constant 0.000000e+00 : f32
    %1087 = vector.broadcast %cst_506 : f32 to vector<2x128xf32>
    %1088 = arith.maximumf %1086, %1087 : vector<2x128xf32>
    %c0_507 = arith.constant 0 : index
    %c0_508 = arith.constant 0 : index
    %1089 = vector.load %arg18[%c0_507, %c0_508] : memref<1x128xf32, #tpu.memory_space<vmem>>, vector<1x128xf32>
    %1090 = vector.broadcast %1089 : vector<1x128xf32> to vector<2x128xf32>
    %1091 = arith.mulf %1088, %1090 : vector<2x128xf32>
    %c0_509 = arith.constant 0 : index
    %c0_510 = arith.constant 0 : index
    %1092 = vector.load %arg19[%c0_509, %c0_510] : memref<1x128xf32, #tpu.memory_space<vmem>>, vector<1x128xf32>
    %1093 = vector.broadcast %1092 : vector<1x128xf32> to vector<2x128xf32>
    %1094 = arith.addf %1091, %1093 : vector<2x128xf32>
    %c0_511 = arith.constant 0 : index
    %c0_512 = arith.constant 0 : index
    %1095 = vector.load %arg28[%c0_511, %c0_512] : memref<2x128xf32, #tpu.memory_space<vmem>>, vector<2x128xf32>
    tpu.vector_store %arg28[%c0_511, %c0_512], %1094 {strides = array<i32>} : memref<2x128xf32, #tpu.memory_space<vmem>>, vector<2x128xf32>,
    %1096 = arith.truncf %1094 : vector<2x128xf32> to vector<2x128xbf16>
    %c0_513 = arith.constant 0 : index
    %c0_514 = arith.constant 0 : index
    %1097 = vector.load %arg20[%c0_513, %c0_514] : memref<128x128xbf16, #tpu.memory_space<vmem>>, vector<128x128xbf16>
    %cst_515 = arith.constant dense<0.000000e+00> : vector<2x128xf32>
    %1098 = tpu.matmul %1096, %1097, %cst_515 {dimension_numbers = #tpu.dot_dimension_numbers<[1], [0], [0], [1], [0, 0, 1, 1], [], []>} : vector<2x128xbf16>, vector<128x128xbf16>, vector<2x128xf32> -> vector<2x128xf32>
    %c0_516 = arith.constant 0 : index
    %c0_517 = arith.constant 0 : index
    %1099 = vector.load %arg21[%c0_516, %c0_517] : memref<1x128xf32, #tpu.memory_space<vmem>>, vector<1x128xf32>
    %1100 = vector.broadcast %1099 : vector<1x128xf32> to vector<2x128xf32>
    %1101 = arith.addf %1098, %1100 : vector<2x128xf32>
    %1102 = math.tanh %1101 : vector<2x128xf32>
    %c0_518 = arith.constant 0 : index
    %c0_519 = arith.constant 0 : index
    %1103 = vector.load %arg29[%c0_518, %c0_519] : memref<2x128xf32, #tpu.memory_space<vmem>>, vector<2x128xf32>
    tpu.vector_store %arg29[%c0_518, %c0_519], %1102 {strides = array<i32>} : memref<2x128xf32, #tpu.memory_space<vmem>>, vector<2x128xf32>,
    %c0_520 = arith.constant 0 : index
    %c0_521 = arith.constant 0 : index
    %1104 = vector.load %arg37[%c0_520, %c0_521] : memref<2x128xf32, #tpu.memory_space<vmem>>, vector<2x128xf32>
    tpu.vector_store %arg37[%c0_520, %c0_521], %1102 {strides = array<i32>} : memref<2x128xf32, #tpu.memory_space<vmem>>, vector<2x128xf32>,
    %c0_i32_522 = arith.constant 0 : i32
    %1105 = arith.index_cast %c0_i32_522 : i32 to index
    %1106 = memref.load %arg3[%1105] : memref<12xi32, #tpu.memory_space<smem>>
    %1107 = arith.index_cast %1106 : i32 to index
    %c0_523 = arith.constant 0 : index
    %1108 = vector.load %arg37[%1107, %c0_523] : memref<2x128xf32, #tpu.memory_space<vmem>>, vector<1x128xf32>
    %1109 = arith.index_cast %c0_i32_522 : i32 to index
    %c0_524 = arith.constant 0 : index
    %1110 = vector.load %arg35[%1109, %c0_524] : memref<12x128xf32, #tpu.memory_space<vmem>>, vector<1x128xf32>
    tpu.vector_store %arg35[%1109, %c0_524], %1108 {strides = array<i32>} : memref<12x128xf32, #tpu.memory_space<vmem>>, vector<1x128xf32>,
    %c1_i32_525 = arith.constant 1 : i32
    %1111 = arith.index_cast %c1_i32_525 : i32 to index
    %1112 = memref.load %arg3[%1111] : memref<12xi32, #tpu.memory_space<smem>>
    %1113 = arith.index_cast %1112 : i32 to index
    %c0_526 = arith.constant 0 : index
    %1114 = vector.load %arg37[%1113, %c0_526] : memref<2x128xf32, #tpu.memory_space<vmem>>, vector<1x128xf32>
    %1115 = arith.index_cast %c1_i32_525 : i32 to index
    %c0_527 = arith.constant 0 : index
    %1116 = vector.load %arg35[%1115, %c0_527] : memref<12x128xf32, #tpu.memory_space<vmem>>, vector<1x128xf32>
    tpu.vector_store %arg35[%1115, %c0_527], %1114 {strides = array<i32>} : memref<12x128xf32, #tpu.memory_space<vmem>>, vector<1x128xf32>,
    %c2_i32_528 = arith.constant 2 : i32
    %1117 = arith.index_cast %c2_i32_528 : i32 to index
    %1118 = memref.load %arg3[%1117] : memref<12xi32, #tpu.memory_space<smem>>
    %1119 = arith.index_cast %1118 : i32 to index
    %c0_529 = arith.constant 0 : index
    %1120 = vector.load %arg37[%1119, %c0_529] : memref<2x128xf32, #tpu.memory_space<vmem>>, vector<1x128xf32>
    %1121 = arith.index_cast %c2_i32_528 : i32 to index
    %c0_530 = arith.constant 0 : index
    %1122 = vector.load %arg35[%1121, %c0_530] : memref<12x128xf32, #tpu.memory_space<vmem>>, vector<1x128xf32>
    tpu.vector_store %arg35[%1121, %c0_530], %1120 {strides = array<i32>} : memref<12x128xf32, #tpu.memory_space<vmem>>, vector<1x128xf32>,
    %c3_i32_531 = arith.constant 3 : i32
    %1123 = arith.index_cast %c3_i32_531 : i32 to index
    %1124 = memref.load %arg3[%1123] : memref<12xi32, #tpu.memory_space<smem>>
    %1125 = arith.index_cast %1124 : i32 to index
    %c0_532 = arith.constant 0 : index
    %1126 = vector.load %arg37[%1125, %c0_532] : memref<2x128xf32, #tpu.memory_space<vmem>>, vector<1x128xf32>
    %1127 = arith.index_cast %c3_i32_531 : i32 to index
    %c0_533 = arith.constant 0 : index
    %1128 = vector.load %arg35[%1127, %c0_533] : memref<12x128xf32, #tpu.memory_space<vmem>>, vector<1x128xf32>
    tpu.vector_store %arg35[%1127, %c0_533], %1126 {strides = array<i32>} : memref<12x128xf32, #tpu.memory_space<vmem>>, vector<1x128xf32>,
    %c4_i32_534 = arith.constant 4 : i32
    %1129 = arith.index_cast %c4_i32_534 : i32 to index
    %1130 = memref.load %arg3[%1129] : memref<12xi32, #tpu.memory_space<smem>>
    %1131 = arith.index_cast %1130 : i32 to index
    %c0_535 = arith.constant 0 : index
    %1132 = vector.load %arg37[%1131, %c0_535] : memref<2x128xf32, #tpu.memory_space<vmem>>, vector<1x128xf32>
    %1133 = arith.index_cast %c4_i32_534 : i32 to index
    %c0_536 = arith.constant 0 : index
    %1134 = vector.load %arg35[%1133, %c0_536] : memref<12x128xf32, #tpu.memory_space<vmem>>, vector<1x128xf32>
    tpu.vector_store %arg35[%1133, %c0_536], %1132 {strides = array<i32>} : memref<12x128xf32, #tpu.memory_space<vmem>>, vector<1x128xf32>,
    %c5_i32_537 = arith.constant 5 : i32
    %1135 = arith.index_cast %c5_i32_537 : i32 to index
    %1136 = memref.load %arg3[%1135] : memref<12xi32, #tpu.memory_space<smem>>
    %1137 = arith.index_cast %1136 : i32 to index
    %c0_538 = arith.constant 0 : index
    %1138 = vector.load %arg37[%1137, %c0_538] : memref<2x128xf32, #tpu.memory_space<vmem>>, vector<1x128xf32>
    %1139 = arith.index_cast %c5_i32_537 : i32 to index
    %c0_539 = arith.constant 0 : index
    %1140 = vector.load %arg35[%1139, %c0_539] : memref<12x128xf32, #tpu.memory_space<vmem>>, vector<1x128xf32>
    tpu.vector_store %arg35[%1139, %c0_539], %1138 {strides = array<i32>} : memref<12x128xf32, #tpu.memory_space<vmem>>, vector<1x128xf32>,
    %c6_i32_540 = arith.constant 6 : i32
    %1141 = arith.index_cast %c6_i32_540 : i32 to index
    %1142 = memref.load %arg3[%1141] : memref<12xi32, #tpu.memory_space<smem>>
    %1143 = arith.index_cast %1142 : i32 to index
    %c0_541 = arith.constant 0 : index
    %1144 = vector.load %arg37[%1143, %c0_541] : memref<2x128xf32, #tpu.memory_space<vmem>>, vector<1x128xf32>
    %1145 = arith.index_cast %c6_i32_540 : i32 to index
    %c0_542 = arith.constant 0 : index
    %1146 = vector.load %arg35[%1145, %c0_542] : memref<12x128xf32, #tpu.memory_space<vmem>>, vector<1x128xf32>
    tpu.vector_store %arg35[%1145, %c0_542], %1144 {strides = array<i32>} : memref<12x128xf32, #tpu.memory_space<vmem>>, vector<1x128xf32>,
    %c7_i32_543 = arith.constant 7 : i32
    %1147 = arith.index_cast %c7_i32_543 : i32 to index
    %1148 = memref.load %arg3[%1147] : memref<12xi32, #tpu.memory_space<smem>>
    %1149 = arith.index_cast %1148 : i32 to index
    %c0_544 = arith.constant 0 : index
    %1150 = vector.load %arg37[%1149, %c0_544] : memref<2x128xf32, #tpu.memory_space<vmem>>, vector<1x128xf32>
    %1151 = arith.index_cast %c7_i32_543 : i32 to index
    %c0_545 = arith.constant 0 : index
    %1152 = vector.load %arg35[%1151, %c0_545] : memref<12x128xf32, #tpu.memory_space<vmem>>, vector<1x128xf32>
    tpu.vector_store %arg35[%1151, %c0_545], %1150 {strides = array<i32>} : memref<12x128xf32, #tpu.memory_space<vmem>>, vector<1x128xf32>,
    %c8_i32_546 = arith.constant 8 : i32
    %1153 = arith.index_cast %c8_i32_546 : i32 to index
    %1154 = memref.load %arg3[%1153] : memref<12xi32, #tpu.memory_space<smem>>
    %1155 = arith.index_cast %1154 : i32 to index
    %c0_547 = arith.constant 0 : index
    %1156 = vector.load %arg37[%1155, %c0_547] : memref<2x128xf32, #tpu.memory_space<vmem>>, vector<1x128xf32>
    %1157 = arith.index_cast %c8_i32_546 : i32 to index
    %c0_548 = arith.constant 0 : index
    %1158 = vector.load %arg35[%1157, %c0_548] : memref<12x128xf32, #tpu.memory_space<vmem>>, vector<1x128xf32>
    tpu.vector_store %arg35[%1157, %c0_548], %1156 {strides = array<i32>} : memref<12x128xf32, #tpu.memory_space<vmem>>, vector<1x128xf32>,
    %c9_i32_549 = arith.constant 9 : i32
    %1159 = arith.index_cast %c9_i32_549 : i32 to index
    %1160 = memref.load %arg3[%1159] : memref<12xi32, #tpu.memory_space<smem>>
    %1161 = arith.index_cast %1160 : i32 to index
    %c0_550 = arith.constant 0 : index
    %1162 = vector.load %arg37[%1161, %c0_550] : memref<2x128xf32, #tpu.memory_space<vmem>>, vector<1x128xf32>
    %1163 = arith.index_cast %c9_i32_549 : i32 to index
    %c0_551 = arith.constant 0 : index
    %1164 = vector.load %arg35[%1163, %c0_551] : memref<12x128xf32, #tpu.memory_space<vmem>>, vector<1x128xf32>
    tpu.vector_store %arg35[%1163, %c0_551], %1162 {strides = array<i32>} : memref<12x128xf32, #tpu.memory_space<vmem>>, vector<1x128xf32>,
    %c10_i32_552 = arith.constant 10 : i32
    %1165 = arith.index_cast %c10_i32_552 : i32 to index
    %1166 = memref.load %arg3[%1165] : memref<12xi32, #tpu.memory_space<smem>>
    %1167 = arith.index_cast %1166 : i32 to index
    %c0_553 = arith.constant 0 : index
    %1168 = vector.load %arg37[%1167, %c0_553] : memref<2x128xf32, #tpu.memory_space<vmem>>, vector<1x128xf32>
    %1169 = arith.index_cast %c10_i32_552 : i32 to index
    %c0_554 = arith.constant 0 : index
    %1170 = vector.load %arg35[%1169, %c0_554] : memref<12x128xf32, #tpu.memory_space<vmem>>, vector<1x128xf32>
    tpu.vector_store %arg35[%1169, %c0_554], %1168 {strides = array<i32>} : memref<12x128xf32, #tpu.memory_space<vmem>>, vector<1x128xf32>,
    %c11_i32_555 = arith.constant 11 : i32
    %1171 = arith.index_cast %c11_i32_555 : i32 to index
    %1172 = memref.load %arg3[%1171] : memref<12xi32, #tpu.memory_space<smem>>
    %1173 = arith.index_cast %1172 : i32 to index
    %c0_556 = arith.constant 0 : index
    %1174 = vector.load %arg37[%1173, %c0_556] : memref<2x128xf32, #tpu.memory_space<vmem>>, vector<1x128xf32>
    %1175 = arith.index_cast %c11_i32_555 : i32 to index
    %c0_557 = arith.constant 0 : index
    %1176 = vector.load %arg35[%1175, %c0_557] : memref<12x128xf32, #tpu.memory_space<vmem>>, vector<1x128xf32>
    tpu.vector_store %arg35[%1175, %c0_557], %1174 {strides = array<i32>} : memref<12x128xf32, #tpu.memory_space<vmem>>, vector<1x128xf32>,
    %c12_i32_558 = arith.constant 12 : i32
    %c0_559 = arith.constant 0 : index
    %c0_560 = arith.constant 0 : index
    %1177 = vector.load %arg35[%c0_559, %c0_560] : memref<12x128xf32, #tpu.memory_space<vmem>>, vector<12x128xf32>
    %1178 = arith.truncf %1177 : vector<12x128xf32> to vector<12x128xbf16>
    %c0_561 = arith.constant 0 : index
    %c0_562 = arith.constant 0 : index
    %1179 = vector.load %arg22[%c0_561, %c0_562] : memref<128x128xbf16, #tpu.memory_space<vmem>>, vector<128x128xbf16>
    %cst_563 = arith.constant dense<0.000000e+00> : vector<12x128xf32>
    %1180 = tpu.matmul %1178, %1179, %cst_563 {dimension_numbers = #tpu.dot_dimension_numbers<[1], [0], [0], [1], [0, 0, 1, 1], [], []>} : vector<12x128xbf16>, vector<128x128xbf16>, vector<12x128xf32> -> vector<12x128xf32>
    %c0_564 = arith.constant 0 : index
    %c0_565 = arith.constant 0 : index
    %1181 = vector.load %arg23[%c0_564, %c0_565] : memref<1x128xf32, #tpu.memory_space<vmem>>, vector<1x128xf32>
    %1182 = vector.broadcast %1181 : vector<1x128xf32> to vector<12x128xf32>
    %1183 = arith.addf %1180, %1182 : vector<12x128xf32>
    %cst_566 = arith.constant 0.000000e+00 : f32
    %1184 = vector.broadcast %cst_566 : f32 to vector<12x128xf32>
    %1185 = arith.maximumf %1183, %1184 : vector<12x128xf32>
    %c0_567 = arith.constant 0 : index
    %c0_568 = arith.constant 0 : index
    %1186 = vector.load %arg24[%c0_567, %c0_568] : memref<1x128xf32, #tpu.memory_space<vmem>>, vector<1x128xf32>
    %1187 = vector.broadcast %1186 : vector<1x128xf32> to vector<12x128xf32>
    %1188 = arith.mulf %1185, %1187 : vector<12x128xf32>
    %c0_569 = arith.constant 0 : index
    %c0_570 = arith.constant 0 : index
    %1189 = vector.load %arg25[%c0_569, %c0_570] : memref<1x128xf32, #tpu.memory_space<vmem>>, vector<1x128xf32>
    %1190 = vector.broadcast %1189 : vector<1x128xf32> to vector<12x128xf32>
    %1191 = arith.addf %1188, %1190 : vector<12x128xf32>
    %1192 = arith.truncf %1191 : vector<12x128xf32> to vector<12x128xbf16>
    %c0_571 = arith.constant 0 : index
    %c0_572 = arith.constant 0 : index
    %1193 = vector.load %arg26[%c0_571, %c0_572] : memref<128x128xbf16, #tpu.memory_space<vmem>>, vector<128x128xbf16>
    %cst_573 = arith.constant dense<0.000000e+00> : vector<12x128xf32>
    %1194 = tpu.matmul %1192, %1193, %cst_573 {dimension_numbers = #tpu.dot_dimension_numbers<[1], [0], [0], [1], [0, 0, 1, 1], [], []>} : vector<12x128xbf16>, vector<128x128xbf16>, vector<12x128xf32> -> vector<12x128xf32>
    %c0_574 = arith.constant 0 : index
    %c0_575 = arith.constant 0 : index
    %1195 = vector.load %arg27[%c0_574, %c0_575] : memref<1x128xf32, #tpu.memory_space<vmem>>, vector<1x128xf32>
    %1196 = vector.broadcast %1195 : vector<1x128xf32> to vector<12x128xf32>
    %1197 = arith.addf %1194, %1196 : vector<12x128xf32>
    %c0_576 = arith.constant 0 : index
    %c0_577 = arith.constant 0 : index
    %1198 = vector.load %arg30[%c0_576, %c0_577] : memref<12x128xf32, #tpu.memory_space<vmem>>, vector<12x128xf32>
    tpu.vector_store %arg30[%c0_576, %c0_577], %1197 {strides = array<i32>} : memref<12x128xf32, #tpu.memory_space<vmem>>, vector<12x128xf32>,
    return
  }
  func.func @transform_0(%arg0: i32, %arg1: memref<16xi32, #tpu.memory_space<smem>>, %arg2: memref<16xi32, #tpu.memory_space<smem>>, %arg3: memref<12xi32, #tpu.memory_space<smem>>) -> (i32, i32) {
    %c0_i32 = arith.constant 0 : i32
    %c0_i32_0 = arith.constant 0 : i32
    %c0_i32_1 = arith.constant 0 : i32
    return %c0_i32, %c0_i32_0 : i32, i32
  }
  func.func @transform_1(%arg0: i32, %arg1: memref<16xi32, #tpu.memory_space<smem>>, %arg2: memref<16xi32, #tpu.memory_space<smem>>, %arg3: memref<12xi32, #tpu.memory_space<smem>>) -> (i32, i32) {
    %c0_i32 = arith.constant 0 : i32
    %c0_i32_0 = arith.constant 0 : i32
    %c0_i32_1 = arith.constant 0 : i32
    return %c0_i32, %c0_i32_0 : i32, i32
  }
  func.func @transform_2(%arg0: i32, %arg1: memref<16xi32, #tpu.memory_space<smem>>, %arg2: memref<16xi32, #tpu.memory_space<smem>>, %arg3: memref<12xi32, #tpu.memory_space<smem>>) -> (i32, i32) {
    %c0_i32 = arith.constant 0 : i32
    %c0_i32_0 = arith.constant 0 : i32
    %c0_i32_1 = arith.constant 0 : i32
    return %c0_i32, %c0_i32_0 : i32, i32
  }
  func.func @transform_3(%arg0: i32, %arg1: memref<16xi32, #tpu.memory_space<smem>>, %arg2: memref<16xi32, #tpu.memory_space<smem>>, %arg3: memref<12xi32, #tpu.memory_space<smem>>) -> (i32, i32) {
    %c0_i32 = arith.constant 0 : i32
    %c0_i32_0 = arith.constant 0 : i32
    %c0_i32_1 = arith.constant 0 : i32
    return %c0_i32, %c0_i32_0 : i32, i32
  }
  func.func @transform_4(%arg0: i32, %arg1: memref<16xi32, #tpu.memory_space<smem>>, %arg2: memref<16xi32, #tpu.memory_space<smem>>, %arg3: memref<12xi32, #tpu.memory_space<smem>>) -> (i32, i32) {
    %c0_i32 = arith.constant 0 : i32
    %c0_i32_0 = arith.constant 0 : i32
    %c0_i32_1 = arith.constant 0 : i32
    return %c0_i32, %c0_i32_0 : i32, i32
  }
  func.func @transform_5(%arg0: i32, %arg1: memref<16xi32, #tpu.memory_space<smem>>, %arg2: memref<16xi32, #tpu.memory_space<smem>>, %arg3: memref<12xi32, #tpu.memory_space<smem>>) -> (i32, i32) {
    %c0_i32 = arith.constant 0 : i32
    %c0_i32_0 = arith.constant 0 : i32
    %c0_i32_1 = arith.constant 0 : i32
    return %c0_i32, %c0_i32_0 : i32, i32
  }
  func.func @transform_6(%arg0: i32, %arg1: memref<16xi32, #tpu.memory_space<smem>>, %arg2: memref<16xi32, #tpu.memory_space<smem>>, %arg3: memref<12xi32, #tpu.memory_space<smem>>) -> (i32, i32) {
    %c0_i32 = arith.constant 0 : i32
    %c0_i32_0 = arith.constant 0 : i32
    %c0_i32_1 = arith.constant 0 : i32
    return %c0_i32, %c0_i32_0 : i32, i32
  }
  func.func @transform_7(%arg0: i32, %arg1: memref<16xi32, #tpu.memory_space<smem>>, %arg2: memref<16xi32, #tpu.memory_space<smem>>, %arg3: memref<12xi32, #tpu.memory_space<smem>>) -> (i32, i32, i32) {
    %c0_i32 = arith.constant 0 : i32
    %c0_i32_0 = arith.constant 0 : i32
    %c0_i32_1 = arith.constant 0 : i32
    %c0_i32_2 = arith.constant 0 : i32
    return %c0_i32, %c0_i32_0, %c0_i32_1 : i32, i32, i32
  }
  func.func @transform_8(%arg0: i32, %arg1: memref<16xi32, #tpu.memory_space<smem>>, %arg2: memref<16xi32, #tpu.memory_space<smem>>, %arg3: memref<12xi32, #tpu.memory_space<smem>>) -> (i32, i32, i32) {
    %c0_i32 = arith.constant 0 : i32
    %c0_i32_0 = arith.constant 0 : i32
    %c0_i32_1 = arith.constant 0 : i32
    %c0_i32_2 = arith.constant 0 : i32
    return %c0_i32, %c0_i32_0, %c0_i32_1 : i32, i32, i32
  }
  func.func @transform_9(%arg0: i32, %arg1: memref<16xi32, #tpu.memory_space<smem>>, %arg2: memref<16xi32, #tpu.memory_space<smem>>, %arg3: memref<12xi32, #tpu.memory_space<smem>>) -> (i32, i32, i32) {
    %c0_i32 = arith.constant 0 : i32
    %c0_i32_0 = arith.constant 0 : i32
    %c0_i32_1 = arith.constant 0 : i32
    %c0_i32_2 = arith.constant 0 : i32
    return %c0_i32, %c0_i32_0, %c0_i32_1 : i32, i32, i32
  }
  func.func @transform_10(%arg0: i32, %arg1: memref<16xi32, #tpu.memory_space<smem>>, %arg2: memref<16xi32, #tpu.memory_space<smem>>, %arg3: memref<12xi32, #tpu.memory_space<smem>>) -> (i32, i32, i32) {
    %c0_i32 = arith.constant 0 : i32
    %c0_i32_0 = arith.constant 0 : i32
    %c0_i32_1 = arith.constant 0 : i32
    %c0_i32_2 = arith.constant 0 : i32
    return %c0_i32, %c0_i32_0, %c0_i32_1 : i32, i32, i32
  }
  func.func @transform_11(%arg0: i32, %arg1: memref<16xi32, #tpu.memory_space<smem>>, %arg2: memref<16xi32, #tpu.memory_space<smem>>, %arg3: memref<12xi32, #tpu.memory_space<smem>>) -> (i32, i32, i32) {
    %c0_i32 = arith.constant 0 : i32
    %c0_i32_0 = arith.constant 0 : i32
    %c0_i32_1 = arith.constant 0 : i32
    %c0_i32_2 = arith.constant 0 : i32
    return %c0_i32, %c0_i32_0, %c0_i32_1 : i32, i32, i32
  }
  func.func @transform_12(%arg0: i32, %arg1: memref<16xi32, #tpu.memory_space<smem>>, %arg2: memref<16xi32, #tpu.memory_space<smem>>, %arg3: memref<12xi32, #tpu.memory_space<smem>>) -> (i32, i32, i32) {
    %c0_i32 = arith.constant 0 : i32
    %c0_i32_0 = arith.constant 0 : i32
    %c0_i32_1 = arith.constant 0 : i32
    %c0_i32_2 = arith.constant 0 : i32
    return %c0_i32, %c0_i32_0, %c0_i32_1 : i32, i32, i32
  }
  func.func @transform_13(%arg0: i32, %arg1: memref<16xi32, #tpu.memory_space<smem>>, %arg2: memref<16xi32, #tpu.memory_space<smem>>, %arg3: memref<12xi32, #tpu.memory_space<smem>>) -> (i32, i32) {
    %c0_i32 = arith.constant 0 : i32
    %c0_i32_0 = arith.constant 0 : i32
    %c0_i32_1 = arith.constant 0 : i32
    return %c0_i32, %c0_i32_0 : i32, i32
  }
  func.func @transform_14(%arg0: i32, %arg1: memref<16xi32, #tpu.memory_space<smem>>, %arg2: memref<16xi32, #tpu.memory_space<smem>>, %arg3: memref<12xi32, #tpu.memory_space<smem>>) -> (i32, i32) {
    %c0_i32 = arith.constant 0 : i32
    %c0_i32_0 = arith.constant 0 : i32
    %c0_i32_1 = arith.constant 0 : i32
    return %c0_i32, %c0_i32_0 : i32, i32
  }
  func.func @transform_15(%arg0: i32, %arg1: memref<16xi32, #tpu.memory_space<smem>>, %arg2: memref<16xi32, #tpu.memory_space<smem>>, %arg3: memref<12xi32, #tpu.memory_space<smem>>) -> (i32, i32) {
    %c0_i32 = arith.constant 0 : i32
    %c0_i32_0 = arith.constant 0 : i32
    %c0_i32_1 = arith.constant 0 : i32
    return %c0_i32, %c0_i32_0 : i32, i32
  }
  func.func @transform_16(%arg0: i32, %arg1: memref<16xi32, #tpu.memory_space<smem>>, %arg2: memref<16xi32, #tpu.memory_space<smem>>, %arg3: memref<12xi32, #tpu.memory_space<smem>>) -> (i32, i32) {
    %c0_i32 = arith.constant 0 : i32
    %c0_i32_0 = arith.constant 0 : i32
    %c0_i32_1 = arith.constant 0 : i32
    return %c0_i32, %c0_i32_0 : i32, i32
  }
  func.func @transform_17(%arg0: i32, %arg1: memref<16xi32, #tpu.memory_space<smem>>, %arg2: memref<16xi32, #tpu.memory_space<smem>>, %arg3: memref<12xi32, #tpu.memory_space<smem>>) -> (i32, i32) {
    %c0_i32 = arith.constant 0 : i32
    %c0_i32_0 = arith.constant 0 : i32
    %c0_i32_1 = arith.constant 0 : i32
    return %c0_i32, %c0_i32_0 : i32, i32
  }
  func.func @transform_18(%arg0: i32, %arg1: memref<16xi32, #tpu.memory_space<smem>>, %arg2: memref<16xi32, #tpu.memory_space<smem>>, %arg3: memref<12xi32, #tpu.memory_space<smem>>) -> (i32, i32) {
    %c0_i32 = arith.constant 0 : i32
    %c0_i32_0 = arith.constant 0 : i32
    %c0_i32_1 = arith.constant 0 : i32
    return %c0_i32, %c0_i32_0 : i32, i32
  }
  func.func @transform_19(%arg0: i32, %arg1: memref<16xi32, #tpu.memory_space<smem>>, %arg2: memref<16xi32, #tpu.memory_space<smem>>, %arg3: memref<12xi32, #tpu.memory_space<smem>>) -> (i32, i32) {
    %c0_i32 = arith.constant 0 : i32
    %c0_i32_0 = arith.constant 0 : i32
    %c0_i32_1 = arith.constant 0 : i32
    return %c0_i32, %c0_i32_0 : i32, i32
  }
  func.func @transform_20(%arg0: i32, %arg1: memref<16xi32, #tpu.memory_space<smem>>, %arg2: memref<16xi32, #tpu.memory_space<smem>>, %arg3: memref<12xi32, #tpu.memory_space<smem>>) -> (i32, i32) {
    %c0_i32 = arith.constant 0 : i32
    %c0_i32_0 = arith.constant 0 : i32
    %c0_i32_1 = arith.constant 0 : i32
    return %c0_i32, %c0_i32_0 : i32, i32
  }
  func.func @transform_21(%arg0: i32, %arg1: memref<16xi32, #tpu.memory_space<smem>>, %arg2: memref<16xi32, #tpu.memory_space<smem>>, %arg3: memref<12xi32, #tpu.memory_space<smem>>) -> (i32, i32) {
    %c0_i32 = arith.constant 0 : i32
    %c0_i32_0 = arith.constant 0 : i32
    %c0_i32_1 = arith.constant 0 : i32
    return %c0_i32, %c0_i32_0 : i32, i32
  }
  func.func @transform_22(%arg0: i32, %arg1: memref<16xi32, #tpu.memory_space<smem>>, %arg2: memref<16xi32, #tpu.memory_space<smem>>, %arg3: memref<12xi32, #tpu.memory_space<smem>>) -> (i32, i32) {
    %c0_i32 = arith.constant 0 : i32
    %c0_i32_0 = arith.constant 0 : i32
    %c0_i32_1 = arith.constant 0 : i32
    return %c0_i32, %c0_i32_0 : i32, i32
  }
  func.func @transform_23(%arg0: i32, %arg1: memref<16xi32, #tpu.memory_space<smem>>, %arg2: memref<16xi32, #tpu.memory_space<smem>>, %arg3: memref<12xi32, #tpu.memory_space<smem>>) -> (i32, i32) {
    %c0_i32 = arith.constant 0 : i32
    %c0_i32_0 = arith.constant 0 : i32
    %c0_i32_1 = arith.constant 0 : i32
    return %c0_i32, %c0_i32_0 : i32, i32
  }
  func.func @transform_24(%arg0: i32, %arg1: memref<16xi32, #tpu.memory_space<smem>>, %arg2: memref<16xi32, #tpu.memory_space<smem>>, %arg3: memref<12xi32, #tpu.memory_space<smem>>) -> (i32, i32) {
    %c0_i32 = arith.constant 0 : i32
    %c0_i32_0 = arith.constant 0 : i32
    %c0_i32_1 = arith.constant 0 : i32
    return %c0_i32, %c0_i32_0 : i32, i32
  }
  func.func @transform_25(%arg0: i32, %arg1: memref<16xi32, #tpu.memory_space<smem>>, %arg2: memref<16xi32, #tpu.memory_space<smem>>, %arg3: memref<12xi32, #tpu.memory_space<smem>>) -> (i32, i32) {
    %c0_i32 = arith.constant 0 : i32
    %c0_i32_0 = arith.constant 0 : i32
    %c0_i32_1 = arith.constant 0 : i32
    return %c0_i32, %c0_i32_0 : i32, i32
  }
  func.func @transform_26(%arg0: i32, %arg1: memref<16xi32, #tpu.memory_space<smem>>, %arg2: memref<16xi32, #tpu.memory_space<smem>>, %arg3: memref<12xi32, #tpu.memory_space<smem>>) -> (i32, i32) {
    %c0_i32 = arith.constant 0 : i32
    %c0_i32_0 = arith.constant 0 : i32
    %c0_i32_1 = arith.constant 0 : i32
    return %c0_i32, %c0_i32_0 : i32, i32
  }
}

</mosaic_0001>

<llo_original>
// kernel: wln_forward.1
$region0: #{wln_forward.1}
  #allocation0 [shape = 'u32[]', space=smem, size = 0x4, offset = 0x4, fixed_abs, tag = 'smem constant byte address 0x4 - core index']
  #allocation1 [shape = 'u32[72,128]{1,0:T(1,128)}', space=vmem, size = 0x9000, scoped, tag = 'internal scratch']
  #allocation2 [shape = 'f32[12,128]{1,0:T(8,128)}', space=vmem, size = 0x2000, scoped, tag = 'scratch operand']
  #allocation3 [shape = 'f32[12,128]{1,0:T(8,128)}', space=vmem, size = 0x2000, scoped, tag = 'scratch operand']
  #allocation4 [shape = 'f32[12,128]{1,0:T(8,128)}', space=vmem, size = 0x2000, scoped, tag = 'scratch operand']
  #allocation5 [shape = 'f32[16,128]{1,0:T(8,128)}', space=vmem, size = 0x2000, scoped, tag = 'scratch operand']
  #allocation6 [shape = 'f32[12,128]{1,0:T(8,128)}', space=vmem, size = 0x2000, scoped, tag = 'scratch operand']
  #allocation7 [shape = 'f32[2,128]{1,0:T(2,128)}', space=vmem, size = 0x400, scoped, tag = 'scratch operand']
  #allocation8 [shape = 'f32[2,128]{1,0:T(2,128)}', space=vmem, size = 0x400, scoped, tag = 'scratch operand']
  #allocation9 [shape = 's32[1]{0}', space=sflag, size = 0x4, scoped, tag = 'scoped memory for wln_forward.1']
  #allocation10 [shape = 'u8[512]{0}', space=smem, size = 0x200, scoped, tag = 'prefetched SMEM operand 0']
  #allocation11 [shape = 'u8[512]{0}', space=smem, size = 0x200, scoped, tag = 'prefetched SMEM operand 1']
  #allocation12 [shape = 'u8[512]{0}', space=smem, size = 0x200, scoped, tag = 'prefetched SMEM operand 2']
  %s0 = inlined_call_operand.smem [shape: u32[30], index: -1, kind: input, shape index: {}]
  %s1 = sld [smem:[%s0]]
  %s2 = scalar_lea.smem %s0, 1
  %s3 = sld [smem:[%s2]]
  %s4 = scalar_lea.smem %s0, 2
  %s5 = sld [smem:[%s4]]
  %s6 = scalar_lea.smem %s0, 3
  %s7 = sld [smem:[%s6]]
  %s8 = scalar_lea.smem %s0, 4
  %s9 = sld [smem:[%s8]]
  %s10 = scalar_lea.smem %s0, 5
  %s11 = sld [smem:[%s10]]
  %s12 = scalar_lea.smem %s0, 6
  %s13 = sld [smem:[%s12]]
  %s14 = scalar_lea.smem %s0, 7
  %s15 = sld [smem:[%s14]]
  %s16 = scalar_lea.smem %s0, 8
  %s17 = sld [smem:[%s16]]
  %s18 = scalar_lea.smem %s0, 9
  %s19 = sld [smem:[%s18]]
  %s20 = scalar_lea.smem %s0, 10
  %s21 = sld [smem:[%s20]]
  %s22 = scalar_lea.smem %s0, 11
  %s23 = sld [smem:[%s22]]
  %s24 = scalar_lea.smem %s0, 12
  %s25 = sld [smem:[%s24]]
  %s26 = scalar_lea.smem %s0, 13
  %s27 = sld [smem:[%s26]]
  %s28 = scalar_lea.smem %s0, 14
  %s29 = sld [smem:[%s28]]
  %s30 = scalar_lea.smem %s0, 15
  %s31 = sld [smem:[%s30]]
  %s32 = scalar_lea.smem %s0, 16
  %s33 = sld [smem:[%s32]]
  %s34 = scalar_lea.smem %s0, 17
  %s35 = sld [smem:[%s34]]
  %s36 = scalar_lea.smem %s0, 18
  %s37 = sld [smem:[%s36]]
  %s38 = scalar_lea.smem %s0, 19
  %s39 = sld [smem:[%s38]]
  %s40 = scalar_lea.smem %s0, 20
  %s41 = sld [smem:[%s40]]
  %s42 = scalar_lea.smem %s0, 21
  %s43 = sld [smem:[%s42]]
  %s44 = scalar_lea.smem %s0, 22
  %s45 = sld [smem:[%s44]]
  %s46 = scalar_lea.smem %s0, 23
  %s47 = sld [smem:[%s46]]
  %s48 = scalar_lea.smem %s0, 24
  %s49 = sld [smem:[%s48]]
  %s50 = scalar_lea.smem %s0, 25
  %s51 = sld [smem:[%s50]]
  %s52 = scalar_lea.smem %s0, 26
  %s53 = sld [smem:[%s52]]
  %s54 = scalar_lea.smem %s0, 27
  %s55 = sld [smem:[%s54]]
  %s56 = scalar_lea.smem %s0, 28
  %s57 = sld [smem:[%s56]]
  %s58 = scalar_lea.smem %s0, 29
  %s59 = sld [smem:[%s58]]
  %60 = xla_tuple %s55, %s57, %s59
  %s61 = sld [smem:[#allocation0]]
  $region150: #{wln_forward.1} parent=0
    _
  %s63 = ssub.s32 1, %s61
  %s64 = scalar_select 0, %s63, %s61
  %s66 = sshll.u32 %s1, 4
  %s67 = int_to_ptr.vmem [resolvable:$true] %s66
  %69 = dma.vmem_to_smem %s67, 16, [#allocation10], [#allocation9]
  %s71 = sshll.u32 %s3, 4
  %s72 = int_to_ptr.vmem [resolvable:$true] %s71
  %74 = dma.vmem_to_smem %s72, 16, [#allocation11], [#allocation9]
  %s76 = sshll.u32 %s5, 4
  %s77 = int_to_ptr.vmem [resolvable:$true] %s76
  %79 = dma.vmem_to_smem %s77, 16, [#allocation12], [#allocation9]
  %81 = dma.done [#allocation9], 48
  %82 = sfence
  $region1: #{wln_forward.1} parent=0
    #allocation13 [shape = 'u8[32768]{0}', space=vmem, size = 0x8000, scoped, tag = 'input window, operand 6, single buffered']
    #allocation14 [shape = 's32[1]{0}', space=sflag, size = 0x4, scoped, tag = 'scoped memory for wln_forward.1']
    #allocation15 [shape = 's32[1]{0}', space=sflag, size = 0x4, scoped, tag = 'scoped memory for wln_forward.1']
    #allocation16 [shape = 'u8[98304]{0}', space=vmem, size = 0x18000, scoped, tag = 'input window, operand 10, single buffered']
    #allocation17 [shape = 's32[1]{0}', space=sflag, size = 0x4, scoped, tag = 'scoped memory for wln_forward.1']
    #allocation18 [shape = 'u8[98304]{0}', space=vmem, size = 0x18000, scoped, tag = 'input window, operand 11, single buffered']
    #allocation19 [shape = 'u8[98304]{0}', space=vmem, size = 0x18000, scoped, tag = 'input window, operand 15, single buffered']
    #allocation20 [shape = 's32[1]{0}', space=sflag, size = 0x4, scoped, tag = 'scoped memory for wln_forward.1']
    #allocation21 [shape = 'u8[32768]{0}', space=vmem, size = 0x8000, scoped, tag = 'input window, operand 19, single buffered']
    #allocation22 [shape = 'u8[32768]{0}', space=vmem, size = 0x8000, scoped, tag = 'input window, operand 21, single buffered']
    #allocation23 [shape = 's32[1]{0}', space=sflag, size = 0x4, scoped, tag = 'scoped memory for wln_forward.1']
    #allocation24 [shape = 'u8[32768]{0}', space=vmem, size = 0x8000, scoped, tag = 'input window, operand 25, single buffered']
    #allocation25 [shape = 'u8[1024]{0}', space=vmem, size = 0x400, scoped, tag = 'output window, operand 1, single buffered']
    %83 = vsyncpa [#allocation14], 0
    %84 = vsyncpa [#allocation17], 0
    %85 = vsyncpa [#allocation20], 0
    %86 = vsyncpa [#allocation23], 0
    %87 = vsyncpa [#allocation15], 0
    // Predicated region
    $region2: #{wln_forward.1} parent=1 // pred_check
      _
    $region3: #{wln_forward.1} parent=1 // pred_check_branch
      %89 = sbr.rel (0) target = $region5
    $region4: #{wln_forward.1} parent=1 // pred_region
      _
    $region5: #{wln_forward.1} parent=1 // pred_fallthru
      _
    // Predicated region
    $region6: #{wln_forward.1} parent=1 // pred_check
      _
    $region7: #{wln_forward.1} parent=1 // pred_check_branch
      %91 = sbr.rel (0) target = $region9
    $region8: #{wln_forward.1} parent=1 // pred_region
      _
    $region9: #{wln_forward.1} parent=1 // pred_fallthru
      _
    // Predicated region
    $region10: #{wln_forward.1} parent=1 // pred_check
      _
    $region11: #{wln_forward.1} parent=1 // pred_check_branch
      %93 = sbr.rel (0) target = $region13
    $region12: #{wln_forward.1} parent=1 // pred_region
      _
    $region13: #{wln_forward.1} parent=1 // pred_fallthru
      _
    // Predicated region
    $region14: #{wln_forward.1} parent=1 // pred_check
      _
    $region15: #{wln_forward.1} parent=1 // pred_check_branch
      %95 = sbr.rel (0) target = $region17
    $region16: #{wln_forward.1} parent=1 // pred_region
      %97 = vsyncadd [#allocation14], 0
      %s98 = sshll.u32 %s13, 4
      %s99 = int_to_ptr.hbm [resolvable:$true] %s98
      %s100 = sshll.u32 [#allocation13], 4
      %s101 = int_to_ptr.vmem [resolvable:$true] %s100
      %106 = dma.hbm_to_vmem [thread:$0]  %s99, 1024, %s101, [#allocation14], 64, 64, 4
    $region17: #{wln_forward.1} parent=1 // pred_fallthru
      _
    // Predicated region
    $region18: #{wln_forward.1} parent=1 // pred_check
      _
    $region19: #{wln_forward.1} parent=1 // pred_check_branch
      %108 = sbr.rel (0) target = $region21
    $region20: #{wln_forward.1} parent=1 // pred_region
      _
    $region21: #{wln_forward.1} parent=1 // pred_fallthru
      _
    // Predicated region
    $region22: #{wln_forward.1} parent=1 // pred_check
      _
    $region23: #{wln_forward.1} parent=1 // pred_check_branch
      %110 = sbr.rel (0) target = $region25
    $region24: #{wln_forward.1} parent=1 // pred_region
      _
    $region25: #{wln_forward.1} parent=1 // pred_fallthru
      _
    // Predicated region
    $region26: #{wln_forward.1} parent=1 // pred_check
      _
    $region27: #{wln_forward.1} parent=1 // pred_check_branch
      %112 = sbr.rel (0) target = $region29
    $region28: #{wln_forward.1} parent=1 // pred_region
      _
    $region29: #{wln_forward.1} parent=1 // pred_fallthru
      _
    // Predicated region
    $region30: #{wln_forward.1} parent=1 // pred_check
      _
    $region31: #{wln_forward.1} parent=1 // pred_check_branch
      %114 = sbr.rel (0) target = $region33
    $region32: #{wln_forward.1} parent=1 // pred_region
      %116 = vsyncadd [#allocation17], 0
      %s117 = sshll.u32 %s21, 4
      %s118 = int_to_ptr.hbm [resolvable:$true] %s117
      %s119 = sshll.u32 [#allocation16], 4
      %s120 = int_to_ptr.vmem [resolvable:$true] %s119
      %125 = dma.hbm_to_vmem [thread:$0]  %s118, 3072, %s120, [#allocation17], 64, 64, 4
    $region33: #{wln_forward.1} parent=1 // pred_fallthru
      _
    // Predicated region
    $region34: #{wln_forward.1} parent=1 // pred_check
      _
    $region35: #{wln_forward.1} parent=1 // pred_check_branch
      %127 = sbr.rel (0) target = $region37
    $region36: #{wln_forward.1} parent=1 // pred_region
      %129 = vsyncadd [#allocation17], 0
      %s130 = sshll.u32 %s23, 4
      %s131 = int_to_ptr.hbm [resolvable:$true] %s130
      %s132 = sshll.u32 [#allocation18], 4
      %s133 = int_to_ptr.vmem [resolvable:$true] %s132
      %138 = dma.hbm_to_vmem [thread:$0]  %s131, 3072, %s133, [#allocation17], 64, 64, 4
    $region37: #{wln_forward.1} parent=1 // pred_fallthru
      _
    // Predicated region
    $region38: #{wln_forward.1} parent=1 // pred_check
      _
    $region39: #{wln_forward.1} parent=1 // pred_check_branch
      %140 = sbr.rel (0) target = $region41
    $region40: #{wln_forward.1} parent=1 // pred_region
      _
    $region41: #{wln_forward.1} parent=1 // pred_fallthru
      _
    // Predicated region
    $region42: #{wln_forward.1} parent=1 // pred_check
      _
    $region43: #{wln_forward.1} parent=1 // pred_check_branch
      %142 = sbr.rel (0) target = $region45
    $region44: #{wln_forward.1} parent=1 // pred_region
      _
    $region45: #{wln_forward.1} parent=1 // pred_fallthru
      _
    // Predicated region
    $region46: #{wln_forward.1} parent=1 // pred_check
      _
    $region47: #{wln_forward.1} parent=1 // pred_check_branch
      %144 = sbr.rel (0) target = $region49
    $region48: #{wln_forward.1} parent=1 // pred_region
      _
    $region49: #{wln_forward.1} parent=1 // pred_fallthru
      _
    // Predicated region
    $region50: #{wln_forward.1} parent=1 // pred_check
      _
    $region51: #{wln_forward.1} parent=1 // pred_check_branch
      %146 = sbr.rel (0) target = $region53
    $region52: #{wln_forward.1} parent=1 // pred_region
      %148 = vsyncadd [#allocation20], 0
      %s149 = sshll.u32 %s31, 4
      %s150 = int_to_ptr.hbm [resolvable:$true] %s149
      %s151 = sshll.u32 [#allocation19], 4
      %s152 = int_to_ptr.vmem [resolvable:$true] %s151
      %157 = dma.hbm_to_vmem [thread:$0]  %s150, 3072, %s152, [#allocation20], 64, 64, 4
    $region53: #{wln_forward.1} parent=1 // pred_fallthru
      _
    // Predicated region
    $region54: #{wln_forward.1} parent=1 // pred_check
      _
    $region55: #{wln_forward.1} parent=1 // pred_check_branch
      %159 = sbr.rel (0) target = $region57
    $region56: #{wln_forward.1} parent=1 // pred_region
      _
    $region57: #{wln_forward.1} parent=1 // pred_fallthru
      _
    // Predicated region
    $region58: #{wln_forward.1} parent=1 // pred_check
      _
    $region59: #{wln_forward.1} parent=1 // pred_check_branch
      %161 = sbr.rel (0) target = $region61
    $region60: #{wln_forward.1} parent=1 // pred_region
      _
    $region61: #{wln_forward.1} parent=1 // pred_fallthru
      _
    // Predicated region
    $region62: #{wln_forward.1} parent=1 // pred_check
      _
    $region63: #{wln_forward.1} parent=1 // pred_check_branch
      %163 = sbr.rel (0) target = $region65
    $region64: #{wln_forward.1} parent=1 // pred_region
      _
    $region65: #{wln_forward.1} parent=1 // pred_fallthru
      _
    // Predicated region
    $region66: #{wln_forward.1} parent=1 // pred_check
      _
    $region67: #{wln_forward.1} parent=1 // pred_check_branch
      %165 = sbr.rel (0) target = $region69
    $region68: #{wln_forward.1} parent=1 // pred_region
      %167 = vsyncadd [#allocation20], 0
      %s168 = sshll.u32 %s39, 4
      %s169 = int_to_ptr.hbm [resolvable:$true] %s168
      %s170 = sshll.u32 [#allocation21], 4
      %s171 = int_to_ptr.vmem [resolvable:$true] %s170
      %176 = dma.hbm_to_vmem [thread:$0]  %s169, 1024, %s171, [#allocation20], 64, 64, 4
    $region69: #{wln_forward.1} parent=1 // pred_fallthru
      _
    // Predicated region
    $region70: #{wln_forward.1} parent=1 // pred_check
      _
    $region71: #{wln_forward.1} parent=1 // pred_check_branch
      %178 = sbr.rel (0) target = $region73
    $region72: #{wln_forward.1} parent=1 // pred_region
      _
    $region73: #{wln_forward.1} parent=1 // pred_fallthru
      _
    // Predicated region
    $region74: #{wln_forward.1} parent=1 // pred_check
      _
    $region75: #{wln_forward.1} parent=1 // pred_check_branch
      %180 = sbr.rel (0) target = $region77
    $region76: #{wln_forward.1} parent=1 // pred_region
      %182 = vsyncadd [#allocation23], 0
      %s183 = sshll.u32 %s43, 4
      %s184 = int_to_ptr.hbm [resolvable:$true] %s183
      %s185 = sshll.u32 [#allocation22], 4
      %s186 = int_to_ptr.vmem [resolvable:$true] %s185
      %191 = dma.hbm_to_vmem [thread:$0]  %s184, 1024, %s186, [#allocation23], 64, 64, 4
    $region77: #{wln_forward.1} parent=1 // pred_fallthru
      _
    // Predicated region
    $region78: #{wln_forward.1} parent=1 // pred_check
      _
    $region79: #{wln_forward.1} parent=1 // pred_check_branch
      %193 = sbr.rel (0) target = $region81
    $region80: #{wln_forward.1} parent=1 // pred_region
      _
    $region81: #{wln_forward.1} parent=1 // pred_fallthru
      _
    // Predicated region
    $region82: #{wln_forward.1} parent=1 // pred_check
      _
    $region83: #{wln_forward.1} parent=1 // pred_check_branch
      %195 = sbr.rel (0) target = $region85
    $region84: #{wln_forward.1} parent=1 // pred_region
      _
    $region85: #{wln_forward.1} parent=1 // pred_fallthru
      _
    // Predicated region
    $region86: #{wln_forward.1} parent=1 // pred_check
      _
    $region87: #{wln_forward.1} parent=1 // pred_check_branch
      %197 = sbr.rel (0) target = $region89
    $region88: #{wln_forward.1} parent=1 // pred_region
      _
    $region89: #{wln_forward.1} parent=1 // pred_fallthru
      _
    // Predicated region
    $region90: #{wln_forward.1} parent=1 // pred_check
      _
    $region91: #{wln_forward.1} parent=1 // pred_check_branch
      %199 = sbr.rel (0) target = $region93
    $region92: #{wln_forward.1} parent=1 // pred_region
      %201 = vsyncadd [#allocation23], 0
      %s202 = sshll.u32 %s51, 4
      %s203 = int_to_ptr.hbm [resolvable:$true] %s202
      %s204 = sshll.u32 [#allocation24], 4
      %s205 = int_to_ptr.vmem [resolvable:$true] %s204
      %210 = dma.hbm_to_vmem [thread:$0]  %s203, 1024, %s205, [#allocation23], 64, 64, 4
    $region93: #{wln_forward.1} parent=1 // pred_fallthru
      _
    // Predicated region
    $region94: #{wln_forward.1} parent=1 // pred_check
      _
    $region95: #{wln_forward.1} parent=1 // pred_check_branch
      %212 = sbr.rel (0) target = $region97
    $region96: #{wln_forward.1} parent=1 // pred_region
      _
    $region97: #{wln_forward.1} parent=1 // pred_fallthru
      _
    // Predicated region
    $region98: #{wln_forward.1} parent=1 // pred_check
      _
    $region99: #{wln_forward.1} parent=1 // pred_check_branch
      %214 = sbr.rel (0) target = $region101
    $region100: #{wln_forward.1} parent=1 // pred_region
      %216 = dma.done [#allocation14], 1024
    $region101: #{wln_forward.1} parent=1 // pred_fallthru
      _
    // Predicated region
    $region102: #{wln_forward.1} parent=1 // pred_check
      _
    $region103: #{wln_forward.1} parent=1 // pred_check_branch
      %218 = sbr.rel (0) target = $region105
    $region104: #{wln_forward.1} parent=1 // pred_region
      %220 = dma.done [#allocation17], 3072
    $region105: #{wln_forward.1} parent=1 // pred_fallthru
      _
    // Predicated region
    $region106: #{wln_forward.1} parent=1 // pred_check
      _
    $region107: #{wln_forward.1} parent=1 // pred_check_branch
      %222 = sbr.rel (0) target = $region109
    $region108: #{wln_forward.1} parent=1 // pred_region
      %224 = dma.done [#allocation17], 3072
    $region109: #{wln_forward.1} parent=1 // pred_fallthru
      _
    // Predicated region
    $region110: #{wln_forward.1} parent=1 // pred_check
      _
    $region111: #{wln_forward.1} parent=1 // pred_check_branch
      %226 = sbr.rel (0) target = $region113
    $region112: #{wln_forward.1} parent=1 // pred_region
      %228 = dma.done [#allocation20], 3072
    $region113: #{wln_forward.1} parent=1 // pred_fallthru
      _
    // Predicated region
    $region114: #{wln_forward.1} parent=1 // pred_check
      _
    $region115: #{wln_forward.1} parent=1 // pred_check_branch
      %230 = sbr.rel (0) target = $region117
    $region116: #{wln_forward.1} parent=1 // pred_region
      %232 = dma.done [#allocation20], 1024
    $region117: #{wln_forward.1} parent=1 // pred_fallthru
      _
    // Predicated region
    $region118: #{wln_forward.1} parent=1 // pred_check
      _
    $region119: #{wln_forward.1} parent=1 // pred_check_branch
      %234 = sbr.rel (0) target = $region121
    $region120: #{wln_forward.1} parent=1 // pred_region
      %236 = dma.done [#allocation23], 1024
    $region121: #{wln_forward.1} parent=1 // pred_fallthru
      _
    // Predicated region
    $region122: #{wln_forward.1} parent=1 // pred_check
      _
    $region123: #{wln_forward.1} parent=1 // pred_check_branch
      %238 = sbr.rel (0) target = $region125
    $region124: #{wln_forward.1} parent=1 // pred_region
      %240 = dma.done [#allocation23], 1024
    $region125: #{wln_forward.1} parent=1 // pred_fallthru
      _
    %v241 = vld [vmem:[%s7] sm:$0xf]
    %v242 = vld [vmem:[%s7 + $0x4] sm:$0x3]
    %v243 = vld [vmem:[#allocation13] sm:$0xf]
    %v244 = vld [vmem:[#allocation13 + $0x4] sm:$0xf]
    %v245 = vld [vmem:[#allocation13 + $0x8] sm:$0xf]
    %v246 = vld [vmem:[#allocation13 + $0xc] sm:$0xf]
    %v247 = vld [vmem:[#allocation13 + $0x10] sm:$0xf]
    %v248 = vld [vmem:[#allocation13 + $0x14] sm:$0xf]
    %v249 = vld [vmem:[#allocation13 + $0x18] sm:$0xf]
    %v250 = vld [vmem:[#allocation13 + $0x1c] sm:$0xf]
    %v251 = vld [vmem:[#allocation13 + $0x20] sm:$0xf]
    %v252 = vld [vmem:[#allocation13 + $0x24] sm:$0xf]
    %v253 = vld [vmem:[#allocation13 + $0x28] sm:$0xf]
    %v254 = vld [vmem:[#allocation13 + $0x2c] sm:$0xf]
    %v255 = vld [vmem:[#allocation13 + $0x30] sm:$0xf]
    %v256 = vld [vmem:[#allocation13 + $0x34] sm:$0xf]
    %v257 = vld [vmem:[#allocation13 + $0x38] sm:$0xf]
    %v258 = vld [vmem:[#allocation13 + $0x3c] sm:$0xf]
    %v259 = vld [vmem:[%s15] sm:$0x1]
    %v261 = vperm.slane %v259, 0
    %v265 = vunpack.c.l.b16 %v241
    %v266 = vunpack.c.l.b16 %v242
    %v267 = vpack.c.b16 %v266, %v265
    %v285 = vunpack.c.l.b16 %v243
    %v286 = vunpack.c.l.b16 %v244
    %v287 = vunpack.c.l.b16 %v245
    %v288 = vunpack.c.l.b16 %v246
    %v289 = vunpack.c.l.b16 %v247
    %v290 = vunpack.c.l.b16 %v248
    %v291 = vunpack.c.l.b16 %v249
    %v292 = vunpack.c.l.b16 %v250
    %v293 = vunpack.c.l.b16 %v251
    %v294 = vunpack.c.l.b16 %v252
    %v295 = vunpack.c.l.b16 %v253
    %v296 = vunpack.c.l.b16 %v254
    %v297 = vunpack.c.l.b16 %v255
    %v298 = vunpack.c.l.b16 %v256
    %v299 = vunpack.c.l.b16 %v257
    %v300 = vunpack.c.l.b16 %v258
    %v301 = vpack.c.b16 %v286, %v285
    %v302 = vpack.c.b16 %v288, %v287
    %v303 = vpack.c.b16 %v290, %v289
    %v304 = vpack.c.b16 %v292, %v291
    %v305 = vpack.c.b16 %v294, %v293
    %v306 = vpack.c.b16 %v296, %v295
    %v307 = vpack.c.b16 %v298, %v297
    %v308 = vpack.c.b16 %v300, %v299
    %317 = vmatpush.bf16.msra.mxu0 %v308
    %318 = vmatpush.bf16.msra.mxu0 %v307
    %319 = vmatpush.bf16.msra.mxu0 %v306
    %320 = vmatpush.bf16.msra.mxu0 %v305
    %321 = vmatpush.bf16.msra.mxu0 %v304
    %322 = vmatpush.bf16.msra.mxu0 %v303
    %323 = vmatpush.bf16.msra.mxu0 %v302
    %324 = vmatpush.bf16.msra.mxu0 %v301
    %325 = vmatmul.bf16.gmra.mxu0 %v267
    %v326 = vpop.f32.mrf.mxu0
    %v327 = vadd.f32 %v261, %v326
    %v328 = vpop.f32.mrf.mxu0
    %v329 = vadd.f32 %v261, %v328
    %330 = vdwg.mxu0
    %v331 = vmax.f32 %v327, 0.0
    %v332 = vmax.f32 %v329, 0.0
    %v333 = vld [vmem:[%s17] sm:$0x1]
    %v335 = vperm.slane %v333, 0
    %v337 = vmul.f32 %v331, %v335
    %v338 = vmul.f32 %v332, %v335
    %v339 = vld [vmem:[%s19] sm:$0x1]
    %v341 = vperm.slane %v339, 0
    %v343 = vadd.f32 %v337, %v341
    %v344 = vadd.f32 %v338, %v341
    %345 = vst [vmem:[#allocation2] sm:$0xff] %v343
    %346 = vst [vmem:[#allocation2 + $0x8] sm:$0xf] %v344
    %347 = vst [vmem:[#allocation3] sm:$0xff] %v343
    %348 = vst [vmem:[#allocation3 + $0x8] sm:$0xf] %v344
    %v349 = vld [vmem:[#allocation2] sm:$0xff]
    %v350 = vld [vmem:[#allocation2 + $0x8] sm:$0xf]
    %v351 = vpack.c.bf16 %v350, %v349
    %v352 = vld [vmem:[#allocation16] sm:$0xf]
    %v353 = vld [vmem:[#allocation16 + $0x4] sm:$0xf]
    %v354 = vld [vmem:[#allocation16 + $0x8] sm:$0xf]
    %v355 = vld [vmem:[#allocation16 + $0xc] sm:$0xf]
    %v356 = vld [vmem:[#allocation16 + $0x10] sm:$0xf]
    %v357 = vld [vmem:[#allocation16 + $0x14] sm:$0xf]
    %v358 = vld [vmem:[#allocation16 + $0x18] sm:$0xf]
    %v359 = vld [vmem:[#allocation16 + $0x1c] sm:$0xf]
    %v360 = vld [vmem:[#allocation16 + $0x20] sm:$0xf]
    %v361 = vld [vmem:[#allocation16 + $0x24] sm:$0xf]
    %v362 = vld [vmem:[#allocation16 + $0x28] sm:$0xf]
    %v363 = vld [vmem:[#allocation16 + $0x2c] sm:$0xf]
    %v364 = vld [vmem:[#allocation16 + $0x30] sm:$0xf]
    %v365 = vld [vmem:[#allocation16 + $0x34] sm:$0xf]
    %v366 = vld [vmem:[#allocation16 + $0x38] sm:$0xf]
    %v367 = vld [vmem:[#allocation16 + $0x3c] sm:$0xf]
    %v384 = vunpack.c.l.b16 %v352
    %v385 = vunpack.c.l.b16 %v353
    %v386 = vunpack.c.l.b16 %v354
    %v387 = vunpack.c.l.b16 %v355
    %v388 = vunpack.c.l.b16 %v356
    %v389 = vunpack.c.l.b16 %v357
    %v390 = vunpack.c.l.b16 %v358
    %v391 = vunpack.c.l.b16 %v359
    %v392 = vunpack.c.l.b16 %v360
    %v393 = vunpack.c.l.b16 %v361
    %v394 = vunpack.c.l.b16 %v362
    %v395 = vunpack.c.l.b16 %v363
    %v396 = vunpack.c.l.b16 %v364
    %v397 = vunpack.c.l.b16 %v365
    %v398 = vunpack.c.l.b16 %v366
    %v399 = vunpack.c.l.b16 %v367
    %v400 = vpack.c.b16 %v385, %v384
    %v401 = vpack.c.b16 %v387, %v386
    %v402 = vpack.c.b16 %v389, %v388
    %v403 = vpack.c.b16 %v391, %v390
    %v404 = vpack.c.b16 %v393, %v392
    %v405 = vpack.c.b16 %v395, %v394
    %v406 = vpack.c.b16 %v397, %v396
    %v407 = vpack.c.b16 %v399, %v398
    %416 = vmatpush.bf16.msra.mxu0 %v407
    %417 = vmatpush.bf16.msra.mxu0 %v406
    %418 = vmatpush.bf16.msra.mxu0 %v405
    %419 = vmatpush.bf16.msra.mxu0 %v404
    %420 = vmatpush.bf16.msra.mxu0 %v403
    %421 = vmatpush.bf16.msra.mxu0 %v402
    %422 = vmatpush.bf16.msra.mxu0 %v401
    %423 = vmatpush.bf16.msra.mxu0 %v400
    %424 = vmatmul.bf16.gmra.mxu0 %v351
    %v425 = vpop.f32.mrf.mxu0
    %v426 = vadd.f32 0.0, %v425
    %v427 = vpop.f32.mrf.mxu0
    %v428 = vadd.f32 0.0, %v427
    %429 = vdwg.mxu0
    %430 = vst [vmem:[#allocation4] sm:$0xff] %v426
    %431 = vst [vmem:[#allocation4 + $0x8] sm:$0xf] %v428
    %v432 = vld [vmem:[%s9] sm:$0xf]
    %v433 = vld [vmem:[%s9 + $0x4] sm:$0xf]
    %v434 = vld [vmem:[#allocation18] sm:$0xf]
    %v435 = vld [vmem:[#allocation18 + $0x4] sm:$0xf]
    %v436 = vld [vmem:[#allocation18 + $0x8] sm:$0xf]
    %v437 = vld [vmem:[#allocation18 + $0xc] sm:$0xf]
    %v438 = vld [vmem:[#allocation18 + $0x10] sm:$0xf]
    %v439 = vld [vmem:[#allocation18 + $0x14] sm:$0xf]
    %v440 = vld [vmem:[#allocation18 + $0x18] sm:$0xf]
    %v441 = vld [vmem:[#allocation18 + $0x1c] sm:$0xf]
    %v442 = vld [vmem:[#allocation18 + $0x20] sm:$0xf]
    %v443 = vld [vmem:[#allocation18 + $0x24] sm:$0xf]
    %v444 = vld [vmem:[#allocation18 + $0x28] sm:$0xf]
    %v445 = vld [vmem:[#allocation18 + $0x2c] sm:$0xf]
    %v446 = vld [vmem:[#allocation18 + $0x30] sm:$0xf]
    %v447 = vld [vmem:[#allocation18 + $0x34] sm:$0xf]
    %v448 = vld [vmem:[#allocation18 + $0x38] sm:$0xf]
    %v449 = vld [vmem:[#allocation18 + $0x3c] sm:$0xf]
    %v450 = vld [vmem:[%s25] sm:$0x1]
    %v452 = vperm.slane %v450, 0
    %v456 = vunpack.c.l.b16 %v432
    %v457 = vunpack.c.l.b16 %v433
    %v458 = vpack.c.b16 %v457, %v456
    %v476 = vunpack.c.l.b16 %v434
    %v477 = vunpack.c.l.b16 %v435
    %v478 = vunpack.c.l.b16 %v436
    %v479 = vunpack.c.l.b16 %v437
    %v480 = vunpack.c.l.b16 %v438
    %v481 = vunpack.c.l.b16 %v439
    %v482 = vunpack.c.l.b16 %v440
    %v483 = vunpack.c.l.b16 %v441
    %v484 = vunpack.c.l.b16 %v442
    %v485 = vunpack.c.l.b16 %v443
    %v486 = vunpack.c.l.b16 %v444
    %v487 = vunpack.c.l.b16 %v445
    %v488 = vunpack.c.l.b16 %v446
    %v489 = vunpack.c.l.b16 %v447
    %v490 = vunpack.c.l.b16 %v448
    %v491 = vunpack.c.l.b16 %v449
    %v492 = vpack.c.b16 %v477, %v476
    %v493 = vpack.c.b16 %v479, %v478
    %v494 = vpack.c.b16 %v481, %v480
    %v495 = vpack.c.b16 %v483, %v482
    %v496 = vpack.c.b16 %v485, %v484
    %v497 = vpack.c.b16 %v487, %v486
    %v498 = vpack.c.b16 %v489, %v488
    %v499 = vpack.c.b16 %v491, %v490
    %508 = vmatpush.bf16.msra.mxu0 %v499
    %509 = vmatpush.bf16.msra.mxu0 %v498
    %510 = vmatpush.bf16.msra.mxu0 %v497
    %511 = vmatpush.bf16.msra.mxu0 %v496
    %512 = vmatpush.bf16.msra.mxu0 %v495
    %513 = vmatpush.bf16.msra.mxu0 %v494
    %514 = vmatpush.bf16.msra.mxu0 %v493
    %515 = vmatpush.bf16.msra.mxu0 %v492
    %516 = vmatmul.bf16.gmra.mxu0 %v458
    %v517 = vpop.f32.mrf.mxu0
    %v518 = vadd.f32 %v452, %v517
    %v519 = vpop.f32.mrf.mxu0
    %v520 = vadd.f32 %v452, %v519
    %521 = vdwg.mxu0
    %522 = vst [vmem:[#allocation5] sm:$0xff] %v518
    %523 = vst [vmem:[#allocation5 + $0x8] sm:$0xff] %v520
    %v524 = vld [vmem:[%s25] sm:$0x1]
    %v526 = vperm.slane %v524, 0
    %v528 = vadd.f32 %v426, %v526
    %v529 = vadd.f32 %v428, %v526
    %v530 = vmax.f32 %v528, 0.0
    %v531 = vmax.f32 %v529, 0.0
    %532 = vst [vmem:[#allocation6] sm:$0xff] %v530
    %533 = vst [vmem:[#allocation6 + $0x8] sm:$0xf] %v531
    %s534 = sld [smem:[#allocation10]]
    %s535 = sld [smem:[#allocation11]]
    %s536 = scalar_lea.vmem [#allocation4], %s534
    %v537 = vld [vmem:[%s536] sm:$0x1]
    %v538 = vld [vmem:[#allocation5] sm:$0x1]
    %v539 = vadd.f32 %v537, %v538
    %v540 = vmax.f32 %v539, 0.0
    %s541 = scalar_lea.vmem [#allocation6], %s535
    %v542 = vld [vmem:[%s541] sm:$0x1]
    %v543 = vadd.f32 %v542, %v540
    %544 = vst [vmem:[%s541] sm:$0x1] %v543
    %s545 = sld [smem:[#allocation10 + $0x1]]
    %s546 = sld [smem:[#allocation11 + $0x1]]
    %s547 = scalar_lea.vmem [#allocation4], %s545
    %v548 = vld [vmem:[%s547] sm:$0x1]
    %v549 = vld [vmem:[#allocation5 + $0x1] sm:$0x1]
    %v550 = vadd.f32 %v548, %v549
    %v551 = vmax.f32 %v550, 0.0
    %s552 = scalar_lea.vmem [#allocation6], %s546
    %v553 = vld [vmem:[%s552] sm:$0x1]
    %v554 = vadd.f32 %v553, %v551
    %555 = vst [vmem:[%s552] sm:$0x1] %v554
    %s556 = sld [smem:[#allocation10 + $0x2]]
    %s557 = sld [smem:[#allocation11 + $0x2]]
    %s558 = scalar_lea.vmem [#allocation4], %s556
    %v559 = vld [vmem:[%s558] sm:$0x1]
    %v560 = vld [vmem:[#allocation5 + $0x2] sm:$0x1]
    %v561 = vadd.f32 %v559, %v560
    %v562 = vmax.f32 %v561, 0.0
    %s563 = scalar_lea.vmem [#allocation6], %s557
    %v564 = vld [vmem:[%s563] sm:$0x1]
    %v565 = vadd.f32 %v564, %v562
    %566 = vst [vmem:[%s563] sm:$0x1] %v565
    %s567 = sld [smem:[#allocation10 + $0x3]]
    %s568 = sld [smem:[#allocation11 + $0x3]]
    %s569 = scalar_lea.vmem [#allocation4], %s567
    %v570 = vld [vmem:[%s569] sm:$0x1]
    %v571 = vld [vmem:[#allocation5 + $0x3] sm:$0x1]
    %v572 = vadd.f32 %v570, %v571
    %v573 = vmax.f32 %v572, 0.0
    %s574 = scalar_lea.vmem [#allocation6], %s568
    %v575 = vld [vmem:[%s574] sm:$0x1]
    %v576 = vadd.f32 %v575, %v573
    %577 = vst [vmem:[%s574] sm:$0x1] %v576
    %s578 = sld [smem:[#allocation10 + $0x4]]
    %s579 = sld [smem:[#allocation11 + $0x4]]
    %s580 = scalar_lea.vmem [#allocation4], %s578
    %v581 = vld [vmem:[%s580] sm:$0x1]
    %v582 = vld [vmem:[#allocation5 + $0x4] sm:$0x1]
    %v583 = vadd.f32 %v581, %v582
    %v584 = vmax.f32 %v583, 0.0
    %s585 = scalar_lea.vmem [#allocation6], %s579
    %v586 = vld [vmem:[%s585] sm:$0x1]
    %v587 = vadd.f32 %v586, %v584
    %588 = vst [vmem:[%s585] sm:$0x1] %v587
    %s589 = sld [smem:[#allocation10 + $0x5]]
    %s590 = sld [smem:[#allocation11 + $0x5]]
    %s591 = scalar_lea.vmem [#allocation4], %s589
    %v592 = vld [vmem:[%s591] sm:$0x1]
    %v593 = vld [vmem:[#allocation5 + $0x5] sm:$0x1]
    %v594 = vadd.f32 %v592, %v593
    %v595 = vmax.f32 %v594, 0.0
    %s596 = scalar_lea.vmem [#allocation6], %s590
    %v597 = vld [vmem:[%s596] sm:$0x1]
    %v598 = vadd.f32 %v597, %v595
    %599 = vst [vmem:[%s596] sm:$0x1] %v598
    %s600 = sld [smem:[#allocation10 + $0x6]]
    %s601 = sld [smem:[#allocation11 + $0x6]]
    %s602 = scalar_lea.vmem [#allocation4], %s600
    %v603 = vld [vmem:[%s602] sm:$0x1]
    %v604 = vld [vmem:[#allocation5 + $0x6] sm:$0x1]
    %v605 = vadd.f32 %v603, %v604
    %v606 = vmax.f32 %v605, 0.0
    %s607 = scalar_lea.vmem [#allocation6], %s601
    %v608 = vld [vmem:[%s607] sm:$0x1]
    %v609 = vadd.f32 %v608, %v606
    %610 = vst [vmem:[%s607] sm:$0x1] %v609
    %s611 = sld [smem:[#allocation10 + $0x7]]
    %s612 = sld [smem:[#allocation11 + $0x7]]
    %s613 = scalar_lea.vmem [#allocation4], %s611
    %v614 = vld [vmem:[%s613] sm:$0x1]
    %v615 = vld [vmem:[#allocation5 + $0x7] sm:$0x1]
    %v616 = vadd.f32 %v614, %v615
    %v617 = vmax.f32 %v616, 0.0
    %s618 = scalar_lea.vmem [#allocation6], %s612
    %v619 = vld [vmem:[%s618] sm:$0x1]
    %v620 = vadd.f32 %v619, %v617
    %621 = vst [vmem:[%s618] sm:$0x1] %v620
    %s622 = sld [smem:[#allocation10 + $0x8]]
    %s623 = sld [smem:[#allocation11 + $0x8]]
    %s624 = scalar_lea.vmem [#allocation4], %s622
    %v625 = vld [vmem:[%s624] sm:$0x1]
    %v626 = vld [vmem:[#allocation5 + $0x8] sm:$0x1]
    %v627 = vadd.f32 %v625, %v626
    %v628 = vmax.f32 %v627, 0.0
    %s629 = scalar_lea.vmem [#allocation6], %s623
    %v630 = vld [vmem:[%s629] sm:$0x1]
    %v631 = vadd.f32 %v630, %v628
    %632 = vst [vmem:[%s629] sm:$0x1] %v631
    %s633 = sld [smem:[#allocation10 + $0x9]]
    %s634 = sld [smem:[#allocation11 + $0x9]]
    %s635 = scalar_lea.vmem [#allocation4], %s633
    %v636 = vld [vmem:[%s635] sm:$0x1]
    %v637 = vld [vmem:[#allocation5 + $0x9] sm:$0x1]
    %v638 = vadd.f32 %v636, %v637
    %v639 = vmax.f32 %v638, 0.0
    %s640 = scalar_lea.vmem [#allocation6], %s634
    %v641 = vld [vmem:[%s640] sm:$0x1]
    %v642 = vadd.f32 %v641, %v639
    %643 = vst [vmem:[%s640] sm:$0x1] %v642
    %s644 = sld [smem:[#allocation10 + $0xa]]
    %s645 = sld [smem:[#allocation11 + $0xa]]
    %s646 = scalar_lea.vmem [#allocation4], %s644
    %v647 = vld [vmem:[%s646] sm:$0x1]
    %v648 = vld [vmem:[#allocation5 + $0xa] sm:$0x1]
    %v649 = vadd.f32 %v647, %v648
    %v650 = vmax.f32 %v649, 0.0
    %s651 = scalar_lea.vmem [#allocation6], %s645
    %v652 = vld [vmem:[%s651] sm:$0x1]
    %v653 = vadd.f32 %v652, %v650
    %654 = vst [vmem:[%s651] sm:$0x1] %v653
    %s655 = sld [smem:[#allocation10 + $0xb]]
    %s656 = sld [smem:[#allocation11 + $0xb]]
    %s657 = scalar_lea.vmem [#allocation4], %s655
    %v658 = vld [vmem:[%s657] sm:$0x1]
    %v659 = vld [vmem:[#allocation5 + $0xb] sm:$0x1]
    %v660 = vadd.f32 %v658, %v659
    %v661 = vmax.f32 %v660, 0.0
    %s662 = scalar_lea.vmem [#allocation6], %s656
    %v663 = vld [vmem:[%s662] sm:$0x1]
    %v664 = vadd.f32 %v663, %v661
    %665 = vst [vmem:[%s662] sm:$0x1] %v664
    %s666 = sld [smem:[#allocation10 + $0xc]]
    %s667 = sld [smem:[#allocation11 + $0xc]]
    %s668 = scalar_lea.vmem [#allocation4], %s666
    %v669 = vld [vmem:[%s668] sm:$0x1]
    %v670 = vld [vmem:[#allocation5 + $0xc] sm:$0x1]
    %v671 = vadd.f32 %v669, %v670
    %v672 = vmax.f32 %v671, 0.0
    %s673 = scalar_lea.vmem [#allocation6], %s667
    %v674 = vld [vmem:[%s673] sm:$0x1]
    %v675 = vadd.f32 %v674, %v672
    %676 = vst [vmem:[%s673] sm:$0x1] %v675
    %s677 = sld [smem:[#allocation10 + $0xd]]
    %s678 = sld [smem:[#allocation11 + $0xd]]
    %s679 = scalar_lea.vmem [#allocation4], %s677
    %v680 = vld [vmem:[%s679] sm:$0x1]
    %v681 = vld [vmem:[#allocation5 + $0xd] sm:$0x1]
    %v682 = vadd.f32 %v680, %v681
    %v683 = vmax.f32 %v682, 0.0
    %s684 = scalar_lea.vmem [#allocation6], %s678
    %v685 = vld [vmem:[%s684] sm:$0x1]
    %v686 = vadd.f32 %v685, %v683
    %687 = vst [vmem:[%s684] sm:$0x1] %v686
    %s688 = sld [smem:[#allocation10 + $0xe]]
    %s689 = sld [smem:[#allocation11 + $0xe]]
    %s690 = scalar_lea.vmem [#allocation4], %s688
    %v691 = vld [vmem:[%s690] sm:$0x1]
    %v692 = vld [vmem:[#allocation5 + $0xe] sm:$0x1]
    %v693 = vadd.f32 %v691, %v692
    %v694 = vmax.f32 %v693, 0.0
    %s695 = scalar_lea.vmem [#allocation6], %s689
    %v696 = vld [vmem:[%s695] sm:$0x1]
    %v697 = vadd.f32 %v696, %v694
    %698 = vst [vmem:[%s695] sm:$0x1] %v697
    %s699 = sld [smem:[#allocation10 + $0xf]]
    %s700 = sld [smem:[#allocation11 + $0xf]]
    %s701 = scalar_lea.vmem [#allocation4], %s699
    %v702 = vld [vmem:[%s701] sm:$0x1]
    %v703 = vld [vmem:[#allocation5 + $0xf] sm:$0x1]
    %v704 = vadd.f32 %v702, %v703
    %v705 = vmax.f32 %v704, 0.0
    %s706 = scalar_lea.vmem [#allocation6], %s700
    %v707 = vld [vmem:[%s706] sm:$0x1]
    %v708 = vadd.f32 %v707, %v705
    %709 = vst [vmem:[%s706] sm:$0x1] %v708
    %v710 = vld [vmem:[#allocation6] sm:$0xff]
    %v711 = vld [vmem:[#allocation6 + $0x8] sm:$0xf]
    %v712 = vld [vmem:[%s27] sm:$0x1]
    %v714 = vperm.slane %v712, 0
    %v716 = vmul.f32 %v710, %v714
    %v717 = vmul.f32 %v711, %v714
    %v718 = vld [vmem:[%s29] sm:$0x1]
    %v720 = vperm.slane %v718, 0
    %v722 = vadd.f32 %v716, %v720
    %v723 = vadd.f32 %v717, %v720
    %724 = vst [vmem:[#allocation2] sm:$0xff] %v722
    %725 = vst [vmem:[#allocation2 + $0x8] sm:$0xf] %v723
    %v726 = vld [vmem:[#allocation3] sm:$0xff]
    %v727 = vld [vmem:[#allocation3 + $0x8] sm:$0xf]
    %v728 = vadd.f32 %v726, %v722
    %v729 = vadd.f32 %v727, %v723
    %730 = vst [vmem:[#allocation3] sm:$0xff] %v728
    %731 = vst [vmem:[#allocation3 + $0x8] sm:$0xf] %v729
    %v732 = vld [vmem:[#allocation2] sm:$0xff]
    %v733 = vld [vmem:[#allocation2 + $0x8] sm:$0xf]
    %v734 = vpack.c.bf16 %v733, %v732
    %s735 = scalar_lea.vmem [#allocation16], 64
    %v736 = vld [vmem:[%s735] sm:$0xf]
    %v737 = vld [vmem:[%s735 + $0x4] sm:$0xf]
    %v738 = vld [vmem:[%s735 + $0x8] sm:$0xf]
    %v739 = vld [vmem:[%s735 + $0xc] sm:$0xf]
    %v740 = vld [vmem:[%s735 + $0x10] sm:$0xf]
    %v741 = vld [vmem:[%s735 + $0x14] sm:$0xf]
    %v742 = vld [vmem:[%s735 + $0x18] sm:$0xf]
    %v743 = vld [vmem:[%s735 + $0x1c] sm:$0xf]
    %v744 = vld [vmem:[%s735 + $0x20] sm:$0xf]
    %v745 = vld [vmem:[%s735 + $0x24] sm:$0xf]
    %v746 = vld [vmem:[%s735 + $0x28] sm:$0xf]
    %v747 = vld [vmem:[%s735 + $0x2c] sm:$0xf]
    %v748 = vld [vmem:[%s735 + $0x30] sm:$0xf]
    %v749 = vld [vmem:[%s735 + $0x34] sm:$0xf]
    %v750 = vld [vmem:[%s735 + $0x38] sm:$0xf]
    %v751 = vld [vmem:[%s735 + $0x3c] sm:$0xf]
    %v768 = vunpack.c.l.b16 %v736
    %v769 = vunpack.c.l.b16 %v737
    %v770 = vunpack.c.l.b16 %v738
    %v771 = vunpack.c.l.b16 %v739
    %v772 = vunpack.c.l.b16 %v740
    %v773 = vunpack.c.l.b16 %v741
    %v774 = vunpack.c.l.b16 %v742
    %v775 = vunpack.c.l.b16 %v743
    %v776 = vunpack.c.l.b16 %v744
    %v777 = vunpack.c.l.b16 %v745
    %v778 = vunpack.c.l.b16 %v746
    %v779 = vunpack.c.l.b16 %v747
    %v780 = vunpack.c.l.b16 %v748
    %v781 = vunpack.c.l.b16 %v749
    %v782 = vunpack.c.l.b16 %v750
    %v783 = vunpack.c.l.b16 %v751
    %v784 = vpack.c.b16 %v769, %v768
    %v785 = vpack.c.b16 %v771, %v770
    %v786 = vpack.c.b16 %v773, %v772
    %v787 = vpack.c.b16 %v775, %v774
    %v788 = vpack.c.b16 %v777, %v776
    %v789 = vpack.c.b16 %v779, %v778
    %v790 = vpack.c.b16 %v781, %v780
    %v791 = vpack.c.b16 %v783, %v782
    %800 = vmatpush.bf16.msra.mxu0 %v791
    %801 = vmatpush.bf16.msra.mxu0 %v790
    %802 = vmatpush.bf16.msra.mxu0 %v789
    %803 = vmatpush.bf16.msra.mxu0 %v788
    %804 = vmatpush.bf16.msra.mxu0 %v787
    %805 = vmatpush.bf16.msra.mxu0 %v786
    %806 = vmatpush.bf16.msra.mxu0 %v785
    %807 = vmatpush.bf16.msra.mxu0 %v784
    %808 = vmatmul.bf16.gmra.mxu0 %v734
    %v809 = vpop.f32.mrf.mxu0
    %v810 = vadd.f32 0.0, %v809
    %v811 = vpop.f32.mrf.mxu0
    %v812 = vadd.f32 0.0, %v811
    %813 = vdwg.mxu0
    %814 = vst [vmem:[#allocation4] sm:$0xff] %v810
    %815 = vst [vmem:[#allocation4 + $0x8] sm:$0xf] %v812
    %v816 = vld [vmem:[%s9] sm:$0xf]
    %v817 = vld [vmem:[%s9 + $0x4] sm:$0xf]
    %s818 = scalar_lea.vmem [#allocation18], 64
    %v819 = vld [vmem:[%s818] sm:$0xf]
    %v820 = vld [vmem:[%s818 + $0x4] sm:$0xf]
    %v821 = vld [vmem:[%s818 + $0x8] sm:$0xf]
    %v822 = vld [vmem:[%s818 + $0xc] sm:$0xf]
    %v823 = vld [vmem:[%s818 + $0x10] sm:$0xf]
    %v824 = vld [vmem:[%s818 + $0x14] sm:$0xf]
    %v825 = vld [vmem:[%s818 + $0x18] sm:$0xf]
    %v826 = vld [vmem:[%s818 + $0x1c] sm:$0xf]
    %v827 = vld [vmem:[%s818 + $0x20] sm:$0xf]
    %v828 = vld [vmem:[%s818 + $0x24] sm:$0xf]
    %v829 = vld [vmem:[%s818 + $0x28] sm:$0xf]
    %v830 = vld [vmem:[%s818 + $0x2c] sm:$0xf]
    %v831 = vld [vmem:[%s818 + $0x30] sm:$0xf]
    %v832 = vld [vmem:[%s818 + $0x34] sm:$0xf]
    %v833 = vld [vmem:[%s818 + $0x38] sm:$0xf]
    %v834 = vld [vmem:[%s818 + $0x3c] sm:$0xf]
    %s835 = scalar_lea.vmem %s25, 1
    %v836 = vld [vmem:[%s835] sm:$0x1]
    %v838 = vperm.slane %v836, 0
    %v842 = vunpack.c.l.b16 %v816
    %v843 = vunpack.c.l.b16 %v817
    %v844 = vpack.c.b16 %v843, %v842
    %v862 = vunpack.c.l.b16 %v819
    %v863 = vunpack.c.l.b16 %v820
    %v864 = vunpack.c.l.b16 %v821
    %v865 = vunpack.c.l.b16 %v822
    %v866 = vunpack.c.l.b16 %v823
    %v867 = vunpack.c.l.b16 %v824
    %v868 = vunpack.c.l.b16 %v825
    %v869 = vunpack.c.l.b16 %v826
    %v870 = vunpack.c.l.b16 %v827
    %v871 = vunpack.c.l.b16 %v828
    %v872 = vunpack.c.l.b16 %v829
    %v873 = vunpack.c.l.b16 %v830
    %v874 = vunpack.c.l.b16 %v831
    %v875 = vunpack.c.l.b16 %v832
    %v876 = vunpack.c.l.b16 %v833
    %v877 = vunpack.c.l.b16 %v834
    %v878 = vpack.c.b16 %v863, %v862
    %v879 = vpack.c.b16 %v865, %v864
    %v880 = vpack.c.b16 %v867, %v866
    %v881 = vpack.c.b16 %v869, %v868
    %v882 = vpack.c.b16 %v871, %v870
    %v883 = vpack.c.b16 %v873, %v872
    %v884 = vpack.c.b16 %v875, %v874
    %v885 = vpack.c.b16 %v877, %v876
    %894 = vmatpush.bf16.msra.mxu0 %v885
    %895 = vmatpush.bf16.msra.mxu0 %v884
    %896 = vmatpush.bf16.msra.mxu0 %v883
    %897 = vmatpush.bf16.msra.mxu0 %v882
    %898 = vmatpush.bf16.msra.mxu0 %v881
    %899 = vmatpush.bf16.msra.mxu0 %v880
    %900 = vmatpush.bf16.msra.mxu0 %v879
    %901 = vmatpush.bf16.msra.mxu0 %v878
    %902 = vmatmul.bf16.gmra.mxu0 %v844
    %v903 = vpop.f32.mrf.mxu0
    %v904 = vadd.f32 %v838, %v903
    %v905 = vpop.f32.mrf.mxu0
    %v906 = vadd.f32 %v838, %v905
    %907 = vdwg.mxu0
    %908 = vst [vmem:[#allocation5] sm:$0xff] %v904
    %909 = vst [vmem:[#allocation5 + $0x8] sm:$0xff] %v906
    %v910 = vld [vmem:[%s835] sm:$0x1]
    %v912 = vperm.slane %v910, 0
    %v914 = vadd.f32 %v810, %v912
    %v915 = vadd.f32 %v812, %v912
    %v916 = vmax.f32 %v914, 0.0
    %v917 = vmax.f32 %v915, 0.0
    %918 = vst [vmem:[#allocation6] sm:$0xff] %v916
    %919 = vst [vmem:[#allocation6 + $0x8] sm:$0xf] %v917
    %s920 = sld [smem:[#allocation10]]
    %s921 = sld [smem:[#allocation11]]
    %s922 = scalar_lea.vmem [#allocation4], %s920
    %v923 = vld [vmem:[%s922] sm:$0x1]
    %v924 = vld [vmem:[#allocation5] sm:$0x1]
    %v925 = vadd.f32 %v923, %v924
    %v926 = vmax.f32 %v925, 0.0
    %s927 = scalar_lea.vmem [#allocation6], %s921
    %v928 = vld [vmem:[%s927] sm:$0x1]
    %v929 = vadd.f32 %v928, %v926
    %930 = vst [vmem:[%s927] sm:$0x1] %v929
    %s931 = sld [smem:[#allocation10 + $0x1]]
    %s932 = sld [smem:[#allocation11 + $0x1]]
    %s933 = scalar_lea.vmem [#allocation4], %s931
    %v934 = vld [vmem:[%s933] sm:$0x1]
    %v935 = vld [vmem:[#allocation5 + $0x1] sm:$0x1]
    %v936 = vadd.f32 %v934, %v935
    %v937 = vmax.f32 %v936, 0.0
    %s938 = scalar_lea.vmem [#allocation6], %s932
    %v939 = vld [vmem:[%s938] sm:$0x1]
    %v940 = vadd.f32 %v939, %v937
    %941 = vst [vmem:[%s938] sm:$0x1] %v940
    %s942 = sld [smem:[#allocation10 + $0x2]]
    %s943 = sld [smem:[#allocation11 + $0x2]]
    %s944 = scalar_lea.vmem [#allocation4], %s942
    %v945 = vld [vmem:[%s944] sm:$0x1]
    %v946 = vld [vmem:[#allocation5 + $0x2] sm:$0x1]
    %v947 = vadd.f32 %v945, %v946
    %v948 = vmax.f32 %v947, 0.0
    %s949 = scalar_lea.vmem [#allocation6], %s943
    %v950 = vld [vmem:[%s949] sm:$0x1]
    %v951 = vadd.f32 %v950, %v948
    %952 = vst [vmem:[%s949] sm:$0x1] %v951
    %s953 = sld [smem:[#allocation10 + $0x3]]
    %s954 = sld [smem:[#allocation11 + $0x3]]
    %s955 = scalar_lea.vmem [#allocation4], %s953
    %v956 = vld [vmem:[%s955] sm:$0x1]
    %v957 = vld [vmem:[#allocation5 + $0x3] sm:$0x1]
    %v958 = vadd.f32 %v956, %v957
    %v959 = vmax.f32 %v958, 0.0
    %s960 = scalar_lea.vmem [#allocation6], %s954
    %v961 = vld [vmem:[%s960] sm:$0x1]
    %v962 = vadd.f32 %v961, %v959
    %963 = vst [vmem:[%s960] sm:$0x1] %v962
    %s964 = sld [smem:[#allocation10 + $0x4]]
    %s965 = sld [smem:[#allocation11 + $0x4]]
    %s966 = scalar_lea.vmem [#allocation4], %s964
    %v967 = vld [vmem:[%s966] sm:$0x1]
    %v968 = vld [vmem:[#allocation5 + $0x4] sm:$0x1]
    %v969 = vadd.f32 %v967, %v968
    %v970 = vmax.f32 %v969, 0.0
    %s971 = scalar_lea.vmem [#allocation6], %s965
    %v972 = vld [vmem:[%s971] sm:$0x1]
    %v973 = vadd.f32 %v972, %v970
    %974 = vst [vmem:[%s971] sm:$0x1] %v973
    %s975 = sld [smem:[#allocation10 + $0x5]]
    %s976 = sld [smem:[#allocation11 + $0x5]]
    %s977 = scalar_lea.vmem [#allocation4], %s975
    %v978 = vld [vmem:[%s977] sm:$0x1]
    %v979 = vld [vmem:[#allocation5 + $0x5] sm:$0x1]
    %v980 = vadd.f32 %v978, %v979
    %v981 = vmax.f32 %v980, 0.0
    %s982 = scalar_lea.vmem [#allocation6], %s976
    %v983 = vld [vmem:[%s982] sm:$0x1]
    %v984 = vadd.f32 %v983, %v981
    %985 = vst [vmem:[%s982] sm:$0x1] %v984
    %s986 = sld [smem:[#allocation10 + $0x6]]
    %s987 = sld [smem:[#allocation11 + $0x6]]
    %s988 = scalar_lea.vmem [#allocation4], %s986
    %v989 = vld [vmem:[%s988] sm:$0x1]
    %v990 = vld [vmem:[#allocation5 + $0x6] sm:$0x1]
    %v991 = vadd.f32 %v989, %v990
    %v992 = vmax.f32 %v991, 0.0
    %s993 = scalar_lea.vmem [#allocation6], %s987
    %v994 = vld [vmem:[%s993] sm:$0x1]
    %v995 = vadd.f32 %v994, %v992
    %996 = vst [vmem:[%s993] sm:$0x1] %v995
    %s997 = sld [smem:[#allocation10 + $0x7]]
    %s998 = sld [smem:[#allocation11 + $0x7]]
    %s999 = scalar_lea.vmem [#allocation4], %s997
    %v1000 = vld [vmem:[%s999] sm:$0x1]
    %v1001 = vld [vmem:[#allocation5 + $0x7] sm:$0x1]
    %v1002 = vadd.f32 %v1000, %v1001
    %v1003 = vmax.f32 %v1002, 0.0
    %s1004 = scalar_lea.vmem [#allocation6], %s998
    %v1005 = vld [vmem:[%s1004] sm:$0x1]
    %v1006 = vadd.f32 %v1005, %v1003
    %1007 = vst [vmem:[%s1004] sm:$0x1] %v1006
    %s1008 = sld [smem:[#allocation10 + $0x8]]
    %s1009 = sld [smem:[#allocation11 + $0x8]]
    %s1010 = scalar_lea.vmem [#allocation4], %s1008
    %v1011 = vld [vmem:[%s1010] sm:$0x1]
    %v1012 = vld [vmem:[#allocation5 + $0x8] sm:$0x1]
    %v1013 = vadd.f32 %v1011, %v1012
    %v1014 = vmax.f32 %v1013, 0.0
    %s1015 = scalar_lea.vmem [#allocation6], %s1009
    %v1016 = vld [vmem:[%s1015] sm:$0x1]
    %v1017 = vadd.f32 %v1016, %v1014
    %1018 = vst [vmem:[%s1015] sm:$0x1] %v1017
    %s1019 = sld [smem:[#allocation10 + $0x9]]
    %s1020 = sld [smem:[#allocation11 + $0x9]]
    %s1021 = scalar_lea.vmem [#allocation4], %s1019
    %v1022 = vld [vmem:[%s1021] sm:$0x1]
    %v1023 = vld [vmem:[#allocation5 + $0x9] sm:$0x1]
    %v1024 = vadd.f32 %v1022, %v1023
    %v1025 = vmax.f32 %v1024, 0.0
    %s1026 = scalar_lea.vmem [#allocation6], %s1020
    %v1027 = vld [vmem:[%s1026] sm:$0x1]
    %v1028 = vadd.f32 %v1027, %v1025
    %1029 = vst [vmem:[%s1026] sm:$0x1] %v1028
    %s1030 = sld [smem:[#allocation10 + $0xa]]
    %s1031 = sld [smem:[#allocation11 + $0xa]]
    %s1032 = scalar_lea.vmem [#allocation4], %s1030
    %v1033 = vld [vmem:[%s1032] sm:$0x1]
    %v1034 = vld [vmem:[#allocation5 + $0xa] sm:$0x1]
    %v1035 = vadd.f32 %v1033, %v1034
    %v1036 = vmax.f32 %v1035, 0.0
    %s1037 = scalar_lea.vmem [#allocation6], %s1031
    %v1038 = vld [vmem:[%s1037] sm:$0x1]
    %v1039 = vadd.f32 %v1038, %v1036
    %1040 = vst [vmem:[%s1037] sm:$0x1] %v1039
    %s1041 = sld [smem:[#allocation10 + $0xb]]
    %s1042 = sld [smem:[#allocation11 + $0xb]]
    %s1043 = scalar_lea.vmem [#allocation4], %s1041
    %v1044 = vld [vmem:[%s1043] sm:$0x1]
    %v1045 = vld [vmem:[#allocation5 + $0xb] sm:$0x1]
    %v1046 = vadd.f32 %v1044, %v1045
    %v1047 = vmax.f32 %v1046, 0.0
    %s1048 = scalar_lea.vmem [#allocation6], %s1042
    %v1049 = vld [vmem:[%s1048] sm:$0x1]
    %v1050 = vadd.f32 %v1049, %v1047
    %1051 = vst [vmem:[%s1048] sm:$0x1] %v1050
    %s1052 = sld [smem:[#allocation10 + $0xc]]
    %s1053 = sld [smem:[#allocation11 + $0xc]]
    %s1054 = scalar_lea.vmem [#allocation4], %s1052
    %v1055 = vld [vmem:[%s1054] sm:$0x1]
    %v1056 = vld [vmem:[#allocation5 + $0xc] sm:$0x1]
    %v1057 = vadd.f32 %v1055, %v1056
    %v1058 = vmax.f32 %v1057, 0.0
    %s1059 = scalar_lea.vmem [#allocation6], %s1053
    %v1060 = vld [vmem:[%s1059] sm:$0x1]
    %v1061 = vadd.f32 %v1060, %v1058
    %1062 = vst [vmem:[%s1059] sm:$0x1] %v1061
    %s1063 = sld [smem:[#allocation10 + $0xd]]
    %s1064 = sld [smem:[#allocation11 + $0xd]]
    %s1065 = scalar_lea.vmem [#allocation4], %s1063
    %v1066 = vld [vmem:[%s1065] sm:$0x1]
    %v1067 = vld [vmem:[#allocation5 + $0xd] sm:$0x1]
    %v1068 = vadd.f32 %v1066, %v1067
    %v1069 = vmax.f32 %v1068, 0.0
    %s1070 = scalar_lea.vmem [#allocation6], %s1064
    %v1071 = vld [vmem:[%s1070] sm:$0x1]
    %v1072 = vadd.f32 %v1071, %v1069
    %1073 = vst [vmem:[%s1070] sm:$0x1] %v1072
    %s1074 = sld [smem:[#allocation10 + $0xe]]
    %s1075 = sld [smem:[#allocation11 + $0xe]]
    %s1076 = scalar_lea.vmem [#allocation4], %s1074
    %v1077 = vld [vmem:[%s1076] sm:$0x1]
    %v1078 = vld [vmem:[#allocation5 + $0xe] sm:$0x1]
    %v1079 = vadd.f32 %v1077, %v1078
    %v1080 = vmax.f32 %v1079, 0.0
    %s1081 = scalar_lea.vmem [#allocation6], %s1075
    %v1082 = vld [vmem:[%s1081] sm:$0x1]
    %v1083 = vadd.f32 %v1082, %v1080
    %1084 = vst [vmem:[%s1081] sm:$0x1] %v1083
    %s1085 = sld [smem:[#allocation10 + $0xf]]
    %s1086 = sld [smem:[#allocation11 + $0xf]]
    %s1087 = scalar_lea.vmem [#allocation4], %s1085
    %v1088 = vld [vmem:[%s1087] sm:$0x1]
    %v1089 = vld [vmem:[#allocation5 + $0xf] sm:$0x1]
    %v1090 = vadd.f32 %v1088, %v1089
    %v1091 = vmax.f32 %v1090, 0.0
    %s1092 = scalar_lea.vmem [#allocation6], %s1086
    %v1093 = vld [vmem:[%s1092] sm:$0x1]
    %v1094 = vadd.f32 %v1093, %v1091
    %1095 = vst [vmem:[%s1092] sm:$0x1] %v1094
    %v1096 = vld [vmem:[#allocation6] sm:$0xff]
    %v1097 = vld [vmem:[#allocation6 + $0x8] sm:$0xf]
    %s1098 = scalar_lea.vmem %s27, 1
    %v1099 = vld [vmem:[%s1098] sm:$0x1]
    %v1101 = vperm.slane %v1099, 0
    %v1103 = vmul.f32 %v1096, %v1101
    %v1104 = vmul.f32 %v1097, %v1101
    %s1105 = scalar_lea.vmem %s29, 1
    %v1106 = vld [vmem:[%s1105] sm:$0x1]
    %v1108 = vperm.slane %v1106, 0
    %v1110 = vadd.f32 %v1103, %v1108
    %v1111 = vadd.f32 %v1104, %v1108
    %1112 = vst [vmem:[#allocation2] sm:$0xff] %v1110
    %1113 = vst [vmem:[#allocation2 + $0x8] sm:$0xf] %v1111
    %v1114 = vld [vmem:[#allocation3] sm:$0xff]
    %v1115 = vld [vmem:[#allocation3 + $0x8] sm:$0xf]
    %v1116 = vadd.f32 %v1114, %v1110
    %v1117 = vadd.f32 %v1115, %v1111
    %1118 = vst [vmem:[#allocation3] sm:$0xff] %v1116
    %1119 = vst [vmem:[#allocation3 + $0x8] sm:$0xf] %v1117
    %v1120 = vld [vmem:[#allocation2] sm:$0xff]
    %v1121 = vld [vmem:[#allocation2 + $0x8] sm:$0xf]
    %v1122 = vpack.c.bf16 %v1121, %v1120
    %s1123 = scalar_lea.vmem [#allocation16], 128
    %v1124 = vld [vmem:[%s1123] sm:$0xf]
    %v1125 = vld [vmem:[%s1123 + $0x4] sm:$0xf]
    %v1126 = vld [vmem:[%s1123 + $0x8] sm:$0xf]
    %v1127 = vld [vmem:[%s1123 + $0xc] sm:$0xf]
    %v1128 = vld [vmem:[%s1123 + $0x10] sm:$0xf]
    %v1129 = vld [vmem:[%s1123 + $0x14] sm:$0xf]
    %v1130 = vld [vmem:[%s1123 + $0x18] sm:$0xf]
    %v1131 = vld [vmem:[%s1123 + $0x1c] sm:$0xf]
    %v1132 = vld [vmem:[%s1123 + $0x20] sm:$0xf]
    %v1133 = vld [vmem:[%s1123 + $0x24] sm:$0xf]
    %v1134 = vld [vmem:[%s1123 + $0x28] sm:$0xf]
    %v1135 = vld [vmem:[%s1123 + $0x2c] sm:$0xf]
    %v1136 = vld [vmem:[%s1123 + $0x30] sm:$0xf]
    %v1137 = vld [vmem:[%s1123 + $0x34] sm:$0xf]
    %v1138 = vld [vmem:[%s1123 + $0x38] sm:$0xf]
    %v1139 = vld [vmem:[%s1123 + $0x3c] sm:$0xf]
    %v1156 = vunpack.c.l.b16 %v1124
    %v1157 = vunpack.c.l.b16 %v1125
    %v1158 = vunpack.c.l.b16 %v1126
    %v1159 = vunpack.c.l.b16 %v1127
    %v1160 = vunpack.c.l.b16 %v1128
    %v1161 = vunpack.c.l.b16 %v1129
    %v1162 = vunpack.c.l.b16 %v1130
    %v1163 = vunpack.c.l.b16 %v1131
    %v1164 = vunpack.c.l.b16 %v1132
    %v1165 = vunpack.c.l.b16 %v1133
    %v1166 = vunpack.c.l.b16 %v1134
    %v1167 = vunpack.c.l.b16 %v1135
    %v1168 = vunpack.c.l.b16 %v1136
    %v1169 = vunpack.c.l.b16 %v1137
    %v1170 = vunpack.c.l.b16 %v1138
    %v1171 = vunpack.c.l.b16 %v1139
    %v1172 = vpack.c.b16 %v1157, %v1156
    %v1173 = vpack.c.b16 %v1159, %v1158
    %v1174 = vpack.c.b16 %v1161, %v1160
    %v1175 = vpack.c.b16 %v1163, %v1162
    %v1176 = vpack.c.b16 %v1165, %v1164
    %v1177 = vpack.c.b16 %v1167, %v1166
    %v1178 = vpack.c.b16 %v1169, %v1168
    %v1179 = vpack.c.b16 %v1171, %v1170
    %1188 = vmatpush.bf16.msra.mxu0 %v1179
    %1189 = vmatpush.bf16.msra.mxu0 %v1178
    %1190 = vmatpush.bf16.msra.mxu0 %v1177
    %1191 = vmatpush.bf16.msra.mxu0 %v1176
    %1192 = vmatpush.bf16.msra.mxu0 %v1175
    %1193 = vmatpush.bf16.msra.mxu0 %v1174
    %1194 = vmatpush.bf16.msra.mxu0 %v1173
    %1195 = vmatpush.bf16.msra.mxu0 %v1172
    %1196 = vmatmul.bf16.gmra.mxu0 %v1122
    %v1197 = vpop.f32.mrf.mxu0
    %v1198 = vadd.f32 0.0, %v1197
    %v1199 = vpop.f32.mrf.mxu0
    %v1200 = vadd.f32 0.0, %v1199
    %1201 = vdwg.mxu0
    %1202 = vst [vmem:[#allocation4] sm:$0xff] %v1198
    %1203 = vst [vmem:[#allocation4 + $0x8] sm:$0xf] %v1200
    %v1204 = vld [vmem:[%s9] sm:$0xf]
    %v1205 = vld [vmem:[%s9 + $0x4] sm:$0xf]
    %s1206 = scalar_lea.vmem [#allocation18], 128
    %v1207 = vld [vmem:[%s1206] sm:$0xf]
    %v1208 = vld [vmem:[%s1206 + $0x4] sm:$0xf]
    %v1209 = vld [vmem:[%s1206 + $0x8] sm:$0xf]
    %v1210 = vld [vmem:[%s1206 + $0xc] sm:$0xf]
    %v1211 = vld [vmem:[%s1206 + $0x10] sm:$0xf]
    %v1212 = vld [vmem:[%s1206 + $0x14] sm:$0xf]
    %v1213 = vld [vmem:[%s1206 + $0x18] sm:$0xf]
    %v1214 = vld [vmem:[%s1206 + $0x1c] sm:$0xf]
    %v1215 = vld [vmem:[%s1206 + $0x20] sm:$0xf]
    %v1216 = vld [vmem:[%s1206 + $0x24] sm:$0xf]
    %v1217 = vld [vmem:[%s1206 + $0x28] sm:$0xf]
    %v1218 = vld [vmem:[%s1206 + $0x2c] sm:$0xf]
    %v1219 = vld [vmem:[%s1206 + $0x30] sm:$0xf]
    %v1220 = vld [vmem:[%s1206 + $0x34] sm:$0xf]
    %v1221 = vld [vmem:[%s1206 + $0x38] sm:$0xf]
    %v1222 = vld [vmem:[%s1206 + $0x3c] sm:$0xf]
    %s1223 = scalar_lea.vmem %s25, 2
    %v1224 = vld [vmem:[%s1223] sm:$0x1]
    %v1226 = vperm.slane %v1224, 0
    %v1230 = vunpack.c.l.b16 %v1204
    %v1231 = vunpack.c.l.b16 %v1205
    %v1232 = vpack.c.b16 %v1231, %v1230
    %v1250 = vunpack.c.l.b16 %v1207
    %v1251 = vunpack.c.l.b16 %v1208
    %v1252 = vunpack.c.l.b16 %v1209
    %v1253 = vunpack.c.l.b16 %v1210
    %v1254 = vunpack.c.l.b16 %v1211
    %v1255 = vunpack.c.l.b16 %v1212
    %v1256 = vunpack.c.l.b16 %v1213
    %v1257 = vunpack.c.l.b16 %v1214
    %v1258 = vunpack.c.l.b16 %v1215
    %v1259 = vunpack.c.l.b16 %v1216
    %v1260 = vunpack.c.l.b16 %v1217
    %v1261 = vunpack.c.l.b16 %v1218
    %v1262 = vunpack.c.l.b16 %v1219
    %v1263 = vunpack.c.l.b16 %v1220
    %v1264 = vunpack.c.l.b16 %v1221
    %v1265 = vunpack.c.l.b16 %v1222
    %v1266 = vpack.c.b16 %v1251, %v1250
    %v1267 = vpack.c.b16 %v1253, %v1252
    %v1268 = vpack.c.b16 %v1255, %v1254
    %v1269 = vpack.c.b16 %v1257, %v1256
    %v1270 = vpack.c.b16 %v1259, %v1258
    %v1271 = vpack.c.b16 %v1261, %v1260
    %v1272 = vpack.c.b16 %v1263, %v1262
    %v1273 = vpack.c.b16 %v1265, %v1264
    %1282 = vmatpush.bf16.msra.mxu0 %v1273
    %1283 = vmatpush.bf16.msra.mxu0 %v1272
    %1284 = vmatpush.bf16.msra.mxu0 %v1271
    %1285 = vmatpush.bf16.msra.mxu0 %v1270
    %1286 = vmatpush.bf16.msra.mxu0 %v1269
    %1287 = vmatpush.bf16.msra.mxu0 %v1268
    %1288 = vmatpush.bf16.msra.mxu0 %v1267
    %1289 = vmatpush.bf16.msra.mxu0 %v1266
    %1290 = vmatmul.bf16.gmra.mxu0 %v1232
    %v1291 = vpop.f32.mrf.mxu0
    %v1292 = vadd.f32 %v1226, %v1291
    %v1293 = vpop.f32.mrf.mxu0
    %v1294 = vadd.f32 %v1226, %v1293
    %1295 = vdwg.mxu0
    %1296 = vst [vmem:[#allocation5] sm:$0xff] %v1292
    %1297 = vst [vmem:[#allocation5 + $0x8] sm:$0xff] %v1294
    %v1298 = vld [vmem:[%s1223] sm:$0x1]
    %v1300 = vperm.slane %v1298, 0
    %v1302 = vadd.f32 %v1198, %v1300
    %v1303 = vadd.f32 %v1200, %v1300
    %v1304 = vmax.f32 %v1302, 0.0
    %v1305 = vmax.f32 %v1303, 0.0
    %1306 = vst [vmem:[#allocation6] sm:$0xff] %v1304
    %1307 = vst [vmem:[#allocation6 + $0x8] sm:$0xf] %v1305
    %s1308 = sld [smem:[#allocation10]]
    %s1309 = sld [smem:[#allocation11]]
    %s1310 = scalar_lea.vmem [#allocation4], %s1308
    %v1311 = vld [vmem:[%s1310] sm:$0x1]
    %v1312 = vld [vmem:[#allocation5] sm:$0x1]
    %v1313 = vadd.f32 %v1311, %v1312
    %v1314 = vmax.f32 %v1313, 0.0
    %s1315 = scalar_lea.vmem [#allocation6], %s1309
    %v1316 = vld [vmem:[%s1315] sm:$0x1]
    %v1317 = vadd.f32 %v1316, %v1314
    %1318 = vst [vmem:[%s1315] sm:$0x1] %v1317
    %s1319 = sld [smem:[#allocation10 + $0x1]]
    %s1320 = sld [smem:[#allocation11 + $0x1]]
    %s1321 = scalar_lea.vmem [#allocation4], %s1319
    %v1322 = vld [vmem:[%s1321] sm:$0x1]
    %v1323 = vld [vmem:[#allocation5 + $0x1] sm:$0x1]
    %v1324 = vadd.f32 %v1322, %v1323
    %v1325 = vmax.f32 %v1324, 0.0
    %s1326 = scalar_lea.vmem [#allocation6], %s1320
    %v1327 = vld [vmem:[%s1326] sm:$0x1]
    %v1328 = vadd.f32 %v1327, %v1325
    %1329 = vst [vmem:[%s1326] sm:$0x1] %v1328
    %s1330 = sld [smem:[#allocation10 + $0x2]]
    %s1331 = sld [smem:[#allocation11 + $0x2]]
    %s1332 = scalar_lea.vmem [#allocation4], %s1330
    %v1333 = vld [vmem:[%s1332] sm:$0x1]
    %v1334 = vld [vmem:[#allocation5 + $0x2] sm:$0x1]
    %v1335 = vadd.f32 %v1333, %v1334
    %v1336 = vmax.f32 %v1335, 0.0
    %s1337 = scalar_lea.vmem [#allocation6], %s1331
    %v1338 = vld [vmem:[%s1337] sm:$0x1]
    %v1339 = vadd.f32 %v1338, %v1336
    %1340 = vst [vmem:[%s1337] sm:$0x1] %v1339
    %s1341 = sld [smem:[#allocation10 + $0x3]]
    %s1342 = sld [smem:[#allocation11 + $0x3]]
    %s1343 = scalar_lea.vmem [#allocation4], %s1341
    %v1344 = vld [vmem:[%s1343] sm:$0x1]
    %v1345 = vld [vmem:[#allocation5 + $0x3] sm:$0x1]
    %v1346 = vadd.f32 %v1344, %v1345
    %v1347 = vmax.f32 %v1346, 0.0
    %s1348 = scalar_lea.vmem [#allocation6], %s1342
    %v1349 = vld [vmem:[%s1348] sm:$0x1]
    %v1350 = vadd.f32 %v1349, %v1347
    %1351 = vst [vmem:[%s1348] sm:$0x1] %v1350
    %s1352 = sld [smem:[#allocation10 + $0x4]]
    %s1353 = sld [smem:[#allocation11 + $0x4]]
    %s1354 = scalar_lea.vmem [#allocation4], %s1352
    %v1355 = vld [vmem:[%s1354] sm:$0x1]
    %v1356 = vld [vmem:[#allocation5 + $0x4] sm:$0x1]
    %v1357 = vadd.f32 %v1355, %v1356
    %v1358 = vmax.f32 %v1357, 0.0
    %s1359 = scalar_lea.vmem [#allocation6], %s1353
    %v1360 = vld [vmem:[%s1359] sm:$0x1]
    %v1361 = vadd.f32 %v1360, %v1358
    %1362 = vst [vmem:[%s1359] sm:$0x1] %v1361
    %s1363 = sld [smem:[#allocation10 + $0x5]]
    %s1364 = sld [smem:[#allocation11 + $0x5]]
    %s1365 = scalar_lea.vmem [#allocation4], %s1363
    %v1366 = vld [vmem:[%s1365] sm:$0x1]
    %v1367 = vld [vmem:[#allocation5 + $0x5] sm:$0x1]
    %v1368 = vadd.f32 %v1366, %v1367
    %v1369 = vmax.f32 %v1368, 0.0
    %s1370 = scalar_lea.vmem [#allocation6], %s1364
    %v1371 = vld [vmem:[%s1370] sm:$0x1]
    %v1372 = vadd.f32 %v1371, %v1369
    %1373 = vst [vmem:[%s1370] sm:$0x1] %v1372
    %s1374 = sld [smem:[#allocation10 + $0x6]]
    %s1375 = sld [smem:[#allocation11 + $0x6]]
    %s1376 = scalar_lea.vmem [#allocation4], %s1374
    %v1377 = vld [vmem:[%s1376] sm:$0x1]
    %v1378 = vld [vmem:[#allocation5 + $0x6] sm:$0x1]
    %v1379 = vadd.f32 %v1377, %v1378
    %v1380 = vmax.f32 %v1379, 0.0
    %s1381 = scalar_lea.vmem [#allocation6], %s1375
    %v1382 = vld [vmem:[%s1381] sm:$0x1]
    %v1383 = vadd.f32 %v1382, %v1380
    %1384 = vst [vmem:[%s1381] sm:$0x1] %v1383
    %s1385 = sld [smem:[#allocation10 + $0x7]]
    %s1386 = sld [smem:[#allocation11 + $0x7]]
    %s1387 = scalar_lea.vmem [#allocation4], %s1385
    %v1388 = vld [vmem:[%s1387] sm:$0x1]
    %v1389 = vld [vmem:[#allocation5 + $0x7] sm:$0x1]
    %v1390 = vadd.f32 %v1388, %v1389
    %v1391 = vmax.f32 %v1390, 0.0
    %s1392 = scalar_lea.vmem [#allocation6], %s1386
    %v1393 = vld [vmem:[%s1392] sm:$0x1]
    %v1394 = vadd.f32 %v1393, %v1391
    %1395 = vst [vmem:[%s1392] sm:$0x1] %v1394
    %s1396 = sld [smem:[#allocation10 + $0x8]]
    %s1397 = sld [smem:[#allocation11 + $0x8]]
    %s1398 = scalar_lea.vmem [#allocation4], %s1396
    %v1399 = vld [vmem:[%s1398] sm:$0x1]
    %v1400 = vld [vmem:[#allocation5 + $0x8] sm:$0x1]
    %v1401 = vadd.f32 %v1399, %v1400
    %v1402 = vmax.f32 %v1401, 0.0
    %s1403 = scalar_lea.vmem [#allocation6], %s1397
    %v1404 = vld [vmem:[%s1403] sm:$0x1]
    %v1405 = vadd.f32 %v1404, %v1402
    %1406 = vst [vmem:[%s1403] sm:$0x1] %v1405
    %s1407 = sld [smem:[#allocation10 + $0x9]]
    %s1408 = sld [smem:[#allocation11 + $0x9]]
    %s1409 = scalar_lea.vmem [#allocation4], %s1407
    %v1410 = vld [vmem:[%s1409] sm:$0x1]
    %v1411 = vld [vmem:[#allocation5 + $0x9] sm:$0x1]
    %v1412 = vadd.f32 %v1410, %v1411
    %v1413 = vmax.f32 %v1412, 0.0
    %s1414 = scalar_lea.vmem [#allocation6], %s1408
    %v1415 = vld [vmem:[%s1414] sm:$0x1]
    %v1416 = vadd.f32 %v1415, %v1413
    %1417 = vst [vmem:[%s1414] sm:$0x1] %v1416
    %s1418 = sld [smem:[#allocation10 + $0xa]]
    %s1419 = sld [smem:[#allocation11 + $0xa]]
    %s1420 = scalar_lea.vmem [#allocation4], %s1418
    %v1421 = vld [vmem:[%s1420] sm:$0x1]
    %v1422 = vld [vmem:[#allocation5 + $0xa] sm:$0x1]
    %v1423 = vadd.f32 %v1421, %v1422
    %v1424 = vmax.f32 %v1423, 0.0
    %s1425 = scalar_lea.vmem [#allocation6], %s1419
    %v1426 = vld [vmem:[%s1425] sm:$0x1]
    %v1427 = vadd.f32 %v1426, %v1424
    %1428 = vst [vmem:[%s1425] sm:$0x1] %v1427
    %s1429 = sld [smem:[#allocation10 + $0xb]]
    %s1430 = sld [smem:[#allocation11 + $0xb]]
    %s1431 = scalar_lea.vmem [#allocation4], %s1429
    %v1432 = vld [vmem:[%s1431] sm:$0x1]
    %v1433 = vld [vmem:[#allocation5 + $0xb] sm:$0x1]
    %v1434 = vadd.f32 %v1432, %v1433
    %v1435 = vmax.f32 %v1434, 0.0
    %s1436 = scalar_lea.vmem [#allocation6], %s1430
    %v1437 = vld [vmem:[%s1436] sm:$0x1]
    %v1438 = vadd.f32 %v1437, %v1435
    %1439 = vst [vmem:[%s1436] sm:$0x1] %v1438
    %s1440 = sld [smem:[#allocation10 + $0xc]]
    %s1441 = sld [smem:[#allocation11 + $0xc]]
    %s1442 = scalar_lea.vmem [#allocation4], %s1440
    %v1443 = vld [vmem:[%s1442] sm:$0x1]
    %v1444 = vld [vmem:[#allocation5 + $0xc] sm:$0x1]
    %v1445 = vadd.f32 %v1443, %v1444
    %v1446 = vmax.f32 %v1445, 0.0
    %s1447 = scalar_lea.vmem [#allocation6], %s1441
    %v1448 = vld [vmem:[%s1447] sm:$0x1]
    %v1449 = vadd.f32 %v1448, %v1446
    %1450 = vst [vmem:[%s1447] sm:$0x1] %v1449
    %s1451 = sld [smem:[#allocation10 + $0xd]]
    %s1452 = sld [smem:[#allocation11 + $0xd]]
    %s1453 = scalar_lea.vmem [#allocation4], %s1451
    %v1454 = vld [vmem:[%s1453] sm:$0x1]
    %v1455 = vld [vmem:[#allocation5 + $0xd] sm:$0x1]
    %v1456 = vadd.f32 %v1454, %v1455
    %v1457 = vmax.f32 %v1456, 0.0
    %s1458 = scalar_lea.vmem [#allocation6], %s1452
    %v1459 = vld [vmem:[%s1458] sm:$0x1]
    %v1460 = vadd.f32 %v1459, %v1457
    %1461 = vst [vmem:[%s1458] sm:$0x1] %v1460
    %s1462 = sld [smem:[#allocation10 + $0xe]]
    %s1463 = sld [smem:[#allocation11 + $0xe]]
    %s1464 = scalar_lea.vmem [#allocation4], %s1462
    %v1465 = vld [vmem:[%s1464] sm:$0x1]
    %v1466 = vld [vmem:[#allocation5 + $0xe] sm:$0x1]
    %v1467 = vadd.f32 %v1465, %v1466
    %v1468 = vmax.f32 %v1467, 0.0
    %s1469 = scalar_lea.vmem [#allocation6], %s1463
    %v1470 = vld [vmem:[%s1469] sm:$0x1]
    %v1471 = vadd.f32 %v1470, %v1468
    %1472 = vst [vmem:[%s1469] sm:$0x1] %v1471
    %s1473 = sld [smem:[#allocation10 + $0xf]]
    %s1474 = sld [smem:[#allocation11 + $0xf]]
    %s1475 = scalar_lea.vmem [#allocation4], %s1473
    %v1476 = vld [vmem:[%s1475] sm:$0x1]
    %v1477 = vld [vmem:[#allocation5 + $0xf] sm:$0x1]
    %v1478 = vadd.f32 %v1476, %v1477
    %v1479 = vmax.f32 %v1478, 0.0
    %s1480 = scalar_lea.vmem [#allocation6], %s1474
    %v1481 = vld [vmem:[%s1480] sm:$0x1]
    %v1482 = vadd.f32 %v1481, %v1479
    %1483 = vst [vmem:[%s1480] sm:$0x1] %v1482
    %v1484 = vld [vmem:[#allocation6] sm:$0xff]
    %v1485 = vld [vmem:[#allocation6 + $0x8] sm:$0xf]
    %s1486 = scalar_lea.vmem %s27, 2
    %v1487 = vld [vmem:[%s1486] sm:$0x1]
    %v1489 = vperm.slane %v1487, 0
    %v1491 = vmul.f32 %v1484, %v1489
    %v1492 = vmul.f32 %v1485, %v1489
    %s1493 = scalar_lea.vmem %s29, 2
    %v1494 = vld [vmem:[%s1493] sm:$0x1]
    %v1496 = vperm.slane %v1494, 0
    %v1498 = vadd.f32 %v1491, %v1496
    %v1499 = vadd.f32 %v1492, %v1496
    %1500 = vst [vmem:[#allocation2] sm:$0xff] %v1498
    %1501 = vst [vmem:[#allocation2 + $0x8] sm:$0xf] %v1499
    %v1502 = vld [vmem:[#allocation3] sm:$0xff]
    %v1503 = vld [vmem:[#allocation3 + $0x8] sm:$0xf]
    %v1504 = vadd.f32 %v1502, %v1498
    %v1505 = vadd.f32 %v1503, %v1499
    %1506 = vst [vmem:[#allocation3] sm:$0xff] %v1504
    %1507 = vst [vmem:[#allocation3 + $0x8] sm:$0xf] %v1505
    %1508 = vst [vmem:[#allocation7] sm:$0x3] 0.0
    %1509 = vst [vmem:[#allocation8] sm:$0x3] -3e+38
    %s1510 = sld [smem:[#allocation12]]
    %v1511 = vld [vmem:[#allocation3] sm:$0x1]
    %s1512 = scalar_lea.vmem [#allocation7], %s1510
    %v1513 = vld [vmem:[%s1512] sm:$0x1]
    %v1514 = vadd.f32 %v1513, %v1511
    %1515 = vst [vmem:[%s1512] sm:$0x1] %v1514
    %s1516 = scalar_lea.vmem [#allocation8], %s1510
    %v1517 = vld [vmem:[%s1516] sm:$0x1]
    %v1518 = vmax.f32 %v1517, %v1511
    %1519 = vst [vmem:[%s1516] sm:$0x1] %v1518
    %s1520 = sld [smem:[#allocation12 + $0x1]]
    %v1521 = vld [vmem:[#allocation3 + $0x1] sm:$0x1]
    %s1522 = scalar_lea.vmem [#allocation7], %s1520
    %v1523 = vld [vmem:[%s1522] sm:$0x1]
    %v1524 = vadd.f32 %v1523, %v1521
    %1525 = vst [vmem:[%s1522] sm:$0x1] %v1524
    %s1526 = scalar_lea.vmem [#allocation8], %s1520
    %v1527 = vld [vmem:[%s1526] sm:$0x1]
    %v1528 = vmax.f32 %v1527, %v1521
    %1529 = vst [vmem:[%s1526] sm:$0x1] %v1528
    %s1530 = sld [smem:[#allocation12 + $0x2]]
    %v1531 = vld [vmem:[#allocation3 + $0x2] sm:$0x1]
    %s1532 = scalar_lea.vmem [#allocation7], %s1530
    %v1533 = vld [vmem:[%s1532] sm:$0x1]
    %v1534 = vadd.f32 %v1533, %v1531
    %1535 = vst [vmem:[%s1532] sm:$0x1] %v1534
    %s1536 = scalar_lea.vmem [#allocation8], %s1530
    %v1537 = vld [vmem:[%s1536] sm:$0x1]
    %v1538 = vmax.f32 %v1537, %v1531
    %1539 = vst [vmem:[%s1536] sm:$0x1] %v1538
    %s1540 = sld [smem:[#allocation12 + $0x3]]
    %v1541 = vld [vmem:[#allocation3 + $0x3] sm:$0x1]
    %s1542 = scalar_lea.vmem [#allocation7], %s1540
    %v1543 = vld [vmem:[%s1542] sm:$0x1]
    %v1544 = vadd.f32 %v1543, %v1541
    %1545 = vst [vmem:[%s1542] sm:$0x1] %v1544
    %s1546 = scalar_lea.vmem [#allocation8], %s1540
    %v1547 = vld [vmem:[%s1546] sm:$0x1]
    %v1548 = vmax.f32 %v1547, %v1541
    %1549 = vst [vmem:[%s1546] sm:$0x1] %v1548
    %s1550 = sld [smem:[#allocation12 + $0x4]]
    %v1551 = vld [vmem:[#allocation3 + $0x4] sm:$0x1]
    %s1552 = scalar_lea.vmem [#allocation7], %s1550
    %v1553 = vld [vmem:[%s1552] sm:$0x1]
    %v1554 = vadd.f32 %v1553, %v1551
    %1555 = vst [vmem:[%s1552] sm:$0x1] %v1554
    %s1556 = scalar_lea.vmem [#allocation8], %s1550
    %v1557 = vld [vmem:[%s1556] sm:$0x1]
    %v1558 = vmax.f32 %v1557, %v1551
    %1559 = vst [vmem:[%s1556] sm:$0x1] %v1558
    %s1560 = sld [smem:[#allocation12 + $0x5]]
    %v1561 = vld [vmem:[#allocation3 + $0x5] sm:$0x1]
    %s1562 = scalar_lea.vmem [#allocation7], %s1560
    %v1563 = vld [vmem:[%s1562] sm:$0x1]
    %v1564 = vadd.f32 %v1563, %v1561
    %1565 = vst [vmem:[%s1562] sm:$0x1] %v1564
    %s1566 = scalar_lea.vmem [#allocation8], %s1560
    %v1567 = vld [vmem:[%s1566] sm:$0x1]
    %v1568 = vmax.f32 %v1567, %v1561
    %1569 = vst [vmem:[%s1566] sm:$0x1] %v1568
    %s1570 = sld [smem:[#allocation12 + $0x6]]
    %v1571 = vld [vmem:[#allocation3 + $0x6] sm:$0x1]
    %s1572 = scalar_lea.vmem [#allocation7], %s1570
    %v1573 = vld [vmem:[%s1572] sm:$0x1]
    %v1574 = vadd.f32 %v1573, %v1571
    %1575 = vst [vmem:[%s1572] sm:$0x1] %v1574
    %s1576 = scalar_lea.vmem [#allocation8], %s1570
    %v1577 = vld [vmem:[%s1576] sm:$0x1]
    %v1578 = vmax.f32 %v1577, %v1571
    %1579 = vst [vmem:[%s1576] sm:$0x1] %v1578
    %s1580 = sld [smem:[#allocation12 + $0x7]]
    %v1581 = vld [vmem:[#allocation3 + $0x7] sm:$0x1]
    %s1582 = scalar_lea.vmem [#allocation7], %s1580
    %v1583 = vld [vmem:[%s1582] sm:$0x1]
    %v1584 = vadd.f32 %v1583, %v1581
    %1585 = vst [vmem:[%s1582] sm:$0x1] %v1584
    %s1586 = scalar_lea.vmem [#allocation8], %s1580
    %v1587 = vld [vmem:[%s1586] sm:$0x1]
    %v1588 = vmax.f32 %v1587, %v1581
    %1589 = vst [vmem:[%s1586] sm:$0x1] %v1588
    %s1590 = sld [smem:[#allocation12 + $0x8]]
    %v1591 = vld [vmem:[#allocation3 + $0x8] sm:$0x1]
    %s1592 = scalar_lea.vmem [#allocation7], %s1590
    %v1593 = vld [vmem:[%s1592] sm:$0x1]
    %v1594 = vadd.f32 %v1593, %v1591
    %1595 = vst [vmem:[%s1592] sm:$0x1] %v1594
    %s1596 = scalar_lea.vmem [#allocation8], %s1590
    %v1597 = vld [vmem:[%s1596] sm:$0x1]
    %v1598 = vmax.f32 %v1597, %v1591
    %1599 = vst [vmem:[%s1596] sm:$0x1] %v1598
    %s1600 = sld [smem:[#allocation12 + $0x9]]
    %v1601 = vld [vmem:[#allocation3 + $0x9] sm:$0x1]
    %s1602 = scalar_lea.vmem [#allocation7], %s1600
    %v1603 = vld [vmem:[%s1602] sm:$0x1]
    %v1604 = vadd.f32 %v1603, %v1601
    %1605 = vst [vmem:[%s1602] sm:$0x1] %v1604
    %s1606 = scalar_lea.vmem [#allocation8], %s1600
    %v1607 = vld [vmem:[%s1606] sm:$0x1]
    %v1608 = vmax.f32 %v1607, %v1601
    %1609 = vst [vmem:[%s1606] sm:$0x1] %v1608
    %s1610 = sld [smem:[#allocation12 + $0xa]]
    %v1611 = vld [vmem:[#allocation3 + $0xa] sm:$0x1]
    %s1612 = scalar_lea.vmem [#allocation7], %s1610
    %v1613 = vld [vmem:[%s1612] sm:$0x1]
    %v1614 = vadd.f32 %v1613, %v1611
    %1615 = vst [vmem:[%s1612] sm:$0x1] %v1614
    %s1616 = scalar_lea.vmem [#allocation8], %s1610
    %v1617 = vld [vmem:[%s1616] sm:$0x1]
    %v1618 = vmax.f32 %v1617, %v1611
    %1619 = vst [vmem:[%s1616] sm:$0x1] %v1618
    %s1620 = sld [smem:[#allocation12 + $0xb]]
    %v1621 = vld [vmem:[#allocation3 + $0xb] sm:$0x1]
    %s1622 = scalar_lea.vmem [#allocation7], %s1620
    %v1623 = vld [vmem:[%s1622] sm:$0x1]
    %v1624 = vadd.f32 %v1623, %v1621
    %1625 = vst [vmem:[%s1622] sm:$0x1] %v1624
    %s1626 = scalar_lea.vmem [#allocation8], %s1620
    %v1627 = vld [vmem:[%s1626] sm:$0x1]
    %v1628 = vmax.f32 %v1627, %v1621
    %1629 = vst [vmem:[%s1626] sm:$0x1] %v1628
    %v1630 = vld [vmem:[#allocation7] sm:$0x3]
    %v1631 = vld [vmem:[%s11] sm:$0x3]
    %v1632 = vmul.f32 %v1630, %v1631
    %v1633 = vld [vmem:[#allocation8] sm:$0x3]
    %vm1634 = vcmp.le.f32.partialorder %v1633, -1.5e+38
    %v1635 = vsel %vm1634, 0.0, %v1633
    %v1636 = vpack.c.bf16 %v1632, %v1632
    %v1637 = vld [vmem:[#allocation19] sm:$0xf]
    %v1638 = vld [vmem:[#allocation19 + $0x4] sm:$0xf]
    %v1639 = vld [vmem:[#allocation19 + $0x8] sm:$0xf]
    %v1640 = vld [vmem:[#allocation19 + $0xc] sm:$0xf]
    %v1641 = vld [vmem:[#allocation19 + $0x10] sm:$0xf]
    %v1642 = vld [vmem:[#allocation19 + $0x14] sm:$0xf]
    %v1643 = vld [vmem:[#allocation19 + $0x18] sm:$0xf]
    %v1644 = vld [vmem:[#allocation19 + $0x1c] sm:$0xf]
    %v1645 = vld [vmem:[#allocation19 + $0x20] sm:$0xf]
    %v1646 = vld [vmem:[#allocation19 + $0x24] sm:$0xf]
    %v1647 = vld [vmem:[#allocation19 + $0x28] sm:$0xf]
    %v1648 = vld [vmem:[#allocation19 + $0x2c] sm:$0xf]
    %v1649 = vld [vmem:[#allocation19 + $0x30] sm:$0xf]
    %v1650 = vld [vmem:[#allocation19 + $0x34] sm:$0xf]
    %v1651 = vld [vmem:[#allocation19 + $0x38] sm:$0xf]
    %v1652 = vld [vmem:[#allocation19 + $0x3c] sm:$0xf]
    %v1653 = vpack.c.bf16 %v1630, %v1630
    %s1654 = scalar_lea.vmem [#allocation19], 64
    %v1655 = vld [vmem:[%s1654] sm:$0xf]
    %v1656 = vld [vmem:[%s1654 + $0x4] sm:$0xf]
    %v1657 = vld [vmem:[%s1654 + $0x8] sm:$0xf]
    %v1658 = vld [vmem:[%s1654 + $0xc] sm:$0xf]
    %v1659 = vld [vmem:[%s1654 + $0x10] sm:$0xf]
    %v1660 = vld [vmem:[%s1654 + $0x14] sm:$0xf]
    %v1661 = vld [vmem:[%s1654 + $0x18] sm:$0xf]
    %v1662 = vld [vmem:[%s1654 + $0x1c] sm:$0xf]
    %v1663 = vld [vmem:[%s1654 + $0x20] sm:$0xf]
    %v1664 = vld [vmem:[%s1654 + $0x24] sm:$0xf]
    %v1665 = vld [vmem:[%s1654 + $0x28] sm:$0xf]
    %v1666 = vld [vmem:[%s1654 + $0x2c] sm:$0xf]
    %v1667 = vld [vmem:[%s1654 + $0x30] sm:$0xf]
    %v1668 = vld [vmem:[%s1654 + $0x34] sm:$0xf]
    %v1669 = vld [vmem:[%s1654 + $0x38] sm:$0xf]
    %v1670 = vld [vmem:[%s1654 + $0x3c] sm:$0xf]
    %v1687 = vunpack.c.l.b16 %v1655
    %v1688 = vunpack.c.l.b16 %v1656
    %v1689 = vunpack.c.l.b16 %v1657
    %v1690 = vunpack.c.l.b16 %v1658
    %v1691 = vunpack.c.l.b16 %v1659
    %v1692 = vunpack.c.l.b16 %v1660
    %v1693 = vunpack.c.l.b16 %v1661
    %v1694 = vunpack.c.l.b16 %v1662
    %v1695 = vunpack.c.l.b16 %v1663
    %v1696 = vunpack.c.l.b16 %v1664
    %v1697 = vunpack.c.l.b16 %v1665
    %v1698 = vunpack.c.l.b16 %v1666
    %v1699 = vunpack.c.l.b16 %v1667
    %v1700 = vunpack.c.l.b16 %v1668
    %v1701 = vunpack.c.l.b16 %v1669
    %v1702 = vunpack.c.l.b16 %v1670
    %v1703 = vpack.c.b16 %v1688, %v1687
    %v1704 = vpack.c.b16 %v1690, %v1689
    %v1705 = vpack.c.b16 %v1692, %v1691
    %v1706 = vpack.c.b16 %v1694, %v1693
    %v1707 = vpack.c.b16 %v1696, %v1695
    %v1708 = vpack.c.b16 %v1698, %v1697
    %v1709 = vpack.c.b16 %v1700, %v1699
    %v1710 = vpack.c.b16 %v1702, %v1701
    %1719 = vmatpush.bf16.msra.mxu0 %v1710
    %1720 = vmatpush.bf16.msra.mxu0 %v1709
    %1721 = vmatpush.bf16.msra.mxu0 %v1708
    %1722 = vmatpush.bf16.msra.mxu0 %v1707
    %1723 = vmatpush.bf16.msra.mxu0 %v1706
    %1724 = vmatpush.bf16.msra.mxu0 %v1705
    %1725 = vmatpush.bf16.msra.mxu0 %v1704
    %1726 = vmatpush.bf16.msra.mxu0 %v1703
    %1727 = vmatmul.bf16.gmra.mxu0 %v1653
    %v1728 = vpop.f32.mrf.mxu0
    %v1729 = vadd.f32 0.0, %v1728
    %v1730 = vpop.f32.mrf.mxu0
    %1731 = vdwg.mxu0
    %v1748 = vunpack.c.l.b16 %v1637
    %v1749 = vunpack.c.l.b16 %v1638
    %v1750 = vunpack.c.l.b16 %v1639
    %v1751 = vunpack.c.l.b16 %v1640
    %v1752 = vunpack.c.l.b16 %v1641
    %v1753 = vunpack.c.l.b16 %v1642
    %v1754 = vunpack.c.l.b16 %v1643
    %v1755 = vunpack.c.l.b16 %v1644
    %v1756 = vunpack.c.l.b16 %v1645
    %v1757 = vunpack.c.l.b16 %v1646
    %v1758 = vunpack.c.l.b16 %v1647
    %v1759 = vunpack.c.l.b16 %v1648
    %v1760 = vunpack.c.l.b16 %v1649
    %v1761 = vunpack.c.l.b16 %v1650
    %v1762 = vunpack.c.l.b16 %v1651
    %v1763 = vunpack.c.l.b16 %v1652
    %v1764 = vpack.c.b16 %v1749, %v1748
    %v1765 = vpack.c.b16 %v1751, %v1750
    %v1766 = vpack.c.b16 %v1753, %v1752
    %v1767 = vpack.c.b16 %v1755, %v1754
    %v1768 = vpack.c.b16 %v1757, %v1756
    %v1769 = vpack.c.b16 %v1759, %v1758
    %v1770 = vpack.c.b16 %v1761, %v1760
    %v1771 = vpack.c.b16 %v1763, %v1762
    %1780 = vmatpush.bf16.msra.mxu0 %v1771
    %1781 = vmatpush.bf16.msra.mxu0 %v1770
    %1782 = vmatpush.bf16.msra.mxu0 %v1769
    %1783 = vmatpush.bf16.msra.mxu0 %v1768
    %1784 = vmatpush.bf16.msra.mxu0 %v1767
    %1785 = vmatpush.bf16.msra.mxu0 %v1766
    %1786 = vmatpush.bf16.msra.mxu0 %v1765
    %1787 = vmatpush.bf16.msra.mxu0 %v1764
    %1788 = vmatmul.bf16.gmra.mxu0 %v1636
    %v1789 = vpop.f32.mrf.mxu0
    %v1790 = vadd.f32 %v1729, %v1789
    %v1791 = vpop.f32.mrf.mxu0
    %1792 = vdwg.mxu0
    %v1793 = vpack.c.bf16 %v1635, %v1635
    %s1794 = scalar_lea.vmem [#allocation19], 128
    %v1795 = vld [vmem:[%s1794] sm:$0xf]
    %v1796 = vld [vmem:[%s1794 + $0x4] sm:$0xf]
    %v1797 = vld [vmem:[%s1794 + $0x8] sm:$0xf]
    %v1798 = vld [vmem:[%s1794 + $0xc] sm:$0xf]
    %v1799 = vld [vmem:[%s1794 + $0x10] sm:$0xf]
    %v1800 = vld [vmem:[%s1794 + $0x14] sm:$0xf]
    %v1801 = vld [vmem:[%s1794 + $0x18] sm:$0xf]
    %v1802 = vld [vmem:[%s1794 + $0x1c] sm:$0xf]
    %v1803 = vld [vmem:[%s1794 + $0x20] sm:$0xf]
    %v1804 = vld [vmem:[%s1794 + $0x24] sm:$0xf]
    %v1805 = vld [vmem:[%s1794 + $0x28] sm:$0xf]
    %v1806 = vld [vmem:[%s1794 + $0x2c] sm:$0xf]
    %v1807 = vld [vmem:[%s1794 + $0x30] sm:$0xf]
    %v1808 = vld [vmem:[%s1794 + $0x34] sm:$0xf]
    %v1809 = vld [vmem:[%s1794 + $0x38] sm:$0xf]
    %v1810 = vld [vmem:[%s1794 + $0x3c] sm:$0xf]
    %v1827 = vunpack.c.l.b16 %v1795
    %v1828 = vunpack.c.l.b16 %v1796
    %v1829 = vunpack.c.l.b16 %v1797
    %v1830 = vunpack.c.l.b16 %v1798
    %v1831 = vunpack.c.l.b16 %v1799
    %v1832 = vunpack.c.l.b16 %v1800
    %v1833 = vunpack.c.l.b16 %v1801
    %v1834 = vunpack.c.l.b16 %v1802
    %v1835 = vunpack.c.l.b16 %v1803
    %v1836 = vunpack.c.l.b16 %v1804
    %v1837 = vunpack.c.l.b16 %v1805
    %v1838 = vunpack.c.l.b16 %v1806
    %v1839 = vunpack.c.l.b16 %v1807
    %v1840 = vunpack.c.l.b16 %v1808
    %v1841 = vunpack.c.l.b16 %v1809
    %v1842 = vunpack.c.l.b16 %v1810
    %v1843 = vpack.c.b16 %v1828, %v1827
    %v1844 = vpack.c.b16 %v1830, %v1829
    %v1845 = vpack.c.b16 %v1832, %v1831
    %v1846 = vpack.c.b16 %v1834, %v1833
    %v1847 = vpack.c.b16 %v1836, %v1835
    %v1848 = vpack.c.b16 %v1838, %v1837
    %v1849 = vpack.c.b16 %v1840, %v1839
    %v1850 = vpack.c.b16 %v1842, %v1841
    %1859 = vmatpush.bf16.msra.mxu0 %v1850
    %1860 = vmatpush.bf16.msra.mxu0 %v1849
    %1861 = vmatpush.bf16.msra.mxu0 %v1848
    %1862 = vmatpush.bf16.msra.mxu0 %v1847
    %1863 = vmatpush.bf16.msra.mxu0 %v1846
    %1864 = vmatpush.bf16.msra.mxu0 %v1845
    %1865 = vmatpush.bf16.msra.mxu0 %v1844
    %1866 = vmatpush.bf16.msra.mxu0 %v1843
    %1867 = vmatmul.bf16.gmra.mxu0 %v1793
    %v1868 = vpop.f32.mrf.mxu0
    %v1869 = vadd.f32 0.0, %v1868
    %v1870 = vpop.f32.mrf.mxu0
    %1871 = vdwg.mxu0
    %v1872 = vadd.f32 %v1790, %v1869
    %v1873 = vld [vmem:[%s33] sm:$0x1]
    %v1875 = vperm.slane %v1873, 0
    %v1877 = vadd.f32 %v1872, %v1875
    %v1878 = vmax.f32 %v1877, 0.0
    %v1879 = vld [vmem:[%s35] sm:$0x1]
    %v1881 = vperm.slane %v1879, 0
    %v1883 = vmul.f32 %v1878, %v1881
    %v1884 = vld [vmem:[%s37] sm:$0x1]
    %v1886 = vperm.slane %v1884, 0
    %v1888 = vadd.f32 %v1883, %v1886
    %1889 = vst [vmem:[%s55] sm:$0x3] %v1888
    %v1890 = vpack.c.bf16 %v1888, %v1888
    %v1891 = vld [vmem:[#allocation21] sm:$0xf]
    %v1892 = vld [vmem:[#allocation21 + $0x4] sm:$0xf]
    %v1893 = vld [vmem:[#allocation21 + $0x8] sm:$0xf]
    %v1894 = vld [vmem:[#allocation21 + $0xc] sm:$0xf]
    %v1895 = vld [vmem:[#allocation21 + $0x10] sm:$0xf]
    %v1896 = vld [vmem:[#allocation21 + $0x14] sm:$0xf]
    %v1897 = vld [vmem:[#allocation21 + $0x18] sm:$0xf]
    %v1898 = vld [vmem:[#allocation21 + $0x1c] sm:$0xf]
    %v1899 = vld [vmem:[#allocation21 + $0x20] sm:$0xf]
    %v1900 = vld [vmem:[#allocation21 + $0x24] sm:$0xf]
    %v1901 = vld [vmem:[#allocation21 + $0x28] sm:$0xf]
    %v1902 = vld [vmem:[#allocation21 + $0x2c] sm:$0xf]
    %v1903 = vld [vmem:[#allocation21 + $0x30] sm:$0xf]
    %v1904 = vld [vmem:[#allocation21 + $0x34] sm:$0xf]
    %v1905 = vld [vmem:[#allocation21 + $0x38] sm:$0xf]
    %v1906 = vld [vmem:[#allocation21 + $0x3c] sm:$0xf]
    %v1907 = vld [vmem:[%s41] sm:$0x1]
    %v1909 = vperm.slane %v1907, 0
    %v1927 = vunpack.c.l.b16 %v1891
    %v1928 = vunpack.c.l.b16 %v1892
    %v1929 = vunpack.c.l.b16 %v1893
    %v1930 = vunpack.c.l.b16 %v1894
    %v1931 = vunpack.c.l.b16 %v1895
    %v1932 = vunpack.c.l.b16 %v1896
    %v1933 = vunpack.c.l.b16 %v1897
    %v1934 = vunpack.c.l.b16 %v1898
    %v1935 = vunpack.c.l.b16 %v1899
    %v1936 = vunpack.c.l.b16 %v1900
    %v1937 = vunpack.c.l.b16 %v1901
    %v1938 = vunpack.c.l.b16 %v1902
    %v1939 = vunpack.c.l.b16 %v1903
    %v1940 = vunpack.c.l.b16 %v1904
    %v1941 = vunpack.c.l.b16 %v1905
    %v1942 = vunpack.c.l.b16 %v1906
    %v1943 = vpack.c.b16 %v1928, %v1927
    %v1944 = vpack.c.b16 %v1930, %v1929
    %v1945 = vpack.c.b16 %v1932, %v1931
    %v1946 = vpack.c.b16 %v1934, %v1933
    %v1947 = vpack.c.b16 %v1936, %v1935
    %v1948 = vpack.c.b16 %v1938, %v1937
    %v1949 = vpack.c.b16 %v1940, %v1939
    %v1950 = vpack.c.b16 %v1942, %v1941
    %1959 = vmatpush.bf16.msra.mxu0 %v1950
    %1960 = vmatpush.bf16.msra.mxu0 %v1949
    %1961 = vmatpush.bf16.msra.mxu0 %v1948
    %1962 = vmatpush.bf16.msra.mxu0 %v1947
    %1963 = vmatpush.bf16.msra.mxu0 %v1946
    %1964 = vmatpush.bf16.msra.mxu0 %v1945
    %1965 = vmatpush.bf16.msra.mxu0 %v1944
    %1966 = vmatpush.bf16.msra.mxu0 %v1943
    %1967 = vmatmul.bf16.gmra.mxu0 %v1890
    %v1968 = vpop.f32.mrf.mxu0
    %v1969 = vadd.f32 %v1909, %v1968
    %v1970 = vpop.f32.mrf.mxu0
    %1971 = vdwg.mxu0
    %v1972 = vtanh.pop %v1969
    %1973 = vst [vmem:[#allocation25] sm:$0x3] %v1972
    %1974 = vst [vmem:[#allocation8] sm:$0x3] %v1972
    %s1975 = sld [smem:[#allocation12]]
    %s1976 = scalar_lea.vmem [#allocation8], %s1975
    %v1977 = vld [vmem:[%s1976] sm:$0x1]
    %1978 = vst [vmem:[#allocation6] sm:$0x1] %v1977
    %s1979 = sld [smem:[#allocation12 + $0x1]]
    %s1980 = scalar_lea.vmem [#allocation8], %s1979
    %v1981 = vld [vmem:[%s1980] sm:$0x1]
    %1982 = vst [vmem:[#allocation6 + $0x1] sm:$0x1] %v1981
    %s1983 = sld [smem:[#allocation12 + $0x2]]
    %s1984 = scalar_lea.vmem [#allocation8], %s1983
    %v1985 = vld [vmem:[%s1984] sm:$0x1]
    %1986 = vst [vmem:[#allocation6 + $0x2] sm:$0x1] %v1985
    %s1987 = sld [smem:[#allocation12 + $0x3]]
    %s1988 = scalar_lea.vmem [#allocation8], %s1987
    %v1989 = vld [vmem:[%s1988] sm:$0x1]
    %1990 = vst [vmem:[#allocation6 + $0x3] sm:$0x1] %v1989
    %s1991 = sld [smem:[#allocation12 + $0x4]]
    %s1992 = scalar_lea.vmem [#allocation8], %s1991
    %v1993 = vld [vmem:[%s1992] sm:$0x1]
    %1994 = vst [vmem:[#allocation6 + $0x4] sm:$0x1] %v1993
    %s1995 = sld [smem:[#allocation12 + $0x5]]
    %s1996 = scalar_lea.vmem [#allocation8], %s1995
    %v1997 = vld [vmem:[%s1996] sm:$0x1]
    %1998 = vst [vmem:[#allocation6 + $0x5] sm:$0x1] %v1997
    %s1999 = sld [smem:[#allocation12 + $0x6]]
    %s2000 = scalar_lea.vmem [#allocation8], %s1999
    %v2001 = vld [vmem:[%s2000] sm:$0x1]
    %2002 = vst [vmem:[#allocation6 + $0x6] sm:$0x1] %v2001
    %s2003 = sld [smem:[#allocation12 + $0x7]]
    %s2004 = scalar_lea.vmem [#allocation8], %s2003
    %v2005 = vld [vmem:[%s2004] sm:$0x1]
    %2006 = vst [vmem:[#allocation6 + $0x7] sm:$0x1] %v2005
    %s2007 = sld [smem:[#allocation12 + $0x8]]
    %s2008 = scalar_lea.vmem [#allocation8], %s2007
    %v2009 = vld [vmem:[%s2008] sm:$0x1]
    %2010 = vst [vmem:[#allocation6 + $0x8] sm:$0x1] %v2009
    %s2011 = sld [smem:[#allocation12 + $0x9]]
    %s2012 = scalar_lea.vmem [#allocation8], %s2011
    %v2013 = vld [vmem:[%s2012] sm:$0x1]
    %2014 = vst [vmem:[#allocation6 + $0x9] sm:$0x1] %v2013
    %s2015 = sld [smem:[#allocation12 + $0xa]]
    %s2016 = scalar_lea.vmem [#allocation8], %s2015
    %v2017 = vld [vmem:[%s2016] sm:$0x1]
    %2018 = vst [vmem:[#allocation6 + $0xa] sm:$0x1] %v2017
    %s2019 = sld [smem:[#allocation12 + $0xb]]
    %s2020 = scalar_lea.vmem [#allocation8], %s2019
    %v2021 = vld [vmem:[%s2020] sm:$0x1]
    %2022 = vst [vmem:[#allocation6 + $0xb] sm:$0x1] %v2021
    %v2023 = vld [vmem:[#allocation6] sm:$0xff]
    %v2024 = vld [vmem:[#allocation6 + $0x8] sm:$0xf]
    %v2025 = vpack.c.bf16 %v2024, %v2023
    %v2026 = vld [vmem:[#allocation22] sm:$0xf]
    %v2027 = vld [vmem:[#allocation22 + $0x4] sm:$0xf]
    %v2028 = vld [vmem:[#allocation22 + $0x8] sm:$0xf]
    %v2029 = vld [vmem:[#allocation22 + $0xc] sm:$0xf]
    %v2030 = vld [vmem:[#allocation22 + $0x10] sm:$0xf]
    %v2031 = vld [vmem:[#allocation22 + $0x14] sm:$0xf]
    %v2032 = vld [vmem:[#allocation22 + $0x18] sm:$0xf]
    %v2033 = vld [vmem:[#allocation22 + $0x1c] sm:$0xf]
    %v2034 = vld [vmem:[#allocation22 + $0x20] sm:$0xf]
    %v2035 = vld [vmem:[#allocation22 + $0x24] sm:$0xf]
    %v2036 = vld [vmem:[#allocation22 + $0x28] sm:$0xf]
    %v2037 = vld [vmem:[#allocation22 + $0x2c] sm:$0xf]
    %v2038 = vld [vmem:[#allocation22 + $0x30] sm:$0xf]
    %v2039 = vld [vmem:[#allocation22 + $0x34] sm:$0xf]
    %v2040 = vld [vmem:[#allocation22 + $0x38] sm:$0xf]
    %v2041 = vld [vmem:[#allocation22 + $0x3c] sm:$0xf]
    %v2042 = vld [vmem:[%s45] sm:$0x1]
    %v2044 = vperm.slane %v2042, 0
    %v2062 = vunpack.c.l.b16 %v2026
    %v2063 = vunpack.c.l.b16 %v2027
    %v2064 = vunpack.c.l.b16 %v2028
    %v2065 = vunpack.c.l.b16 %v2029
    %v2066 = vunpack.c.l.b16 %v2030
    %v2067 = vunpack.c.l.b16 %v2031
    %v2068 = vunpack.c.l.b16 %v2032
    %v2069 = vunpack.c.l.b16 %v2033
    %v2070 = vunpack.c.l.b16 %v2034
    %v2071 = vunpack.c.l.b16 %v2035
    %v2072 = vunpack.c.l.b16 %v2036
    %v2073 = vunpack.c.l.b16 %v2037
    %v2074 = vunpack.c.l.b16 %v2038
    %v2075 = vunpack.c.l.b16 %v2039
    %v2076 = vunpack.c.l.b16 %v2040
    %v2077 = vunpack.c.l.b16 %v2041
    %v2078 = vpack.c.b16 %v2063, %v2062
    %v2079 = vpack.c.b16 %v2065, %v2064
    %v2080 = vpack.c.b16 %v2067, %v2066
    %v2081 = vpack.c.b16 %v2069, %v2068
    %v2082 = vpack.c.b16 %v2071, %v2070
    %v2083 = vpack.c.b16 %v2073, %v2072
    %v2084 = vpack.c.b16 %v2075, %v2074
    %v2085 = vpack.c.b16 %v2077, %v2076
    %2094 = vmatpush.bf16.msra.mxu0 %v2085
    %2095 = vmatpush.bf16.msra.mxu0 %v2084
    %2096 = vmatpush.bf16.msra.mxu0 %v2083
    %2097 = vmatpush.bf16.msra.mxu0 %v2082
    %2098 = vmatpush.bf16.msra.mxu0 %v2081
    %2099 = vmatpush.bf16.msra.mxu0 %v2080
    %2100 = vmatpush.bf16.msra.mxu0 %v2079
    %2101 = vmatpush.bf16.msra.mxu0 %v2078
    %2102 = vmatmul.bf16.gmra.mxu0 %v2025
    %v2103 = vpop.f32.mrf.mxu0
    %v2104 = vadd.f32 %v2044, %v2103
    %v2105 = vpop.f32.mrf.mxu0
    %v2106 = vadd.f32 %v2044, %v2105
    %2107 = vdwg.mxu0
    %v2108 = vmax.f32 %v2104, 0.0
    %v2109 = vmax.f32 %v2106, 0.0
    %v2110 = vld [vmem:[%s47] sm:$0x1]
    %v2112 = vperm.slane %v2110, 0
    %v2114 = vmul.f32 %v2108, %v2112
    %v2115 = vmul.f32 %v2109, %v2112
    %v2116 = vld [vmem:[%s49] sm:$0x1]
    %v2118 = vperm.slane %v2116, 0
    %v2120 = vadd.f32 %v2114, %v2118
    %v2121 = vadd.f32 %v2115, %v2118
    %v2122 = vpack.c.bf16 %v2121, %v2120
    %v2123 = vld [vmem:[#allocation24] sm:$0xf]
    %v2124 = vld [vmem:[#allocation24 + $0x4] sm:$0xf]
    %v2125 = vld [vmem:[#allocation24 + $0x8] sm:$0xf]
    %v2126 = vld [vmem:[#allocation24 + $0xc] sm:$0xf]
    %v2127 = vld [vmem:[#allocation24 + $0x10] sm:$0xf]
    %v2128 = vld [vmem:[#allocation24 + $0x14] sm:$0xf]
    %v2129 = vld [vmem:[#allocation24 + $0x18] sm:$0xf]
    %v2130 = vld [vmem:[#allocation24 + $0x1c] sm:$0xf]
    %v2131 = vld [vmem:[#allocation24 + $0x20] sm:$0xf]
    %v2132 = vld [vmem:[#allocation24 + $0x24] sm:$0xf]
    %v2133 = vld [vmem:[#allocation24 + $0x28] sm:$0xf]
    %v2134 = vld [vmem:[#allocation24 + $0x2c] sm:$0xf]
    %v2135 = vld [vmem:[#allocation24 + $0x30] sm:$0xf]
    %v2136 = vld [vmem:[#allocation24 + $0x34] sm:$0xf]
    %v2137 = vld [vmem:[#allocation24 + $0x38] sm:$0xf]
    %v2138 = vld [vmem:[#allocation24 + $0x3c] sm:$0xf]
    %v2139 = vld [vmem:[%s53] sm:$0x1]
    %v2141 = vperm.slane %v2139, 0
    %v2159 = vunpack.c.l.b16 %v2123
    %v2160 = vunpack.c.l.b16 %v2124
    %v2161 = vunpack.c.l.b16 %v2125
    %v2162 = vunpack.c.l.b16 %v2126
    %v2163 = vunpack.c.l.b16 %v2127
    %v2164 = vunpack.c.l.b16 %v2128
    %v2165 = vunpack.c.l.b16 %v2129
    %v2166 = vunpack.c.l.b16 %v2130
    %v2167 = vunpack.c.l.b16 %v2131
    %v2168 = vunpack.c.l.b16 %v2132
    %v2169 = vunpack.c.l.b16 %v2133
    %v2170 = vunpack.c.l.b16 %v2134
    %v2171 = vunpack.c.l.b16 %v2135
    %v2172 = vunpack.c.l.b16 %v2136
    %v2173 = vunpack.c.l.b16 %v2137
    %v2174 = vunpack.c.l.b16 %v2138
    %v2175 = vpack.c.b16 %v2160, %v2159
    %v2176 = vpack.c.b16 %v2162, %v2161
    %v2177 = vpack.c.b16 %v2164, %v2163
    %v2178 = vpack.c.b16 %v2166, %v2165
    %v2179 = vpack.c.b16 %v2168, %v2167
    %v2180 = vpack.c.b16 %v2170, %v2169
    %v2181 = vpack.c.b16 %v2172, %v2171
    %v2182 = vpack.c.b16 %v2174, %v2173
    %2191 = vmatpush.bf16.msra.mxu0 %v2182
    %2192 = vmatpush.bf16.msra.mxu0 %v2181
    %2193 = vmatpush.bf16.msra.mxu0 %v2180
    %2194 = vmatpush.bf16.msra.mxu0 %v2179
    %2195 = vmatpush.bf16.msra.mxu0 %v2178
    %2196 = vmatpush.bf16.msra.mxu0 %v2177
    %2197 = vmatpush.bf16.msra.mxu0 %v2176
    %2198 = vmatpush.bf16.msra.mxu0 %v2175
    %2199 = vmatmul.bf16.gmra.mxu0 %v2122
    %v2200 = vpop.f32.mrf.mxu0
    %v2201 = vadd.f32 %v2141, %v2200
    %v2202 = vpop.f32.mrf.mxu0
    %v2203 = vadd.f32 %v2141, %v2202
    %2204 = vdwg.mxu0
    %2205 = vst [vmem:[%s59] sm:$0xff] %v2201
    %2206 = vst [vmem:[%s59 + $0x8] sm:$0xf] %v2203
    // Predicated region
    $region126: #{wln_forward.1} parent=1 // pred_check
      _
    $region127: #{wln_forward.1} parent=1 // pred_check_branch
      %2208 = sbr.rel (0) target = $region129
    $region128: #{wln_forward.1} parent=1 // pred_region
      _
    $region129: #{wln_forward.1} parent=1 // pred_fallthru
      _
    // Predicated region
    $region130: #{wln_forward.1} parent=1 // pred_check
      _
    $region131: #{wln_forward.1} parent=1 // pred_check_branch
      %2210 = sbr.rel (0) target = $region133
    $region132: #{wln_forward.1} parent=1 // pred_region
      %2212 = vsyncadd [#allocation15], 0
      %s2214 = sshll.u32 [#allocation25], 4
      %s2215 = int_to_ptr.vmem [resolvable:$true] %s2214
      %s2216 = sshll.u32 %s57, 4
      %s2217 = int_to_ptr.hbm [resolvable:$true] %s2216
      %2219 = dma.vmem_to_hbm [thread:$0]  %s2215, 32, %s2217, [#allocation15]
    $region133: #{wln_forward.1} parent=1 // pred_fallthru
      _
    // Predicated region
    $region134: #{wln_forward.1} parent=1 // pred_check
      _
    $region135: #{wln_forward.1} parent=1 // pred_check_branch
      %2221 = sbr.rel (0) target = $region137
    $region136: #{wln_forward.1} parent=1 // pred_region
      _
    $region137: #{wln_forward.1} parent=1 // pred_fallthru
      _
    // Predicated region
    $region138: #{wln_forward.1} parent=1 // pred_check
      _
    $region139: #{wln_forward.1} parent=1 // pred_check_branch
      %2223 = sbr.rel (0) target = $region141
    $region140: #{wln_forward.1} parent=1 // pred_region
      _
    $region141: #{wln_forward.1} parent=1 // pred_fallthru
      _
    // Predicated region
    $region142: #{wln_forward.1} parent=1 // pred_check
      _
    $region143: #{wln_forward.1} parent=1 // pred_check_branch
      %2225 = sbr.rel (0) target = $region145
    $region144: #{wln_forward.1} parent=1 // pred_region
      %2227 = dma.done [#allocation15], 32
    $region145: #{wln_forward.1} parent=1 // pred_fallthru
      _
    // Predicated region
    $region146: #{wln_forward.1} parent=1 // pred_check
      _
    $region147: #{wln_forward.1} parent=1 // pred_check_branch
      %2229 = sbr.rel (0) target = $region149
    $region148: #{wln_forward.1} parent=1 // pred_region
      _
    $region149: #{wln_forward.1} parent=1 // pred_fallthru
      _
    %2230 = vsyncpa [#allocation14], 1
    %2231 = vsyncpa [#allocation17], 1
    %2232 = vsyncpa [#allocation20], 1
    %2233 = vsyncpa [#allocation23], 1
    %2234 = vsyncpa [#allocation15], 1

</llo_original>
